<compile_context>
chip_gen: v7x
topology: tpu7x:2x2x1
jax: 0.10.0
libtpu: 0.0.40
codegen_flags: <defaults>
</compile_context>

<pallas_src>
import jax
import jax.numpy as jnp
from jax.experimental import pallas as pl
from jax.experimental.pallas import tpu as pltpu

B, H, W = 2, 16, 16          # small synthetic shapes
C_IN = 3                     # RGB
BIAS_CH = C_IN               # padded channel that carries the folded projection bias
C_PAD = 128                  # zero-padded contraction dim for the 1x1 projection
HW = H * W
BHW = B * HW                 # 512 rows into the projection matmul
FEATURES = 1408              # efficientnet_b2 classifier[-1].in_features
F_PAD = 1536                 # FEATURES padded to a multiple of the chunk width
FC = 512                     # feature-chunk width (grid axis)
N_CHUNKS = F_PAD // FC       # 3
HIDDEN = 512
NUM_CLASSES = 4
NC_PAD = 128                 # lane-dense padded class dimension (sliced to 4 outside)


def knot_classifier_kernel(x_ref, wp_ref, pool_ref, w1_ref, b1_ref, w2_ref, b2_ref,
                           out_ref, h_acc):
    k = pl.program_id(0)

    @pl.when(k == 0)
    def _():
        h_acc[...] = jnp.zeros_like(h_acc)

    # ---- backbone final-stage stand-in, one FEATURES chunk per grid step ----
    # 1x1 projection; b_proj is folded into the BIAS_CH row of wp (x[:, BIAS_CH] == 1).
    feat = jnp.dot(x_ref[...], wp_ref[...],
                   preferred_element_type=jnp.float32)          # [BHW, FC] f32
    # SiLU in bf16 (packed vregs / bf16 EUP on v6e+, half the VMEM intermediate traffic).
    feat_bf = feat.astype(jnp.bfloat16)
    act = feat_bf * jax.nn.sigmoid(feat_bf)                     # [BHW, FC] bf16
    # Global average pool: bf16 MXU dot with 1/HW folded into pool; f32 accumulation.
    pooled = jnp.dot(pool_ref[...], act,
                     preferred_element_type=jnp.float32)        # [B, FC] f32

    # ---- classifier Linear(1408, 512), contraction chunked over features ----
    h_acc[...] += jnp.dot(pooled.astype(jnp.bfloat16), w1_ref[...],
                          preferred_element_type=jnp.float32)   # [B, HIDDEN] f32

    # ---- finalize on the last feature chunk: bias + ReLU + Linear(512, 4) ----
    @pl.when(k == pl.num_programs(0) - 1)
    def _():
        h = jnp.maximum(h_acc[...] + b1_ref[...], 0.0)          # ReLU
        # Dropout(p=0.3) is identity at inference time.
        logits = jnp.dot(h.astype(jnp.bfloat16), w2_ref[...],
                         preferred_element_type=jnp.float32) + b2_ref[...]
        out_ref[...] = logits.astype(out_ref.dtype)             # [B, NC_PAD]


def init_params(key):
    k0, k1, k2, k3, k4 = jax.random.split(key, 5)
    # 1x1 projection weights + bias (bias folded into padded channel BIAS_CH).
    w_proj = 0.05 * jax.random.normal(k0, (C_IN, FEATURES), jnp.float32)
    b_proj = 0.01 * jax.random.normal(k4, (FEATURES,), jnp.float32)
    wp = jnp.zeros((C_PAD, F_PAD), jnp.float32)
    wp = wp.at[:C_IN, :FEATURES].set(w_proj)
    wp = wp.at[BIAS_CH, :FEATURES].set(b_proj)          # folded bias row
    # Classifier head.
    w1 = 0.02 * jax.random.normal(k1, (FEATURES, HIDDEN), jnp.float32)
    w1_pad = jnp.zeros((F_PAD, HIDDEN), jnp.float32).at[:FEATURES].set(w1)
    b1 = 0.01 * jnp.ones((1, HIDDEN), jnp.float32)
    w2_small = 0.02 * jax.random.normal(k2, (HIDDEN, NUM_CLASSES), jnp.float32)
    b2_small = 0.01 * jax.random.normal(k3, (1, NUM_CLASSES), jnp.float32)
    w2 = jnp.zeros((HIDDEN, NC_PAD), jnp.float32).at[:, :NUM_CLASSES].set(w2_small)
    b2 = jnp.zeros((1, NC_PAD), jnp.float32).at[:, :NUM_CLASSES].set(b2_small)
    # Pooling matrix: pool[b, b*HW + s] = 1/HW  (1/256 is exact in bf16).
    row = jax.lax.broadcasted_iota(jnp.int32, (B, BHW), 0)
    col = jax.lax.broadcasted_iota(jnp.int32, (B, BHW), 1) // HW
    pool = jnp.where(row == col, 1.0 / HW, 0.0).astype(jnp.float32)
    # Weights in bf16 (halves HBM traffic); all matmuls accumulate in f32.
    return dict(w_proj=wp.astype(jnp.bfloat16), pool=pool.astype(jnp.bfloat16),
                w1=w1_pad.astype(jnp.bfloat16), b1=b1,
                w2=w2.astype(jnp.bfloat16), b2=b2)


@jax.jit
def knot_classifier_forward(rgb_nchw, params):
    # NCHW -> NHWC -> [B*H*W, C]; channel BIAS_CH carries a constant 1.0 so the
    # projection bias rides along a dead padded-K slot; remaining channels are 0.
    x = jnp.transpose(rgb_nchw, (0, 2, 3, 1)).reshape(BHW, C_IN)
    bias_col = jnp.ones((BHW, 1), x.dtype)
    zero_pad = jnp.zeros((BHW, C_PAD - C_IN - 1), x.dtype)
    x = jnp.concatenate([x, bias_col, zero_pad], axis=1).astype(jnp.bfloat16)

    logits_pad = pl.pallas_call(
        knot_classifier_kernel,
        out_shape=jax.ShapeDtypeStruct((B, NC_PAD), jnp.float32),
        grid_spec=pltpu.PrefetchScalarGridSpec(
            num_scalar_prefetch=0,
            grid=(N_CHUNKS,),
            in_specs=[
                pl.BlockSpec((BHW, C_PAD), lambda k: (0, 0)),      # x        (resident)
                pl.BlockSpec((C_PAD, FC), lambda k: (0, k)),       # w_proj   (chunked)
                pl.BlockSpec((B, BHW), lambda k: (0, 0)),          # pool     (resident)
                pl.BlockSpec((FC, HIDDEN), lambda k: (k, 0)),      # w1       (chunked, pipelined DMA)
                pl.BlockSpec((1, HIDDEN), lambda k: (0, 0)),       # b1       (resident)
                pl.BlockSpec((HIDDEN, NC_PAD), lambda k: (0, 0)),  # w2       (resident)
                pl.BlockSpec((1, NC_PAD), lambda k: (0, 0)),       # b2       (resident)
            ],
            out_specs=pl.BlockSpec((B, NC_PAD), lambda k: (0, 0)),
            scratch_shapes=[pltpu.VMEM((B, HIDDEN), jnp.float32)],  # h accumulator
        ),
        # Feature-chunk axis is a reduction for the Linear1 accumulator.
        # TODO(synk): on v7x (2 TCs) a separate parallel axis over chunks with a
        # cross-core reduction could engage the second core; skipped for simplicity.
        compiler_params=pltpu.CompilerParams(
            dimension_semantics=("arbitrary",)),
    )(x, params['w_proj'], params['pool'], params['w1'],
      params['b1'], params['w2'], params['b2'])
    return logits_pad[:, :NUM_CLASSES]    # [B, num_classes] logits


if __name__ == "__main__":
    key = jax.random.PRNGKey(0)
    k_in, k_par = jax.random.split(key)
    rgb = jax.random.normal(k_in, (B, C_IN, H, W), jnp.float32)   # PyTorch NCHW input
    params = init_params(k_par)

    logits = knot_classifier_forward(rgb, params)
    jax.block_until_ready(logits)
    assert logits.shape == (B, NUM_CLASSES)
    print("KERNEL_OK")
</pallas_src>

<mosaic_0001>
module attributes {stable_mosaic.version = 11 : i64} {
  func.func @knot_classifier_kernel(%arg0: i32, %arg1: memref<512x128xbf16, #tpu.memory_space<vmem>>, %arg2: memref<128x512xbf16, #tpu.memory_space<vmem>>, %arg3: memref<2x512xbf16, #tpu.memory_space<vmem>>, %arg4: memref<512x512xbf16, #tpu.memory_space<vmem>>, %arg5: memref<1x512xf32, #tpu.memory_space<vmem>>, %arg6: memref<512x128xbf16, #tpu.memory_space<vmem>>, %arg7: memref<1x128xf32, #tpu.memory_space<vmem>>, %arg8: memref<2x128xf32, #tpu.memory_space<vmem>>, %arg9: memref<2x512xf32, #tpu.memory_space<vmem>>) attributes {dimension_semantics = [#tpu.dimension_semantics<arbitrary>], iteration_bounds = array<i64: 3>, scalar_prefetch = 0 : i64, scratch_operands = 1 : i64, tpu.core_type = #tpu.core_type<tc>, window_params = [{pipeline_mode = #tpu.pipeline_mode<synchronous>, transform_indices = @transform_0, window_bounds = array<i64: 512, 128>}, {transform_indices = @transform_1, window_bounds = array<i64: 128, 512>}, {pipeline_mode = #tpu.pipeline_mode<synchronous>, transform_indices = @transform_2, window_bounds = array<i64: 2, 512>}, {transform_indices = @transform_3, window_bounds = array<i64: 512, 512>}, {pipeline_mode = #tpu.pipeline_mode<synchronous>, transform_indices = @transform_4, window_bounds = array<i64: 1, 512>}, {pipeline_mode = #tpu.pipeline_mode<synchronous>, transform_indices = @transform_5, window_bounds = array<i64: 512, 128>}, {pipeline_mode = #tpu.pipeline_mode<synchronous>, transform_indices = @transform_6, window_bounds = array<i64: 1, 128>}, {pipeline_mode = #tpu.pipeline_mode<synchronous>, transform_indices = @transform_7, window_bounds = array<i64: 2, 128>}]} {
    %c0_i32 = arith.constant 0 : i32
    %0 = arith.cmpi eq, %arg0, %c0_i32 : i32
    %1 = arith.extui %0 : i1 to i32
    %c0_i32_0 = arith.constant 0 : i32
    %2 = arith.cmpi ne, %1, %c0_i32_0 : i32
    scf.if %2 {
      %cst_16 = arith.constant 0.000000e+00 : f32
      %24 = vector.broadcast %cst_16 : f32 to vector<2x512xf32>
      %c0_17 = arith.constant 0 : index
      %c0_18 = arith.constant 0 : index
      %25 = vector.load %arg9[%c0_17, %c0_18] : memref<2x512xf32, #tpu.memory_space<vmem>>, vector<2x512xf32>
      tpu.vector_store %arg9[%c0_17, %c0_18], %24 {strides = array<i32>} : memref<2x512xf32, #tpu.memory_space<vmem>>, vector<2x512xf32>,
    } else {
    }
    %c0 = arith.constant 0 : index
    %c0_1 = arith.constant 0 : index
    %3 = vector.load %arg1[%c0, %c0_1] : memref<512x128xbf16, #tpu.memory_space<vmem>>, vector<512x128xbf16>
    %c0_2 = arith.constant 0 : index
    %c0_3 = arith.constant 0 : index
    %4 = vector.load %arg2[%c0_2, %c0_3] : memref<128x512xbf16, #tpu.memory_space<vmem>>, vector<128x512xbf16>
    %cst = arith.constant dense<0.000000e+00> : vector<512x512xf32>
    %5 = tpu.matmul %3, %4, %cst {dimension_numbers = #tpu.dot_dimension_numbers<[1], [0], [0], [1], [0, 0, 1, 1], [], []>} : vector<512x128xbf16>, vector<128x512xbf16>, vector<512x512xf32> -> vector<512x512xf32>
    %6 = arith.truncf %5 : vector<512x512xf32> to vector<512x512xbf16>
    %7 = arith.negf %6 : vector<512x512xbf16>
    %8 = math.exp %7 : vector<512x512xbf16>
    %cst_4 = arith.constant 1.000000e+00 : bf16
    %9 = vector.broadcast %cst_4 : bf16 to vector<512x512xbf16>
    %10 = arith.addf %9, %8 : vector<512x512xbf16>
    %11 = arith.divf %9, %10 : vector<512x512xbf16>
    %12 = arith.mulf %6, %11 : vector<512x512xbf16>
    %c0_5 = arith.constant 0 : index
    %c0_6 = arith.constant 0 : index
    %13 = vector.load %arg3[%c0_5, %c0_6] : memref<2x512xbf16, #tpu.memory_space<vmem>>, vector<2x512xbf16>
    %cst_7 = arith.constant dense<0.000000e+00> : vector<2x512xf32>
    %14 = tpu.matmul %13, %12, %cst_7 {dimension_numbers = #tpu.dot_dimension_numbers<[1], [0], [0], [1], [0, 0, 1, 1], [], []>} : vector<2x512xbf16>, vector<512x512xbf16>, vector<2x512xf32> -> vector<2x512xf32>
    %c0_8 = arith.constant 0 : index
    %c0_9 = arith.constant 0 : index
    %15 = vector.load %arg9[%c0_8, %c0_9] : memref<2x512xf32, #tpu.memory_space<vmem>>, vector<2x512xf32>
    %16 = arith.truncf %14 : vector<2x512xf32> to vector<2x512xbf16>
    %c0_10 = arith.constant 0 : index
    %c0_11 = arith.constant 0 : index
    %17 = vector.load %arg4[%c0_10, %c0_11] : memref<512x512xbf16, #tpu.memory_space<vmem>>, vector<512x512xbf16>
    %cst_12 = arith.constant dense<0.000000e+00> : vector<2x512xf32>
    %18 = tpu.matmul %16, %17, %cst_12 {dimension_numbers = #tpu.dot_dimension_numbers<[1], [0], [0], [1], [0, 0, 1, 1], [], []>} : vector<2x512xbf16>, vector<512x512xbf16>, vector<2x512xf32> -> vector<2x512xf32>
    %19 = arith.addf %15, %18 : vector<2x512xf32>
    %c0_13 = arith.constant 0 : index
    %c0_14 = arith.constant 0 : index
    %20 = vector.load %arg9[%c0_13, %c0_14] : memref<2x512xf32, #tpu.memory_space<vmem>>, vector<2x512xf32>
    tpu.vector_store %arg9[%c0_13, %c0_14], %19 {strides = array<i32>} : memref<2x512xf32, #tpu.memory_space<vmem>>, vector<2x512xf32>,
    %c2_i32 = arith.constant 2 : i32
    %21 = arith.cmpi eq, %arg0, %c2_i32 : i32
    %22 = arith.extui %21 : i1 to i32
    %c0_i32_15 = arith.constant 0 : i32
    %23 = arith.cmpi ne, %22, %c0_i32_15 : i32
    scf.if %23 {
      %c0_16 = arith.constant 0 : index
      %c0_17 = arith.constant 0 : index
      %24 = vector.load %arg9[%c0_16, %c0_17] : memref<2x512xf32, #tpu.memory_space<vmem>>, vector<2x512xf32>
      %c0_18 = arith.constant 0 : index
      %c0_19 = arith.constant 0 : index
      %25 = vector.load %arg5[%c0_18, %c0_19] : memref<1x512xf32, #tpu.memory_space<vmem>>, vector<1x512xf32>
      %26 = vector.broadcast %25 : vector<1x512xf32> to vector<2x512xf32>
      %27 = arith.addf %24, %26 : vector<2x512xf32>
      %cst_20 = arith.constant 0.000000e+00 : f32
      %28 = vector.broadcast %cst_20 : f32 to vector<2x512xf32>
      %29 = arith.maximumf %27, %28 : vector<2x512xf32>
      %30 = arith.truncf %29 : vector<2x512xf32> to vector<2x512xbf16>
      %c0_21 = arith.constant 0 : index
      %c0_22 = arith.constant 0 : index
      %31 = vector.load %arg6[%c0_21, %c0_22] : memref<512x128xbf16, #tpu.memory_space<vmem>>, vector<512x128xbf16>
      %cst_23 = arith.constant dense<0.000000e+00> : vector<2x128xf32>
      %32 = tpu.matmul %30, %31, %cst_23 {dimension_numbers = #tpu.dot_dimension_numbers<[1], [0], [0], [1], [0, 0, 1, 1], [], []>} : vector<2x512xbf16>, vector<512x128xbf16>, vector<2x128xf32> -> vector<2x128xf32>
      %c0_24 = arith.constant 0 : index
      %c0_25 = arith.constant 0 : index
      %33 = vector.load %arg7[%c0_24, %c0_25] : memref<1x128xf32, #tpu.memory_space<vmem>>, vector<1x128xf32>
      %34 = vector.broadcast %33 : vector<1x128xf32> to vector<2x128xf32>
      %35 = arith.addf %32, %34 : vector<2x128xf32>
      %c0_26 = arith.constant 0 : index
      %c0_27 = arith.constant 0 : index
      %36 = vector.load %arg8[%c0_26, %c0_27] : memref<2x128xf32, #tpu.memory_space<vmem>>, vector<2x128xf32>
      tpu.vector_store %arg8[%c0_26, %c0_27], %35 {strides = array<i32>} : memref<2x128xf32, #tpu.memory_space<vmem>>, vector<2x128xf32>,
    } else {
    }
    return
  }
  func.func @transform_0(%arg0: i32) -> (i32, i32) {
    %c0_i32 = arith.constant 0 : i32
    %c0_i32_0 = arith.constant 0 : i32
    %c0_i32_1 = arith.constant 0 : i32
    return %c0_i32, %c0_i32_0 : i32, i32
  }
  func.func @transform_1(%arg0: i32) -> (i32, i32) {
    %c0_i32 = arith.constant 0 : i32
    %c0_i32_0 = arith.constant 0 : i32
    return %c0_i32, %arg0 : i32, i32
  }
  func.func @transform_2(%arg0: i32) -> (i32, i32) {
    %c0_i32 = arith.constant 0 : i32
    %c0_i32_0 = arith.constant 0 : i32
    %c0_i32_1 = arith.constant 0 : i32
    return %c0_i32, %c0_i32_0 : i32, i32
  }
  func.func @transform_3(%arg0: i32) -> (i32, i32) {
    %c0_i32 = arith.constant 0 : i32
    %c0_i32_0 = arith.constant 0 : i32
    return %arg0, %c0_i32 : i32, i32
  }
  func.func @transform_4(%arg0: i32) -> (i32, i32) {
    %c0_i32 = arith.constant 0 : i32
    %c0_i32_0 = arith.constant 0 : i32
    %c0_i32_1 = arith.constant 0 : i32
    return %c0_i32, %c0_i32_0 : i32, i32
  }
  func.func @transform_5(%arg0: i32) -> (i32, i32) {
    %c0_i32 = arith.constant 0 : i32
    %c0_i32_0 = arith.constant 0 : i32
    %c0_i32_1 = arith.constant 0 : i32
    return %c0_i32, %c0_i32_0 : i32, i32
  }
  func.func @transform_6(%arg0: i32) -> (i32, i32) {
    %c0_i32 = arith.constant 0 : i32
    %c0_i32_0 = arith.constant 0 : i32
    %c0_i32_1 = arith.constant 0 : i32
    return %c0_i32, %c0_i32_0 : i32, i32
  }
  func.func @transform_7(%arg0: i32) -> (i32, i32) {
    %c0_i32 = arith.constant 0 : i32
    %c0_i32_0 = arith.constant 0 : i32
    %c0_i32_1 = arith.constant 0 : i32
    return %c0_i32, %c0_i32_0 : i32, i32
  }
}

</mosaic_0001>

<llo_original>
// kernel: knot_classifier_forward.1
$region0: #{knot_classifier_forward.1}
  #allocation0 [shape = 'u32[]', space=smem, size = 0x4, offset = 0x4, fixed_abs, tag = 'smem constant byte address 0x4 - core index']
  #allocation1 [shape = 'u32[144,128]{1,0:T(1,128)}', space=vmem, size = 0x12000, scoped, tag = 'internal scratch']
  #allocation2 [shape = 'f32[2,512]{1,0:T(2,128)}', space=vmem, size = 0x1000, scoped, tag = 'scratch operand']
  %s0 = inlined_call_operand.vmem [shape: bf16[512,128], index: 0, kind: input, shape index: {}]
  %s1 = inlined_call_operand.hbm [shape: bf16[128,1536], index: 1, kind: input, shape index: {}]
  %s2 = inlined_call_operand.hbm [shape: bf16[2,512], index: 2, kind: input, shape index: {}]
  %s3 = inlined_call_operand.hbm [shape: bf16[1536,512], index: 3, kind: input, shape index: {}]
  %s4 = inlined_call_operand.hbm [shape: f32[1,512], index: 4, kind: input, shape index: {}]
  %s5 = inlined_call_operand.hbm [shape: bf16[512,128], index: 5, kind: input, shape index: {}]
  %s6 = inlined_call_operand.hbm [shape: f32[1,128], index: 6, kind: input, shape index: {}]
  %s7 = inlined_call_operand.hbm [shape: f32[2,128], index: 7, kind: output, shape index: {}]
  %s8 = sld [smem:[#allocation0]]
  $region93: #{knot_classifier_forward.1} parent=0
    _
  %s10 = ssub.s32 1, %s8
  %s11 = scalar_select 0, %s10, %s8
  $region1: #{knot_classifier_forward.1} parent=0
    #allocation3 [shape = 'u8[262144]{0}', space=vmem, size = 0x40000, scoped, tag = 'input window, operand 1']
    #allocation4 [shape = 's32[2]{0}', space=sflag, size = 0x8, scoped, tag = 'scoped memory for knot_classifier_forward.1']
    #allocation5 [shape = 's32[2]{0}', space=sflag, size = 0x8, scoped, tag = 'scoped memory for knot_classifier_forward.1']
    #allocation6 [shape = 'u8[2048]{0}', space=vmem, size = 0x800, scoped, tag = 'input window, operand 2, single buffered']
    #allocation7 [shape = 's32[1]{0}', space=sflag, size = 0x4, scoped, tag = 'scoped memory for knot_classifier_forward.1']
    #allocation8 [shape = 'u8[1048576]{0}', space=vmem, size = 0x100000, scoped, tag = 'input window, operand 3']
    #allocation9 [shape = 'u8[2048]{0}', space=vmem, size = 0x800, scoped, tag = 'input window, operand 4, single buffered']
    #allocation10 [shape = 'u8[131072]{0}', space=vmem, size = 0x20000, scoped, tag = 'input window, operand 5, single buffered']
    #allocation11 [shape = 's32[1]{0}', space=sflag, size = 0x4, scoped, tag = 'scoped memory for knot_classifier_forward.1']
    #allocation12 [shape = 'u8[512]{0}', space=vmem, size = 0x400, scoped, tag = 'input window, operand 6, single buffered']
    #allocation13 [shape = 'u8[1024]{0}', space=vmem, size = 0x400, scoped, tag = 'output window, operand 0, single buffered']
    %12 = vsyncpa [#allocation4], 0
    %s13 = scalar_lea.sflag [#allocation4], 1
    %14 = vsyncpa %s13, 0
    %15 = vsyncpa [#allocation7], 0
    %16 = vsyncpa [#allocation11], 0
    %17 = vsyncpa [#allocation5], 0
    loop: start=0, step=1, limit=5
    $region2: #{knot_classifier_forward.1} parent=1 // loop_pre_header
      _
    $region3: #{knot_classifier_forward.1} parent=1 // loop_header
      %s19 = sphi 0, %s23
      %p20 = scmp.ge.s32.totalorder %s19, 5
      %s27 = sphi 0, %s27
      %s29 = sphi 0, %s27
      %s30 = sphi 0, %s29
      %s44 = sphi 0, %s30
      %s50 = sphi 0, %s52
      %s53 = sphi 0, %s50
      %s54 = sphi 0, %s53
      %s70 = sphi 0, %s54
      %s74 = sphi 0, %s74
      %s76 = sphi 0, %s74
      %s77 = sphi 0, %s76
      %s91 = sphi 0, %s77
      %s97 = sphi 0, %s99
      %s100 = sphi 0, %s97
      %s101 = sphi 0, %s100
      %s117 = sphi 0, %s101
      %s121 = sphi 0, %s121
      %s123 = sphi 0, %s121
      %s124 = sphi 0, %s123
      %s138 = sphi 0, %s124
      %s142 = sphi 0, %s142
      %s144 = sphi 0, %s142
      %s145 = sphi 0, %s144
      %s159 = sphi 0, %s145
      %s163 = sphi 0, %s163
      %s165 = sphi 0, %s163
      %s166 = sphi 0, %s165
      %s180 = sphi 0, %s166
      %s184 = sphi 0, %s184
      %s186 = sphi 0, %s184
      %s187 = sphi 0, %s186
      %s201 = sphi 0, %s187
    $region4: #{knot_classifier_forward.1} parent=1 // loop_header_branch
      %22 = sbr.rel (%p20) target = $region8
    $region5: #{knot_classifier_forward.1} parent=1 // loop_body
      %s24 = ssub.s32 %s19, 1
      %s25 = ssub.s32 %s19, 2
      %s26 = sadd.s32 %s19, 1
      %s28 = sadd.s32 %s27, 1
      %p31 = scmp.eq.s32.totalorder %s19, 2
      %p32 = scmp.ne.s32.totalorder %s27, %s29
      %p33 = scmp.eq.s32.totalorder %s19, 0
      %p34 = por %p32, %p33
      %p35 = scmp.ne.s32.totalorder %s27, %s29
      %p36 = scmp.eq.s32.totalorder %s24, 2
      %p37 = por %p35, %p36
      %p38 = scmp.ne.s32.totalorder %s29, %s30
      %p39 = scmp.eq.s32.totalorder %s24, 0
      %p40 = por %p38, %p39
      %p41 = scmp.ne.s32.totalorder %s29, %s30
      %p42 = scmp.eq.s32.totalorder %s25, 2
      %p43 = por %p41, %p42
      %p45 = scmp.ne.s32.totalorder %s30, %s44
      %p46 = scmp.eq.s32.totalorder %s25, 0
      %p47 = por %p45, %p46
      %s48 = ssub.s32 %s19, %s26
      %p49 = scmp.eq.s32.totalorder %s48, 0
      %s51 = sadd.s32 %s50, 1
      %s52 = scalar_select %p49, %s50, %s51
      %p55 = pneg %p49
      %p56 = scmp.eq.s32.totalorder %s19, 2
      %p57 = por %p55, %p56
      %p58 = scmp.ne.s32.totalorder %s50, %s53
      %p59 = scmp.eq.s32.totalorder %s19, 0
      %p60 = por %p58, %p59
      %p61 = scmp.ne.s32.totalorder %s50, %s53
      %p62 = scmp.eq.s32.totalorder %s24, 2
      %p63 = por %p61, %p62
      %p64 = scmp.ne.s32.totalorder %s53, %s54
      %p65 = scmp.eq.s32.totalorder %s24, 0
      %p66 = por %p64, %p65
      %p67 = scmp.ne.s32.totalorder %s53, %s54
      %p68 = scmp.eq.s32.totalorder %s25, 2
      %p69 = por %p67, %p68
      %p71 = scmp.ne.s32.totalorder %s54, %s70
      %p72 = scmp.eq.s32.totalorder %s25, 0
      %p73 = por %p71, %p72
      %s75 = sadd.s32 %s74, 1
      %p78 = scmp.eq.s32.totalorder %s19, 2
      %p79 = scmp.ne.s32.totalorder %s74, %s76
      %p80 = scmp.eq.s32.totalorder %s19, 0
      %p81 = por %p79, %p80
      %p82 = scmp.ne.s32.totalorder %s74, %s76
      %p83 = scmp.eq.s32.totalorder %s24, 2
      %p84 = por %p82, %p83
      %p85 = scmp.ne.s32.totalorder %s76, %s77
      %p86 = scmp.eq.s32.totalorder %s24, 0
      %p87 = por %p85, %p86
      %p88 = scmp.ne.s32.totalorder %s76, %s77
      %p89 = scmp.eq.s32.totalorder %s25, 2
      %p90 = por %p88, %p89
      %p92 = scmp.ne.s32.totalorder %s77, %s91
      %p93 = scmp.eq.s32.totalorder %s25, 0
      %p94 = por %p92, %p93
      %s95 = ssub.s32 %s19, %s26
      %p96 = scmp.eq.s32.totalorder %s95, 0
      %s98 = sadd.s32 %s97, 1
      %s99 = scalar_select %p96, %s97, %s98
      %p102 = pneg %p96
      %p103 = scmp.eq.s32.totalorder %s19, 2
      %p104 = por %p102, %p103
      %p105 = scmp.ne.s32.totalorder %s97, %s100
      %p106 = scmp.eq.s32.totalorder %s19, 0
      %p107 = por %p105, %p106
      %p108 = scmp.ne.s32.totalorder %s97, %s100
      %p109 = scmp.eq.s32.totalorder %s24, 2
      %p110 = por %p108, %p109
      %p111 = scmp.ne.s32.totalorder %s100, %s101
      %p112 = scmp.eq.s32.totalorder %s24, 0
      %p113 = por %p111, %p112
      %p114 = scmp.ne.s32.totalorder %s100, %s101
      %p115 = scmp.eq.s32.totalorder %s25, 2
      %p116 = por %p114, %p115
      %p118 = scmp.ne.s32.totalorder %s101, %s117
      %p119 = scmp.eq.s32.totalorder %s25, 0
      %p120 = por %p118, %p119
      %s122 = sadd.s32 %s121, 1
      %p125 = scmp.eq.s32.totalorder %s19, 2
      %p126 = scmp.ne.s32.totalorder %s121, %s123
      %p127 = scmp.eq.s32.totalorder %s19, 0
      %p128 = por %p126, %p127
      %p129 = scmp.ne.s32.totalorder %s121, %s123
      %p130 = scmp.eq.s32.totalorder %s24, 2
      %p131 = por %p129, %p130
      %p132 = scmp.ne.s32.totalorder %s123, %s124
      %p133 = scmp.eq.s32.totalorder %s24, 0
      %p134 = por %p132, %p133
      %p135 = scmp.ne.s32.totalorder %s123, %s124
      %p136 = scmp.eq.s32.totalorder %s25, 2
      %p137 = por %p135, %p136
      %p139 = scmp.ne.s32.totalorder %s124, %s138
      %p140 = scmp.eq.s32.totalorder %s25, 0
      %p141 = por %p139, %p140
      %s143 = sadd.s32 %s142, 1
      %p146 = scmp.eq.s32.totalorder %s19, 2
      %p147 = scmp.ne.s32.totalorder %s142, %s144
      %p148 = scmp.eq.s32.totalorder %s19, 0
      %p149 = por %p147, %p148
      %p150 = scmp.ne.s32.totalorder %s142, %s144
      %p151 = scmp.eq.s32.totalorder %s24, 2
      %p152 = por %p150, %p151
      %p153 = scmp.ne.s32.totalorder %s144, %s145
      %p154 = scmp.eq.s32.totalorder %s24, 0
      %p155 = por %p153, %p154
      %p156 = scmp.ne.s32.totalorder %s144, %s145
      %p157 = scmp.eq.s32.totalorder %s25, 2
      %p158 = por %p156, %p157
      %p160 = scmp.ne.s32.totalorder %s145, %s159
      %p161 = scmp.eq.s32.totalorder %s25, 0
      %p162 = por %p160, %p161
      %s164 = sadd.s32 %s163, 1
      %p167 = scmp.eq.s32.totalorder %s19, 2
      %p168 = scmp.ne.s32.totalorder %s163, %s165
      %p169 = scmp.eq.s32.totalorder %s19, 0
      %p170 = por %p168, %p169
      %p171 = scmp.ne.s32.totalorder %s163, %s165
      %p172 = scmp.eq.s32.totalorder %s24, 2
      %p173 = por %p171, %p172
      %p174 = scmp.ne.s32.totalorder %s165, %s166
      %p175 = scmp.eq.s32.totalorder %s24, 0
      %p176 = por %p174, %p175
      %p177 = scmp.ne.s32.totalorder %s165, %s166
      %p178 = scmp.eq.s32.totalorder %s25, 2
      %p179 = por %p177, %p178
      %p181 = scmp.ne.s32.totalorder %s166, %s180
      %p182 = scmp.eq.s32.totalorder %s25, 0
      %p183 = por %p181, %p182
      %s185 = sadd.s32 %s184, 1
      %p188 = scmp.eq.s32.totalorder %s19, 2
      %p189 = scmp.ne.s32.totalorder %s184, %s186
      %p190 = scmp.eq.s32.totalorder %s19, 0
      %p191 = por %p189, %p190
      %p192 = scmp.ne.s32.totalorder %s184, %s186
      %p193 = scmp.eq.s32.totalorder %s24, 2
      %p194 = por %p192, %p193
      %p195 = scmp.ne.s32.totalorder %s186, %s187
      %p196 = scmp.eq.s32.totalorder %s24, 0
      %p197 = por %p195, %p196
      %p198 = scmp.ne.s32.totalorder %s186, %s187
      %p199 = scmp.eq.s32.totalorder %s25, 2
      %p200 = por %p198, %p199
      %p202 = scmp.ne.s32.totalorder %s187, %s201
      %p203 = scmp.eq.s32.totalorder %s25, 0
      %p204 = por %p202, %p203
      %p205 = scmp.le.s32.totalorder 1, %s19
      %p206 = scmp.lt.s32.totalorder %s19, 4
      %p207 = pnand %p205, %p206
      %p208 = pneg %p207
      // Predicated region
      $region9: #{knot_classifier_forward.1} parent=5 // pred_check
        _
      $region10: #{knot_classifier_forward.1} parent=5 // pred_check_branch
        %210 = sbr.rel (%p207) target = $region12
      $region11: #{knot_classifier_forward.1} parent=5 // pred_region
        %s211 = ssub.s32 %s19, 1
        // Predicated region
        $region13: #{knot_classifier_forward.1} parent=11 // pred_check
          %p212 = pneg %p40
        $region14: #{knot_classifier_forward.1} parent=11 // pred_check_branch
          %214 = sbr.rel (%p212) target = $region16
        $region15: #{knot_classifier_forward.1} parent=11 // pred_region
          _
        $region16: #{knot_classifier_forward.1} parent=11 // pred_fallthru
          _
        // Predicated region
        $region17: #{knot_classifier_forward.1} parent=11 // pred_check
          %p215 = pneg %p87
        $region18: #{knot_classifier_forward.1} parent=11 // pred_check_branch
          %217 = sbr.rel (%p215) target = $region20
        $region19: #{knot_classifier_forward.1} parent=11 // pred_region
          %s219 = ssub.s32 64, 64
          %220 = vsyncadd [#allocation7], %s219
          %s222 = sshll.u32 [#allocation6], 4
          %s223 = int_to_ptr.vmem [resolvable:$true] %s222
          %225 = dma.hbm_to_vmem [thread:$0]  %s2, 64, %s223, [#allocation7]
        $region20: #{knot_classifier_forward.1} parent=11 // pred_fallthru
          _
        // Predicated region
        $region21: #{knot_classifier_forward.1} parent=11 // pred_check
          %p226 = pneg %p134
        $region22: #{knot_classifier_forward.1} parent=11 // pred_check_branch
          %228 = sbr.rel (%p226) target = $region24
        $region23: #{knot_classifier_forward.1} parent=11 // pred_region
          %s230 = ssub.s32 64, 64
          %231 = vsyncadd [#allocation7], %s230
          %s233 = sshll.u32 [#allocation9], 4
          %s234 = int_to_ptr.vmem [resolvable:$true] %s233
          %236 = dma.hbm_to_vmem [thread:$0]  %s4, 64, %s234, [#allocation7]
        $region24: #{knot_classifier_forward.1} parent=11 // pred_fallthru
          _
        // Predicated region
        $region25: #{knot_classifier_forward.1} parent=11 // pred_check
          %p237 = pneg %p155
        $region26: #{knot_classifier_forward.1} parent=11 // pred_check_branch
          %239 = sbr.rel (%p237) target = $region28
        $region27: #{knot_classifier_forward.1} parent=11 // pred_region
          %s241 = ssub.s32 4096, 4096
          %242 = vsyncadd [#allocation11], %s241
          %s243 = sshll.u32 [#allocation10], 4
          %s244 = int_to_ptr.vmem [resolvable:$true] %s243
          %249 = dma.hbm_to_vmem [thread:$0]  %s5, 4096, %s244, [#allocation11], 64, 64, 4
        $region28: #{knot_classifier_forward.1} parent=11 // pred_fallthru
          _
        // Predicated region
        $region29: #{knot_classifier_forward.1} parent=11 // pred_check
          %p250 = pneg %p176
        $region30: #{knot_classifier_forward.1} parent=11 // pred_check_branch
          %252 = sbr.rel (%p250) target = $region32
        $region31: #{knot_classifier_forward.1} parent=11 // pred_region
          %s254 = ssub.s32 16, 16
          %255 = vsyncadd [#allocation11], %s254
          %s257 = sshll.u32 [#allocation12], 4
          %s258 = int_to_ptr.vmem [resolvable:$true] %s257
          %260 = dma.hbm_to_vmem [thread:$0]  %s6, 16, %s258, [#allocation11]
        $region32: #{knot_classifier_forward.1} parent=11 // pred_fallthru
          _
      $region12: #{knot_classifier_forward.1} parent=5 // pred_fallthru
        _
      %p261 = scmp.lt.s32.totalorder %s19, 3
      // Predicated region
      $region33: #{knot_classifier_forward.1} parent=5 // pred_check
        %p262 = pneg %p261
      $region34: #{knot_classifier_forward.1} parent=5 // pred_check_branch
        %264 = sbr.rel (%p262) target = $region36
      $region35: #{knot_classifier_forward.1} parent=5 // pred_region
        // Predicated region
        $region37: #{knot_classifier_forward.1} parent=35 // pred_check
          %p265 = pneg %p60
        $region38: #{knot_classifier_forward.1} parent=35 // pred_check_branch
          %267 = sbr.rel (%p265) target = $region40
        $region39: #{knot_classifier_forward.1} parent=35 // pred_region
          %s268 = sand.u32 %s19, 1
          %s269 = scalar_lea.sflag [#allocation4], %s268
          %s270 = sand.u32 %s50, 1
          %s271 = smul.addr %s270, 256
          %s272 = scalar_lea.vmem [#allocation3], %s271
          %s273 = smul.u32 4, %s19
          %s275 = ssub.s32 4096, 4096
          %276 = vsyncadd %s269, %s275
          %s277 = smul.addr %s273, 64
          %s278 = scalar_lea.hbm %s1, %s277
          %s279 = sshll.u32 %s272, 4
          %s280 = int_to_ptr.vmem [resolvable:$true] %s279
          %285 = dma.hbm_to_vmem [thread:$0]  %s278, 4096, %s280, %s269, 768, 256, 16
        $region40: #{knot_classifier_forward.1} parent=35 // pred_fallthru
          _
        // Predicated region
        $region41: #{knot_classifier_forward.1} parent=35 // pred_check
          %p286 = pneg %p107
        $region42: #{knot_classifier_forward.1} parent=35 // pred_check_branch
          %288 = sbr.rel (%p286) target = $region44
        $region43: #{knot_classifier_forward.1} parent=35 // pred_region
          %s289 = sand.u32 %s19, 1
          %s290 = scalar_lea.sflag [#allocation4], %s289
          %s291 = sand.u32 %s97, 1
          %s292 = smul.addr %s291, 1024
          %s293 = scalar_lea.vmem [#allocation8], %s292
          %s294 = smul.u32 64, %s19
          %s296 = ssub.s32 16384, 16384
          %297 = vsyncadd %s290, %s296
          %s298 = smul.addr %s294, 4
          %s299 = smul.addr %s298, 64
          %s300 = scalar_lea.hbm %s3, %s299
          %s301 = sshll.u32 %s293, 4
          %s302 = int_to_ptr.vmem [resolvable:$true] %s301
          %307 = dma.hbm_to_vmem [thread:$0]  %s300, 16384, %s302, %s290, 256, 256, 16
        $region44: #{knot_classifier_forward.1} parent=35 // pred_fallthru
          _
      $region36: #{knot_classifier_forward.1} parent=5 // pred_fallthru
        _
      %p308 = scmp.le.s32.totalorder 1, %s19
      %p309 = scmp.lt.s32.totalorder %s19, 4
      %p310 = pnand %p308, %p309
      %p311 = pneg %p310
      // Predicated region
      $region45: #{knot_classifier_forward.1} parent=5 // pred_check
        _
      $region46: #{knot_classifier_forward.1} parent=5 // pred_check_branch
        %313 = sbr.rel (%p310) target = $region48
      $region47: #{knot_classifier_forward.1} parent=5 // pred_region
        %s314 = ssub.s32 %s19, 1
        %s315 = sand.u32 %s24, 1
        %s316 = scalar_lea.sflag [#allocation4], %s315
        %s317 = sand.u32 %s53, 1
        %s318 = smul.addr %s317, 256
        %s319 = scalar_lea.vmem [#allocation3], %s318
        // Predicated region
        $region49: #{knot_classifier_forward.1} parent=47 // pred_check
          %p320 = pneg %p66
        $region50: #{knot_classifier_forward.1} parent=47 // pred_check_branch
          %322 = sbr.rel (%p320) target = $region52
        $region51: #{knot_classifier_forward.1} parent=47 // pred_region
          %323 = dma.done %s316, 4096
        $region52: #{knot_classifier_forward.1} parent=47 // pred_fallthru
          _
        // Predicated region
        $region53: #{knot_classifier_forward.1} parent=47 // pred_check
          %p324 = pneg %p87
        $region54: #{knot_classifier_forward.1} parent=47 // pred_check_branch
          %326 = sbr.rel (%p324) target = $region56
        $region55: #{knot_classifier_forward.1} parent=47 // pred_region
          %327 = dma.done [#allocation7], 64
        $region56: #{knot_classifier_forward.1} parent=47 // pred_fallthru
          _
        %s328 = sand.u32 %s24, 1
        %s329 = scalar_lea.sflag [#allocation4], %s328
        %s330 = sand.u32 %s100, 1
        %s331 = smul.addr %s330, 1024
        %s332 = scalar_lea.vmem [#allocation8], %s331
        // Predicated region
        $region57: #{knot_classifier_forward.1} parent=47 // pred_check
          %p333 = pneg %p113
        $region58: #{knot_classifier_forward.1} parent=47 // pred_check_branch
          %335 = sbr.rel (%p333) target = $region60
        $region59: #{knot_classifier_forward.1} parent=47 // pred_region
          %336 = dma.done %s329, 16384
        $region60: #{knot_classifier_forward.1} parent=47 // pred_fallthru
          _
        // Predicated region
        $region61: #{knot_classifier_forward.1} parent=47 // pred_check
          %p337 = pneg %p134
        $region62: #{knot_classifier_forward.1} parent=47 // pred_check_branch
          %339 = sbr.rel (%p337) target = $region64
        $region63: #{knot_classifier_forward.1} parent=47 // pred_region
          %340 = dma.done [#allocation7], 64
        $region64: #{knot_classifier_forward.1} parent=47 // pred_fallthru
          _
        // Predicated region
        $region65: #{knot_classifier_forward.1} parent=47 // pred_check
          %p341 = pneg %p155
        $region66: #{knot_classifier_forward.1} parent=47 // pred_check_branch
          %343 = sbr.rel (%p341) target = $region68
        $region67: #{knot_classifier_forward.1} parent=47 // pred_region
          %344 = dma.done [#allocation11], 4096
        $region68: #{knot_classifier_forward.1} parent=47 // pred_fallthru
          _
        // Predicated region
        $region69: #{knot_classifier_forward.1} parent=47 // pred_check
          %p345 = pneg %p176
        $region70: #{knot_classifier_forward.1} parent=47 // pred_check_branch
          %347 = sbr.rel (%p345) target = $region72
        $region71: #{knot_classifier_forward.1} parent=47 // pred_region
          %348 = dma.done [#allocation11], 16
        $region72: #{knot_classifier_forward.1} parent=47 // pred_fallthru
          _
        %p349 = pneg %p40
        %p350 = pneg %p37
        %s351 = sand.u32 %s24, 1
        %s352 = scalar_lea.sflag [#allocation4], %s351
        %s353 = sand.u32 %s53, 1
        %s354 = smul.addr %s353, 256
        %s355 = scalar_lea.vmem [#allocation3], %s354
        %p356 = pneg %p66
        %p357 = pneg %p63
        %p358 = pneg %p87
        %p359 = pneg %p84
        %s360 = sand.u32 %s24, 1
        %s361 = scalar_lea.sflag [#allocation4], %s360
        %s362 = sand.u32 %s100, 1
        %s363 = smul.addr %s362, 1024
        %s364 = scalar_lea.vmem [#allocation8], %s363
        %p365 = pneg %p113
        %p366 = pneg %p110
        %p367 = pneg %p134
        %p368 = pneg %p131
        %p369 = pneg %p155
        %p370 = pneg %p152
        %p371 = pneg %p176
        %p372 = pneg %p173
        %p373 = pneg %p197
        %p374 = pneg %p194
        %s375 = smul.u32 4, %s24
        %s376 = smul.u32 64, %s24
        %p379 = scmp.eq.s32.totalorder %s24, 0
        // Predicated region
        $region73: #{knot_classifier_forward.1} parent=47 // pred_check
          %p380 = pneg %p379
        $region74: #{knot_classifier_forward.1} parent=47 // pred_check_branch
          %382 = sbr.rel (%p380) target = $region76
        $region75: #{knot_classifier_forward.1} parent=47 // pred_region
          %383 = vst [vmem:[#allocation2] sm:$0xff] 0.0
        $region76: #{knot_classifier_forward.1} parent=47 // pred_fallthru
          _
        %v384 = vld [vmem:[%s0] sm:$0xf]
        %v385 = vld [vmem:[%s0 + $0x4] sm:$0xf]
        %v386 = vld [vmem:[%s0 + $0x8] sm:$0xf]
        %v387 = vld [vmem:[%s0 + $0xc] sm:$0xf]
        %v388 = vld [vmem:[%s0 + $0x10] sm:$0xf]
        %v389 = vld [vmem:[%s0 + $0x14] sm:$0xf]
        %v390 = vld [vmem:[%s0 + $0x18] sm:$0xf]
        %v391 = vld [vmem:[%s0 + $0x1c] sm:$0xf]
        %v392 = vld [vmem:[%s0 + $0x20] sm:$0xf]
        %v393 = vld [vmem:[%s0 + $0x24] sm:$0xf]
        %v394 = vld [vmem:[%s0 + $0x28] sm:$0xf]
        %v395 = vld [vmem:[%s0 + $0x2c] sm:$0xf]
        %v396 = vld [vmem:[%s0 + $0x30] sm:$0xf]
        %v397 = vld [vmem:[%s0 + $0x34] sm:$0xf]
        %v398 = vld [vmem:[%s0 + $0x38] sm:$0xf]
        %v399 = vld [vmem:[%s0 + $0x3c] sm:$0xf]
        %v400 = vld [vmem:[%s0 + $0x40] sm:$0xf]
        %v401 = vld [vmem:[%s0 + $0x44] sm:$0xf]
        %v402 = vld [vmem:[%s0 + $0x48] sm:$0xf]
        %v403 = vld [vmem:[%s0 + $0x4c] sm:$0xf]
        %v404 = vld [vmem:[%s0 + $0x50] sm:$0xf]
        %v405 = vld [vmem:[%s0 + $0x54] sm:$0xf]
        %v406 = vld [vmem:[%s0 + $0x58] sm:$0xf]
        %v407 = vld [vmem:[%s0 + $0x5c] sm:$0xf]
        %v408 = vld [vmem:[%s0 + $0x60] sm:$0xf]
        %v409 = vld [vmem:[%s0 + $0x64] sm:$0xf]
        %v410 = vld [vmem:[%s0 + $0x68] sm:$0xf]
        %v411 = vld [vmem:[%s0 + $0x6c] sm:$0xf]
        %v412 = vld [vmem:[%s0 + $0x70] sm:$0xf]
        %v413 = vld [vmem:[%s0 + $0x74] sm:$0xf]
        %v414 = vld [vmem:[%s0 + $0x78] sm:$0xf]
        %v415 = vld [vmem:[%s0 + $0x7c] sm:$0xf]
        %v416 = vld [vmem:[%s0 + $0x80] sm:$0xf]
        %v417 = vld [vmem:[%s0 + $0x84] sm:$0xf]
        %v418 = vld [vmem:[%s0 + $0x88] sm:$0xf]
        %v419 = vld [vmem:[%s0 + $0x8c] sm:$0xf]
        %v420 = vld [vmem:[%s0 + $0x90] sm:$0xf]
        %v421 = vld [vmem:[%s0 + $0x94] sm:$0xf]
        %v422 = vld [vmem:[%s0 + $0x98] sm:$0xf]
        %v423 = vld [vmem:[%s0 + $0x9c] sm:$0xf]
        %v424 = vld [vmem:[%s0 + $0xa0] sm:$0xf]
        %v425 = vld [vmem:[%s0 + $0xa4] sm:$0xf]
        %v426 = vld [vmem:[%s0 + $0xa8] sm:$0xf]
        %v427 = vld [vmem:[%s0 + $0xac] sm:$0xf]
        %v428 = vld [vmem:[%s0 + $0xb0] sm:$0xf]
        %v429 = vld [vmem:[%s0 + $0xb4] sm:$0xf]
        %v430 = vld [vmem:[%s0 + $0xb8] sm:$0xf]
        %v431 = vld [vmem:[%s0 + $0xbc] sm:$0xf]
        %v432 = vld [vmem:[%s0 + $0xc0] sm:$0xf]
        %v433 = vld [vmem:[%s0 + $0xc4] sm:$0xf]
        %v434 = vld [vmem:[%s0 + $0xc8] sm:$0xf]
        %v435 = vld [vmem:[%s0 + $0xcc] sm:$0xf]
        %v436 = vld [vmem:[%s0 + $0xd0] sm:$0xf]
        %v437 = vld [vmem:[%s0 + $0xd4] sm:$0xf]
        %v438 = vld [vmem:[%s0 + $0xd8] sm:$0xf]
        %v439 = vld [vmem:[%s0 + $0xdc] sm:$0xf]
        %v440 = vld [vmem:[%s0 + $0xe0] sm:$0xf]
        %v441 = vld [vmem:[%s0 + $0xe4] sm:$0xf]
        %v442 = vld [vmem:[%s0 + $0xe8] sm:$0xf]
        %v443 = vld [vmem:[%s0 + $0xec] sm:$0xf]
        %v444 = vld [vmem:[%s0 + $0xf0] sm:$0xf]
        %v445 = vld [vmem:[%s0 + $0xf4] sm:$0xf]
        %v446 = vld [vmem:[%s0 + $0xf8] sm:$0xf]
        %v447 = vld [vmem:[%s0 + $0xfc] sm:$0xf]
        %v448 = vld [vmem:[%s319] sm:$0xff]
        %v449 = vld [vmem:[%s319 + $0x8] sm:$0xff]
        %v450 = vld [vmem:[%s319 + $0x10] sm:$0xff]
        %v451 = vld [vmem:[%s319 + $0x18] sm:$0xff]
        %v452 = vld [vmem:[%s319 + $0x20] sm:$0xff]
        %v453 = vld [vmem:[%s319 + $0x28] sm:$0xff]
        %v454 = vld [vmem:[%s319 + $0x30] sm:$0xff]
        %v455 = vld [vmem:[%s319 + $0x38] sm:$0xff]
        %v456 = vld [vmem:[%s319 + $0x40] sm:$0xff]
        %v457 = vld [vmem:[%s319 + $0x48] sm:$0xff]
        %v458 = vld [vmem:[%s319 + $0x50] sm:$0xff]
        %v459 = vld [vmem:[%s319 + $0x58] sm:$0xff]
        %v460 = vld [vmem:[%s319 + $0x60] sm:$0xff]
        %v461 = vld [vmem:[%s319 + $0x68] sm:$0xff]
        %v462 = vld [vmem:[%s319 + $0x70] sm:$0xff]
        %v463 = vld [vmem:[%s319 + $0x78] sm:$0xff]
        %v464 = vld [vmem:[%s319 + $0x80] sm:$0xff]
        %v465 = vld [vmem:[%s319 + $0x88] sm:$0xff]
        %v466 = vld [vmem:[%s319 + $0x90] sm:$0xff]
        %v467 = vld [vmem:[%s319 + $0x98] sm:$0xff]
        %v468 = vld [vmem:[%s319 + $0xa0] sm:$0xff]
        %v469 = vld [vmem:[%s319 + $0xa8] sm:$0xff]
        %v470 = vld [vmem:[%s319 + $0xb0] sm:$0xff]
        %v471 = vld [vmem:[%s319 + $0xb8] sm:$0xff]
        %v472 = vld [vmem:[%s319 + $0xc0] sm:$0xff]
        %v473 = vld [vmem:[%s319 + $0xc8] sm:$0xff]
        %v474 = vld [vmem:[%s319 + $0xd0] sm:$0xff]
        %v475 = vld [vmem:[%s319 + $0xd8] sm:$0xff]
        %v476 = vld [vmem:[%s319 + $0xe0] sm:$0xff]
        %v477 = vld [vmem:[%s319 + $0xe8] sm:$0xff]
        %v478 = vld [vmem:[%s319 + $0xf0] sm:$0xff]
        %v479 = vld [vmem:[%s319 + $0xf8] sm:$0xff]
        %v544 = vunpack.c.l.b16 %v384
        %v545 = vunpack.c.l.b16 %v385
        %v546 = vunpack.c.l.b16 %v386
        %v547 = vunpack.c.l.b16 %v387
        %v548 = vunpack.c.l.b16 %v388
        %v549 = vunpack.c.l.b16 %v389
        %v550 = vunpack.c.l.b16 %v390
        %v551 = vunpack.c.l.b16 %v391
        %v552 = vunpack.c.l.b16 %v392
        %v553 = vunpack.c.l.b16 %v393
        %v554 = vunpack.c.l.b16 %v394
        %v555 = vunpack.c.l.b16 %v395
        %v556 = vunpack.c.l.b16 %v396
        %v557 = vunpack.c.l.b16 %v397
        %v558 = vunpack.c.l.b16 %v398
        %v559 = vunpack.c.l.b16 %v399
        %v560 = vunpack.c.l.b16 %v400
        %v561 = vunpack.c.l.b16 %v401
        %v562 = vunpack.c.l.b16 %v402
        %v563 = vunpack.c.l.b16 %v403
        %v564 = vunpack.c.l.b16 %v404
        %v565 = vunpack.c.l.b16 %v405
        %v566 = vunpack.c.l.b16 %v406
        %v567 = vunpack.c.l.b16 %v407
        %v568 = vunpack.c.l.b16 %v408
        %v569 = vunpack.c.l.b16 %v409
        %v570 = vunpack.c.l.b16 %v410
        %v571 = vunpack.c.l.b16 %v411
        %v572 = vunpack.c.l.b16 %v412
        %v573 = vunpack.c.l.b16 %v413
        %v574 = vunpack.c.l.b16 %v414
        %v575 = vunpack.c.l.b16 %v415
        %v576 = vunpack.c.l.b16 %v416
        %v577 = vunpack.c.l.b16 %v417
        %v578 = vunpack.c.l.b16 %v418
        %v579 = vunpack.c.l.b16 %v419
        %v580 = vunpack.c.l.b16 %v420
        %v581 = vunpack.c.l.b16 %v421
        %v582 = vunpack.c.l.b16 %v422
        %v583 = vunpack.c.l.b16 %v423
        %v584 = vunpack.c.l.b16 %v424
        %v585 = vunpack.c.l.b16 %v425
        %v586 = vunpack.c.l.b16 %v426
        %v587 = vunpack.c.l.b16 %v427
        %v588 = vunpack.c.l.b16 %v428
        %v589 = vunpack.c.l.b16 %v429
        %v590 = vunpack.c.l.b16 %v430
        %v591 = vunpack.c.l.b16 %v431
        %v592 = vunpack.c.l.b16 %v432
        %v593 = vunpack.c.l.b16 %v433
        %v594 = vunpack.c.l.b16 %v434
        %v595 = vunpack.c.l.b16 %v435
        %v596 = vunpack.c.l.b16 %v436
        %v597 = vunpack.c.l.b16 %v437
        %v598 = vunpack.c.l.b16 %v438
        %v599 = vunpack.c.l.b16 %v439
        %v600 = vunpack.c.l.b16 %v440
        %v601 = vunpack.c.l.b16 %v441
        %v602 = vunpack.c.l.b16 %v442
        %v603 = vunpack.c.l.b16 %v443
        %v604 = vunpack.c.l.b16 %v444
        %v605 = vunpack.c.l.b16 %v445
        %v606 = vunpack.c.l.b16 %v446
        %v607 = vunpack.c.l.b16 %v447
        %v608 = vpack.c.b16 %v545, %v544
        %v609 = vpack.c.b16 %v547, %v546
        %v610 = vpack.c.b16 %v549, %v548
        %v611 = vpack.c.b16 %v551, %v550
        %v612 = vpack.c.b16 %v553, %v552
        %v613 = vpack.c.b16 %v555, %v554
        %v614 = vpack.c.b16 %v557, %v556
        %v615 = vpack.c.b16 %v559, %v558
        %v616 = vpack.c.b16 %v561, %v560
        %v617 = vpack.c.b16 %v563, %v562
        %v618 = vpack.c.b16 %v565, %v564
        %v619 = vpack.c.b16 %v567, %v566
        %v620 = vpack.c.b16 %v569, %v568
        %v621 = vpack.c.b16 %v571, %v570
        %v622 = vpack.c.b16 %v573, %v572
        %v623 = vpack.c.b16 %v575, %v574
        %v624 = vpack.c.b16 %v577, %v576
        %v625 = vpack.c.b16 %v579, %v578
        %v626 = vpack.c.b16 %v581, %v580
        %v627 = vpack.c.b16 %v583, %v582
        %v628 = vpack.c.b16 %v585, %v584
        %v629 = vpack.c.b16 %v587, %v586
        %v630 = vpack.c.b16 %v589, %v588
        %v631 = vpack.c.b16 %v591, %v590
        %v632 = vpack.c.b16 %v593, %v592
        %v633 = vpack.c.b16 %v595, %v594
        %v634 = vpack.c.b16 %v597, %v596
        %v635 = vpack.c.b16 %v599, %v598
        %v636 = vpack.c.b16 %v601, %v600
        %v637 = vpack.c.b16 %v603, %v602
        %v638 = vpack.c.b16 %v605, %v604
        %v639 = vpack.c.b16 %v607, %v606
        %v704 = vunpack.c.l.b16 %v448
        %v705 = vunpack.c.h.b16 %v448
        %v706 = vunpack.c.l.b16 %v449
        %v707 = vunpack.c.h.b16 %v449
        %v708 = vunpack.c.l.b16 %v450
        %v709 = vunpack.c.h.b16 %v450
        %v710 = vunpack.c.l.b16 %v451
        %v711 = vunpack.c.h.b16 %v451
        %v712 = vunpack.c.l.b16 %v452
        %v713 = vunpack.c.h.b16 %v452
        %v714 = vunpack.c.l.b16 %v453
        %v715 = vunpack.c.h.b16 %v453
        %v716 = vunpack.c.l.b16 %v454
        %v717 = vunpack.c.h.b16 %v454
        %v718 = vunpack.c.l.b16 %v455
        %v719 = vunpack.c.h.b16 %v455
        %v720 = vunpack.c.l.b16 %v456
        %v721 = vunpack.c.h.b16 %v456
        %v722 = vunpack.c.l.b16 %v457
        %v723 = vunpack.c.h.b16 %v457
        %v724 = vunpack.c.l.b16 %v458
        %v725 = vunpack.c.h.b16 %v458
        %v726 = vunpack.c.l.b16 %v459
        %v727 = vunpack.c.h.b16 %v459
        %v728 = vunpack.c.l.b16 %v460
        %v729 = vunpack.c.h.b16 %v460
        %v730 = vunpack.c.l.b16 %v461
        %v731 = vunpack.c.h.b16 %v461
        %v732 = vunpack.c.l.b16 %v462
        %v733 = vunpack.c.h.b16 %v462
        %v734 = vunpack.c.l.b16 %v463
        %v735 = vunpack.c.h.b16 %v463
        %v736 = vunpack.c.l.b16 %v464
        %v737 = vunpack.c.h.b16 %v464
        %v738 = vunpack.c.l.b16 %v465
        %v739 = vunpack.c.h.b16 %v465
        %v740 = vunpack.c.l.b16 %v466
        %v741 = vunpack.c.h.b16 %v466
        %v742 = vunpack.c.l.b16 %v467
        %v743 = vunpack.c.h.b16 %v467
        %v744 = vunpack.c.l.b16 %v468
        %v745 = vunpack.c.h.b16 %v468
        %v746 = vunpack.c.l.b16 %v469
        %v747 = vunpack.c.h.b16 %v469
        %v748 = vunpack.c.l.b16 %v470
        %v749 = vunpack.c.h.b16 %v470
        %v750 = vunpack.c.l.b16 %v471
        %v751 = vunpack.c.h.b16 %v471
        %v752 = vunpack.c.l.b16 %v472
        %v753 = vunpack.c.h.b16 %v472
        %v754 = vunpack.c.l.b16 %v473
        %v755 = vunpack.c.h.b16 %v473
        %v756 = vunpack.c.l.b16 %v474
        %v757 = vunpack.c.h.b16 %v474
        %v758 = vunpack.c.l.b16 %v475
        %v759 = vunpack.c.h.b16 %v475
        %v760 = vunpack.c.l.b16 %v476
        %v761 = vunpack.c.h.b16 %v476
        %v762 = vunpack.c.l.b16 %v477
        %v763 = vunpack.c.h.b16 %v477
        %v764 = vunpack.c.l.b16 %v478
        %v765 = vunpack.c.h.b16 %v478
        %v766 = vunpack.c.l.b16 %v479
        %v767 = vunpack.c.h.b16 %v479
        %v768 = vpack.c.b16 %v708, %v704
        %v769 = vpack.c.b16 %v709, %v705
        %v770 = vpack.c.b16 %v710, %v706
        %v771 = vpack.c.b16 %v711, %v707
        %v772 = vpack.c.b16 %v716, %v712
        %v773 = vpack.c.b16 %v717, %v713
        %v774 = vpack.c.b16 %v718, %v714
        %v775 = vpack.c.b16 %v719, %v715
        %v776 = vpack.c.b16 %v724, %v720
        %v777 = vpack.c.b16 %v725, %v721
        %v778 = vpack.c.b16 %v726, %v722
        %v779 = vpack.c.b16 %v727, %v723
        %v780 = vpack.c.b16 %v732, %v728
        %v781 = vpack.c.b16 %v733, %v729
        %v782 = vpack.c.b16 %v734, %v730
        %v783 = vpack.c.b16 %v735, %v731
        %v784 = vpack.c.b16 %v740, %v736
        %v785 = vpack.c.b16 %v741, %v737
        %v786 = vpack.c.b16 %v742, %v738
        %v787 = vpack.c.b16 %v743, %v739
        %v788 = vpack.c.b16 %v748, %v744
        %v789 = vpack.c.b16 %v749, %v745
        %v790 = vpack.c.b16 %v750, %v746
        %v791 = vpack.c.b16 %v751, %v747
        %v792 = vpack.c.b16 %v756, %v752
        %v793 = vpack.c.b16 %v757, %v753
        %v794 = vpack.c.b16 %v758, %v754
        %v795 = vpack.c.b16 %v759, %v755
        %v796 = vpack.c.b16 %v764, %v760
        %v797 = vpack.c.b16 %v765, %v761
        %v798 = vpack.c.b16 %v766, %v762
        %v799 = vpack.c.b16 %v767, %v763
        %832 = vmatprep.subr.bf16.mxu0 %v769
        %833 = vmatpush1.bf16.msra.mxu0 %v768
        %834 = vmatprep.subr.bf16.mxu0 %v773
        %835 = vmatpush1.bf16.msra.mxu0 %v772
        %836 = vmatprep.subr.bf16.mxu0 %v777
        %837 = vmatpush1.bf16.msra.mxu0 %v776
        %838 = vmatprep.subr.bf16.mxu0 %v781
        %839 = vmatpush1.bf16.msra.mxu0 %v780
        %840 = vmatprep.subr.bf16.mxu0 %v785
        %841 = vmatpush1.bf16.msra.mxu0 %v784
        %842 = vmatprep.subr.bf16.mxu0 %v789
        %843 = vmatpush1.bf16.msra.mxu0 %v788
        %844 = vmatprep.subr.bf16.mxu0 %v793
        %845 = vmatpush1.bf16.msra.mxu0 %v792
        %846 = vmatprep.subr.bf16.mxu0 %v797
        %847 = vmatpush1.bf16.msra.mxu0 %v796
        %848 = vmatprep.subr.bf16.mxu0 0
        %849 = vmatpush1.bf16.msra.mxu0 0
        %850 = vmatprep.subr.bf16.mxu0 0
        %851 = vmatpush1.bf16.msra.mxu0 0
        %852 = vmatprep.subr.bf16.mxu0 0
        %853 = vmatpush1.bf16.msra.mxu0 0
        %854 = vmatprep.subr.bf16.mxu0 0
        %855 = vmatpush1.bf16.msra.mxu0 0
        %856 = vmatprep.subr.bf16.mxu0 0
        %857 = vmatpush1.bf16.msra.mxu0 0
        %858 = vmatprep.subr.bf16.mxu0 0
        %859 = vmatpush1.bf16.msra.mxu0 0
        %860 = vmatprep.subr.bf16.mxu0 0
        %861 = vmatpush1.bf16.msra.mxu0 0
        %862 = vmatprep.subr.bf16.mxu0 0
        %863 = vmatpush1.bf16.msra.mxu0 0
        %864 = vmatprep.mubr.bf16.mxu0 0
        %865 = vmatmul.mubr.bf16.gmra.mrb[0].mxu0 %v608
        %v866 = vpop.f32.mrb[0].mxu0
        %v867 = vadd.f32 0.0, %v866
        %v868 = vpop.f32.mrb[0].mxu0
        %v869 = vadd.f32 0.0, %v868
        %v870 = vpop.f32.mrb[0].mxu0
        %v871 = vadd.f32 0.0, %v870
        %v872 = vpop.f32.mrb[0].mxu0
        %v873 = vadd.f32 0.0, %v872
        %874 = vmatprep.mubr.bf16.mxu0 0
        %875 = vmatmul.mubr.bf16.gmra.mrb[0].mxu0 %v609
        %v876 = vpop.f32.mrb[0].mxu0
        %v877 = vadd.f32 0.0, %v876
        %v878 = vpop.f32.mrb[0].mxu0
        %v879 = vadd.f32 0.0, %v878
        %v880 = vpop.f32.mrb[0].mxu0
        %v881 = vadd.f32 0.0, %v880
        %v882 = vpop.f32.mrb[0].mxu0
        %v883 = vadd.f32 0.0, %v882
        %884 = vmatprep.mubr.bf16.mxu0 0
        %885 = vmatmul.mubr.bf16.gmra.mrb[0].mxu0 %v610
        %v886 = vpop.f32.mrb[0].mxu0
        %v887 = vadd.f32 0.0, %v886
        %v888 = vpop.f32.mrb[0].mxu0
        %v889 = vadd.f32 0.0, %v888
        %v890 = vpop.f32.mrb[0].mxu0
        %v891 = vadd.f32 0.0, %v890
        %v892 = vpop.f32.mrb[0].mxu0
        %v893 = vadd.f32 0.0, %v892
        %894 = vmatprep.mubr.bf16.mxu0 0
        %895 = vmatmul.mubr.bf16.gmra.mrb[0].mxu0 %v611
        %v896 = vpop.f32.mrb[0].mxu0
        %v897 = vadd.f32 0.0, %v896
        %v898 = vpop.f32.mrb[0].mxu0
        %v899 = vadd.f32 0.0, %v898
        %v900 = vpop.f32.mrb[0].mxu0
        %v901 = vadd.f32 0.0, %v900
        %v902 = vpop.f32.mrb[0].mxu0
        %v903 = vadd.f32 0.0, %v902
        %904 = vmatprep.mubr.bf16.mxu0 0
        %905 = vmatmul.mubr.bf16.gmra.mrb[0].mxu0 %v612
        %v906 = vpop.f32.mrb[0].mxu0
        %v907 = vadd.f32 0.0, %v906
        %v908 = vpop.f32.mrb[0].mxu0
        %v909 = vadd.f32 0.0, %v908
        %v910 = vpop.f32.mrb[0].mxu0
        %v911 = vadd.f32 0.0, %v910
        %v912 = vpop.f32.mrb[0].mxu0
        %v913 = vadd.f32 0.0, %v912
        %914 = vmatprep.mubr.bf16.mxu0 0
        %915 = vmatmul.mubr.bf16.gmra.mrb[0].mxu0 %v613
        %v916 = vpop.f32.mrb[0].mxu0
        %v917 = vadd.f32 0.0, %v916
        %v918 = vpop.f32.mrb[0].mxu0
        %v919 = vadd.f32 0.0, %v918
        %v920 = vpop.f32.mrb[0].mxu0
        %v921 = vadd.f32 0.0, %v920
        %v922 = vpop.f32.mrb[0].mxu0
        %v923 = vadd.f32 0.0, %v922
        %924 = vmatprep.mubr.bf16.mxu0 0
        %925 = vmatmul.mubr.bf16.gmra.mrb[0].mxu0 %v614
        %v926 = vpop.f32.mrb[0].mxu0
        %v927 = vadd.f32 0.0, %v926
        %v928 = vpop.f32.mrb[0].mxu0
        %v929 = vadd.f32 0.0, %v928
        %v930 = vpop.f32.mrb[0].mxu0
        %v931 = vadd.f32 0.0, %v930
        %v932 = vpop.f32.mrb[0].mxu0
        %v933 = vadd.f32 0.0, %v932
        %934 = vmatprep.mubr.bf16.mxu0 0
        %935 = vmatmul.mubr.bf16.gmra.mrb[0].mxu0 %v615
        %v936 = vpop.f32.mrb[0].mxu0
        %v937 = vadd.f32 0.0, %v936
        %v938 = vpop.f32.mrb[0].mxu0
        %v939 = vadd.f32 0.0, %v938
        %v940 = vpop.f32.mrb[0].mxu0
        %v941 = vadd.f32 0.0, %v940
        %v942 = vpop.f32.mrb[0].mxu0
        %v943 = vadd.f32 0.0, %v942
        %944 = vmatprep.mubr.bf16.mxu0 0
        %945 = vmatmul.mubr.bf16.gmra.mrb[0].mxu0 %v616
        %v946 = vpop.f32.mrb[0].mxu0
        %v947 = vadd.f32 0.0, %v946
        %v948 = vpop.f32.mrb[0].mxu0
        %v949 = vadd.f32 0.0, %v948
        %v950 = vpop.f32.mrb[0].mxu0
        %v951 = vadd.f32 0.0, %v950
        %v952 = vpop.f32.mrb[0].mxu0
        %v953 = vadd.f32 0.0, %v952
        %954 = vmatprep.mubr.bf16.mxu0 0
        %955 = vmatmul.mubr.bf16.gmra.mrb[0].mxu0 %v617
        %v956 = vpop.f32.mrb[0].mxu0
        %v957 = vadd.f32 0.0, %v956
        %v958 = vpop.f32.mrb[0].mxu0
        %v959 = vadd.f32 0.0, %v958
        %v960 = vpop.f32.mrb[0].mxu0
        %v961 = vadd.f32 0.0, %v960
        %v962 = vpop.f32.mrb[0].mxu0
        %v963 = vadd.f32 0.0, %v962
        %964 = vmatprep.mubr.bf16.mxu0 0
        %965 = vmatmul.mubr.bf16.gmra.mrb[0].mxu0 %v618
        %v966 = vpop.f32.mrb[0].mxu0
        %v967 = vadd.f32 0.0, %v966
        %v968 = vpop.f32.mrb[0].mxu0
        %v969 = vadd.f32 0.0, %v968
        %v970 = vpop.f32.mrb[0].mxu0
        %v971 = vadd.f32 0.0, %v970
        %v972 = vpop.f32.mrb[0].mxu0
        %v973 = vadd.f32 0.0, %v972
        %974 = vmatprep.mubr.bf16.mxu0 0
        %975 = vmatmul.mubr.bf16.gmra.mrb[0].mxu0 %v619
        %v976 = vpop.f32.mrb[0].mxu0
        %v977 = vadd.f32 0.0, %v976
        %v978 = vpop.f32.mrb[0].mxu0
        %v979 = vadd.f32 0.0, %v978
        %v980 = vpop.f32.mrb[0].mxu0
        %v981 = vadd.f32 0.0, %v980
        %v982 = vpop.f32.mrb[0].mxu0
        %v983 = vadd.f32 0.0, %v982
        %984 = vmatprep.mubr.bf16.mxu0 0
        %985 = vmatmul.mubr.bf16.gmra.mrb[0].mxu0 %v620
        %v986 = vpop.f32.mrb[0].mxu0
        %v987 = vadd.f32 0.0, %v986
        %v988 = vpop.f32.mrb[0].mxu0
        %v989 = vadd.f32 0.0, %v988
        %v990 = vpop.f32.mrb[0].mxu0
        %v991 = vadd.f32 0.0, %v990
        %v992 = vpop.f32.mrb[0].mxu0
        %v993 = vadd.f32 0.0, %v992
        %994 = vmatprep.mubr.bf16.mxu0 0
        %995 = vmatmul.mubr.bf16.gmra.mrb[0].mxu0 %v621
        %v996 = vpop.f32.mrb[0].mxu0
        %v997 = vadd.f32 0.0, %v996
        %v998 = vpop.f32.mrb[0].mxu0
        %v999 = vadd.f32 0.0, %v998
        %v1000 = vpop.f32.mrb[0].mxu0
        %v1001 = vadd.f32 0.0, %v1000
        %v1002 = vpop.f32.mrb[0].mxu0
        %v1003 = vadd.f32 0.0, %v1002
        %1004 = vmatprep.mubr.bf16.mxu0 0
        %1005 = vmatmul.mubr.bf16.gmra.mrb[0].mxu0 %v622
        %v1006 = vpop.f32.mrb[0].mxu0
        %v1007 = vadd.f32 0.0, %v1006
        %v1008 = vpop.f32.mrb[0].mxu0
        %v1009 = vadd.f32 0.0, %v1008
        %v1010 = vpop.f32.mrb[0].mxu0
        %v1011 = vadd.f32 0.0, %v1010
        %v1012 = vpop.f32.mrb[0].mxu0
        %v1013 = vadd.f32 0.0, %v1012
        %1014 = vmatprep.mubr.bf16.mxu0 0
        %1015 = vmatmul.mubr.bf16.gmra.mrb[0].mxu0 %v623
        %v1016 = vpop.f32.mrb[0].mxu0
        %v1017 = vadd.f32 0.0, %v1016
        %v1018 = vpop.f32.mrb[0].mxu0
        %v1019 = vadd.f32 0.0, %v1018
        %v1020 = vpop.f32.mrb[0].mxu0
        %v1021 = vadd.f32 0.0, %v1020
        %v1022 = vpop.f32.mrb[0].mxu0
        %v1023 = vadd.f32 0.0, %v1022
        %1024 = vmatprep.mubr.bf16.mxu0 0
        %1025 = vmatmul.mubr.bf16.gmra.mrb[0].mxu0 %v624
        %v1026 = vpop.f32.mrb[0].mxu0
        %v1027 = vadd.f32 0.0, %v1026
        %v1028 = vpop.f32.mrb[0].mxu0
        %v1029 = vadd.f32 0.0, %v1028
        %v1030 = vpop.f32.mrb[0].mxu0
        %v1031 = vadd.f32 0.0, %v1030
        %v1032 = vpop.f32.mrb[0].mxu0
        %v1033 = vadd.f32 0.0, %v1032
        %1034 = vmatprep.mubr.bf16.mxu0 0
        %1035 = vmatmul.mubr.bf16.gmra.mrb[0].mxu0 %v625
        %v1036 = vpop.f32.mrb[0].mxu0
        %v1037 = vadd.f32 0.0, %v1036
        %v1038 = vpop.f32.mrb[0].mxu0
        %v1039 = vadd.f32 0.0, %v1038
        %v1040 = vpop.f32.mrb[0].mxu0
        %v1041 = vadd.f32 0.0, %v1040
        %v1042 = vpop.f32.mrb[0].mxu0
        %v1043 = vadd.f32 0.0, %v1042
        %1044 = vmatprep.mubr.bf16.mxu0 0
        %1045 = vmatmul.mubr.bf16.gmra.mrb[0].mxu0 %v626
        %v1046 = vpop.f32.mrb[0].mxu0
        %v1047 = vadd.f32 0.0, %v1046
        %v1048 = vpop.f32.mrb[0].mxu0
        %v1049 = vadd.f32 0.0, %v1048
        %v1050 = vpop.f32.mrb[0].mxu0
        %v1051 = vadd.f32 0.0, %v1050
        %v1052 = vpop.f32.mrb[0].mxu0
        %v1053 = vadd.f32 0.0, %v1052
        %1054 = vmatprep.mubr.bf16.mxu0 0
        %1055 = vmatmul.mubr.bf16.gmra.mrb[0].mxu0 %v627
        %v1056 = vpop.f32.mrb[0].mxu0
        %v1057 = vadd.f32 0.0, %v1056
        %v1058 = vpop.f32.mrb[0].mxu0
        %v1059 = vadd.f32 0.0, %v1058
        %v1060 = vpop.f32.mrb[0].mxu0
        %v1061 = vadd.f32 0.0, %v1060
        %v1062 = vpop.f32.mrb[0].mxu0
        %v1063 = vadd.f32 0.0, %v1062
        %1064 = vmatprep.mubr.bf16.mxu0 0
        %1065 = vmatmul.mubr.bf16.gmra.mrb[0].mxu0 %v628
        %v1066 = vpop.f32.mrb[0].mxu0
        %v1067 = vadd.f32 0.0, %v1066
        %v1068 = vpop.f32.mrb[0].mxu0
        %v1069 = vadd.f32 0.0, %v1068
        %v1070 = vpop.f32.mrb[0].mxu0
        %v1071 = vadd.f32 0.0, %v1070
        %v1072 = vpop.f32.mrb[0].mxu0
        %v1073 = vadd.f32 0.0, %v1072
        %1074 = vmatprep.mubr.bf16.mxu0 0
        %1075 = vmatmul.mubr.bf16.gmra.mrb[0].mxu0 %v629
        %v1076 = vpop.f32.mrb[0].mxu0
        %v1077 = vadd.f32 0.0, %v1076
        %v1078 = vpop.f32.mrb[0].mxu0
        %v1079 = vadd.f32 0.0, %v1078
        %v1080 = vpop.f32.mrb[0].mxu0
        %v1081 = vadd.f32 0.0, %v1080
        %v1082 = vpop.f32.mrb[0].mxu0
        %v1083 = vadd.f32 0.0, %v1082
        %1084 = vmatprep.mubr.bf16.mxu0 0
        %1085 = vmatmul.mubr.bf16.gmra.mrb[0].mxu0 %v630
        %v1086 = vpop.f32.mrb[0].mxu0
        %v1087 = vadd.f32 0.0, %v1086
        %v1088 = vpop.f32.mrb[0].mxu0
        %v1089 = vadd.f32 0.0, %v1088
        %v1090 = vpop.f32.mrb[0].mxu0
        %v1091 = vadd.f32 0.0, %v1090
        %v1092 = vpop.f32.mrb[0].mxu0
        %v1093 = vadd.f32 0.0, %v1092
        %1094 = vmatprep.mubr.bf16.mxu0 0
        %1095 = vmatmul.mubr.bf16.gmra.mrb[0].mxu0 %v631
        %v1096 = vpop.f32.mrb[0].mxu0
        %v1097 = vadd.f32 0.0, %v1096
        %v1098 = vpop.f32.mrb[0].mxu0
        %v1099 = vadd.f32 0.0, %v1098
        %v1100 = vpop.f32.mrb[0].mxu0
        %v1101 = vadd.f32 0.0, %v1100
        %v1102 = vpop.f32.mrb[0].mxu0
        %v1103 = vadd.f32 0.0, %v1102
        %1104 = vmatprep.mubr.bf16.mxu0 0
        %1105 = vmatmul.mubr.bf16.gmra.mrb[0].mxu0 %v632
        %v1106 = vpop.f32.mrb[0].mxu0
        %v1107 = vadd.f32 0.0, %v1106
        %v1108 = vpop.f32.mrb[0].mxu0
        %v1109 = vadd.f32 0.0, %v1108
        %v1110 = vpop.f32.mrb[0].mxu0
        %v1111 = vadd.f32 0.0, %v1110
        %v1112 = vpop.f32.mrb[0].mxu0
        %v1113 = vadd.f32 0.0, %v1112
        %1114 = vmatprep.mubr.bf16.mxu0 0
        %1115 = vmatmul.mubr.bf16.gmra.mrb[0].mxu0 %v633
        %v1116 = vpop.f32.mrb[0].mxu0
        %v1117 = vadd.f32 0.0, %v1116
        %v1118 = vpop.f32.mrb[0].mxu0
        %v1119 = vadd.f32 0.0, %v1118
        %v1120 = vpop.f32.mrb[0].mxu0
        %v1121 = vadd.f32 0.0, %v1120
        %v1122 = vpop.f32.mrb[0].mxu0
        %v1123 = vadd.f32 0.0, %v1122
        %1124 = vmatprep.mubr.bf16.mxu0 0
        %1125 = vmatmul.mubr.bf16.gmra.mrb[0].mxu0 %v634
        %v1126 = vpop.f32.mrb[0].mxu0
        %v1127 = vadd.f32 0.0, %v1126
        %v1128 = vpop.f32.mrb[0].mxu0
        %v1129 = vadd.f32 0.0, %v1128
        %v1130 = vpop.f32.mrb[0].mxu0
        %v1131 = vadd.f32 0.0, %v1130
        %v1132 = vpop.f32.mrb[0].mxu0
        %v1133 = vadd.f32 0.0, %v1132
        %1134 = vmatprep.mubr.bf16.mxu0 0
        %1135 = vmatmul.mubr.bf16.gmra.mrb[0].mxu0 %v635
        %v1136 = vpop.f32.mrb[0].mxu0
        %v1137 = vadd.f32 0.0, %v1136
        %v1138 = vpop.f32.mrb[0].mxu0
        %v1139 = vadd.f32 0.0, %v1138
        %v1140 = vpop.f32.mrb[0].mxu0
        %v1141 = vadd.f32 0.0, %v1140
        %v1142 = vpop.f32.mrb[0].mxu0
        %v1143 = vadd.f32 0.0, %v1142
        %1144 = vmatprep.mubr.bf16.mxu0 0
        %1145 = vmatmul.mubr.bf16.gmra.mrb[0].mxu0 %v636
        %v1146 = vpop.f32.mrb[0].mxu0
        %v1147 = vadd.f32 0.0, %v1146
        %v1148 = vpop.f32.mrb[0].mxu0
        %v1149 = vadd.f32 0.0, %v1148
        %v1150 = vpop.f32.mrb[0].mxu0
        %v1151 = vadd.f32 0.0, %v1150
        %v1152 = vpop.f32.mrb[0].mxu0
        %v1153 = vadd.f32 0.0, %v1152
        %1154 = vmatprep.mubr.bf16.mxu0 0
        %1155 = vmatmul.mubr.bf16.gmra.mrb[0].mxu0 %v637
        %v1156 = vpop.f32.mrb[0].mxu0
        %v1157 = vadd.f32 0.0, %v1156
        %v1158 = vpop.f32.mrb[0].mxu0
        %v1159 = vadd.f32 0.0, %v1158
        %v1160 = vpop.f32.mrb[0].mxu0
        %v1161 = vadd.f32 0.0, %v1160
        %v1162 = vpop.f32.mrb[0].mxu0
        %v1163 = vadd.f32 0.0, %v1162
        %1164 = vmatprep.mubr.bf16.mxu0 0
        %1165 = vmatmul.mubr.bf16.gmra.mrb[0].mxu0 %v638
        %v1166 = vpop.f32.mrb[0].mxu0
        %v1167 = vadd.f32 0.0, %v1166
        %v1168 = vpop.f32.mrb[0].mxu0
        %v1169 = vadd.f32 0.0, %v1168
        %v1170 = vpop.f32.mrb[0].mxu0
        %v1171 = vadd.f32 0.0, %v1170
        %v1172 = vpop.f32.mrb[0].mxu0
        %v1173 = vadd.f32 0.0, %v1172
        %1174 = vmatprep.mubr.bf16.mxu0 0
        %1175 = vmatmul.mubr.bf16.gmra.mrb[0].mxu0 %v639
        %v1176 = vpop.f32.mrb[0].mxu0
        %v1177 = vadd.f32 0.0, %v1176
        %v1178 = vpop.f32.mrb[0].mxu0
        %v1179 = vadd.f32 0.0, %v1178
        %v1180 = vpop.f32.mrb[0].mxu0
        %v1181 = vadd.f32 0.0, %v1180
        %v1182 = vpop.f32.mrb[0].mxu0
        %v1183 = vadd.f32 0.0, %v1182
        %1184 = vdwg.mxu0
        %1185 = vmatprep.subr.bf16.mxu0 %v771
        %1186 = vmatpush1.bf16.msra.mxu0 %v770
        %1187 = vmatprep.subr.bf16.mxu0 %v775
        %1188 = vmatpush1.bf16.msra.mxu0 %v774
        %1189 = vmatprep.subr.bf16.mxu0 %v779
        %1190 = vmatpush1.bf16.msra.mxu0 %v778
        %1191 = vmatprep.subr.bf16.mxu0 %v783
        %1192 = vmatpush1.bf16.msra.mxu0 %v782
        %1193 = vmatprep.subr.bf16.mxu0 %v787
        %1194 = vmatpush1.bf16.msra.mxu0 %v786
        %1195 = vmatprep.subr.bf16.mxu0 %v791
        %1196 = vmatpush1.bf16.msra.mxu0 %v790
        %1197 = vmatprep.subr.bf16.mxu0 %v795
        %1198 = vmatpush1.bf16.msra.mxu0 %v794
        %1199 = vmatprep.subr.bf16.mxu0 %v799
        %1200 = vmatpush1.bf16.msra.mxu0 %v798
        %1201 = vmatprep.subr.bf16.mxu0 0
        %1202 = vmatpush1.bf16.msra.mxu0 0
        %1203 = vmatprep.subr.bf16.mxu0 0
        %1204 = vmatpush1.bf16.msra.mxu0 0
        %1205 = vmatprep.subr.bf16.mxu0 0
        %1206 = vmatpush1.bf16.msra.mxu0 0
        %1207 = vmatprep.subr.bf16.mxu0 0
        %1208 = vmatpush1.bf16.msra.mxu0 0
        %1209 = vmatprep.subr.bf16.mxu0 0
        %1210 = vmatpush1.bf16.msra.mxu0 0
        %1211 = vmatprep.subr.bf16.mxu0 0
        %1212 = vmatpush1.bf16.msra.mxu0 0
        %1213 = vmatprep.subr.bf16.mxu0 0
        %1214 = vmatpush1.bf16.msra.mxu0 0
        %1215 = vmatprep.subr.bf16.mxu0 0
        %1216 = vmatpush1.bf16.msra.mxu0 0
        %1217 = vmatprep.mubr.bf16.mxu0 0
        %1218 = vmatmul.mubr.bf16.gmra.mrb[0].mxu0 %v608
        %v1219 = vpop.f32.mrb[0].mxu0
        %v1220 = vadd.f32 0.0, %v1219
        %v1221 = vpop.f32.mrb[0].mxu0
        %v1222 = vadd.f32 0.0, %v1221
        %v1223 = vpop.f32.mrb[0].mxu0
        %v1224 = vadd.f32 0.0, %v1223
        %v1225 = vpop.f32.mrb[0].mxu0
        %v1226 = vadd.f32 0.0, %v1225
        %1227 = vmatprep.mubr.bf16.mxu0 0
        %1228 = vmatmul.mubr.bf16.gmra.mrb[0].mxu0 %v609
        %v1229 = vpop.f32.mrb[0].mxu0
        %v1230 = vadd.f32 0.0, %v1229
        %v1231 = vpop.f32.mrb[0].mxu0
        %v1232 = vadd.f32 0.0, %v1231
        %v1233 = vpop.f32.mrb[0].mxu0
        %v1234 = vadd.f32 0.0, %v1233
        %v1235 = vpop.f32.mrb[0].mxu0
        %v1236 = vadd.f32 0.0, %v1235
        %1237 = vmatprep.mubr.bf16.mxu0 0
        %1238 = vmatmul.mubr.bf16.gmra.mrb[0].mxu0 %v610
        %v1239 = vpop.f32.mrb[0].mxu0
        %v1240 = vadd.f32 0.0, %v1239
        %v1241 = vpop.f32.mrb[0].mxu0
        %v1242 = vadd.f32 0.0, %v1241
        %v1243 = vpop.f32.mrb[0].mxu0
        %v1244 = vadd.f32 0.0, %v1243
        %v1245 = vpop.f32.mrb[0].mxu0
        %v1246 = vadd.f32 0.0, %v1245
        %1247 = vmatprep.mubr.bf16.mxu0 0
        %1248 = vmatmul.mubr.bf16.gmra.mrb[0].mxu0 %v611
        %v1249 = vpop.f32.mrb[0].mxu0
        %v1250 = vadd.f32 0.0, %v1249
        %v1251 = vpop.f32.mrb[0].mxu0
        %v1252 = vadd.f32 0.0, %v1251
        %v1253 = vpop.f32.mrb[0].mxu0
        %v1254 = vadd.f32 0.0, %v1253
        %v1255 = vpop.f32.mrb[0].mxu0
        %v1256 = vadd.f32 0.0, %v1255
        %1257 = vmatprep.mubr.bf16.mxu0 0
        %1258 = vmatmul.mubr.bf16.gmra.mrb[0].mxu0 %v612
        %v1259 = vpop.f32.mrb[0].mxu0
        %v1260 = vadd.f32 0.0, %v1259
        %v1261 = vpop.f32.mrb[0].mxu0
        %v1262 = vadd.f32 0.0, %v1261
        %v1263 = vpop.f32.mrb[0].mxu0
        %v1264 = vadd.f32 0.0, %v1263
        %v1265 = vpop.f32.mrb[0].mxu0
        %v1266 = vadd.f32 0.0, %v1265
        %1267 = vmatprep.mubr.bf16.mxu0 0
        %1268 = vmatmul.mubr.bf16.gmra.mrb[0].mxu0 %v613
        %v1269 = vpop.f32.mrb[0].mxu0
        %v1270 = vadd.f32 0.0, %v1269
        %v1271 = vpop.f32.mrb[0].mxu0
        %v1272 = vadd.f32 0.0, %v1271
        %v1273 = vpop.f32.mrb[0].mxu0
        %v1274 = vadd.f32 0.0, %v1273
        %v1275 = vpop.f32.mrb[0].mxu0
        %v1276 = vadd.f32 0.0, %v1275
        %1277 = vmatprep.mubr.bf16.mxu0 0
        %1278 = vmatmul.mubr.bf16.gmra.mrb[0].mxu0 %v614
        %v1279 = vpop.f32.mrb[0].mxu0
        %v1280 = vadd.f32 0.0, %v1279
        %v1281 = vpop.f32.mrb[0].mxu0
        %v1282 = vadd.f32 0.0, %v1281
        %v1283 = vpop.f32.mrb[0].mxu0
        %v1284 = vadd.f32 0.0, %v1283
        %v1285 = vpop.f32.mrb[0].mxu0
        %v1286 = vadd.f32 0.0, %v1285
        %1287 = vmatprep.mubr.bf16.mxu0 0
        %1288 = vmatmul.mubr.bf16.gmra.mrb[0].mxu0 %v615
        %v1289 = vpop.f32.mrb[0].mxu0
        %v1290 = vadd.f32 0.0, %v1289
        %v1291 = vpop.f32.mrb[0].mxu0
        %v1292 = vadd.f32 0.0, %v1291
        %v1293 = vpop.f32.mrb[0].mxu0
        %v1294 = vadd.f32 0.0, %v1293
        %v1295 = vpop.f32.mrb[0].mxu0
        %v1296 = vadd.f32 0.0, %v1295
        %1297 = vmatprep.mubr.bf16.mxu0 0
        %1298 = vmatmul.mubr.bf16.gmra.mrb[0].mxu0 %v616
        %v1299 = vpop.f32.mrb[0].mxu0
        %v1300 = vadd.f32 0.0, %v1299
        %v1301 = vpop.f32.mrb[0].mxu0
        %v1302 = vadd.f32 0.0, %v1301
        %v1303 = vpop.f32.mrb[0].mxu0
        %v1304 = vadd.f32 0.0, %v1303
        %v1305 = vpop.f32.mrb[0].mxu0
        %v1306 = vadd.f32 0.0, %v1305
        %1307 = vmatprep.mubr.bf16.mxu0 0
        %1308 = vmatmul.mubr.bf16.gmra.mrb[0].mxu0 %v617
        %v1309 = vpop.f32.mrb[0].mxu0
        %v1310 = vadd.f32 0.0, %v1309
        %v1311 = vpop.f32.mrb[0].mxu0
        %v1312 = vadd.f32 0.0, %v1311
        %v1313 = vpop.f32.mrb[0].mxu0
        %v1314 = vadd.f32 0.0, %v1313
        %v1315 = vpop.f32.mrb[0].mxu0
        %v1316 = vadd.f32 0.0, %v1315
        %1317 = vmatprep.mubr.bf16.mxu0 0
        %1318 = vmatmul.mubr.bf16.gmra.mrb[0].mxu0 %v618
        %v1319 = vpop.f32.mrb[0].mxu0
        %v1320 = vadd.f32 0.0, %v1319
        %v1321 = vpop.f32.mrb[0].mxu0
        %v1322 = vadd.f32 0.0, %v1321
        %v1323 = vpop.f32.mrb[0].mxu0
        %v1324 = vadd.f32 0.0, %v1323
        %v1325 = vpop.f32.mrb[0].mxu0
        %v1326 = vadd.f32 0.0, %v1325
        %1327 = vmatprep.mubr.bf16.mxu0 0
        %1328 = vmatmul.mubr.bf16.gmra.mrb[0].mxu0 %v619
        %v1329 = vpop.f32.mrb[0].mxu0
        %v1330 = vadd.f32 0.0, %v1329
        %v1331 = vpop.f32.mrb[0].mxu0
        %v1332 = vadd.f32 0.0, %v1331
        %v1333 = vpop.f32.mrb[0].mxu0
        %v1334 = vadd.f32 0.0, %v1333
        %v1335 = vpop.f32.mrb[0].mxu0
        %v1336 = vadd.f32 0.0, %v1335
        %1337 = vmatprep.mubr.bf16.mxu0 0
        %1338 = vmatmul.mubr.bf16.gmra.mrb[0].mxu0 %v620
        %v1339 = vpop.f32.mrb[0].mxu0
        %v1340 = vadd.f32 0.0, %v1339
        %v1341 = vpop.f32.mrb[0].mxu0
        %v1342 = vadd.f32 0.0, %v1341
        %v1343 = vpop.f32.mrb[0].mxu0
        %v1344 = vadd.f32 0.0, %v1343
        %v1345 = vpop.f32.mrb[0].mxu0
        %v1346 = vadd.f32 0.0, %v1345
        %1347 = vmatprep.mubr.bf16.mxu0 0
        %1348 = vmatmul.mubr.bf16.gmra.mrb[0].mxu0 %v621
        %v1349 = vpop.f32.mrb[0].mxu0
        %v1350 = vadd.f32 0.0, %v1349
        %v1351 = vpop.f32.mrb[0].mxu0
        %v1352 = vadd.f32 0.0, %v1351
        %v1353 = vpop.f32.mrb[0].mxu0
        %v1354 = vadd.f32 0.0, %v1353
        %v1355 = vpop.f32.mrb[0].mxu0
        %v1356 = vadd.f32 0.0, %v1355
        %1357 = vmatprep.mubr.bf16.mxu0 0
        %1358 = vmatmul.mubr.bf16.gmra.mrb[0].mxu0 %v622
        %v1359 = vpop.f32.mrb[0].mxu0
        %v1360 = vadd.f32 0.0, %v1359
        %v1361 = vpop.f32.mrb[0].mxu0
        %v1362 = vadd.f32 0.0, %v1361
        %v1363 = vpop.f32.mrb[0].mxu0
        %v1364 = vadd.f32 0.0, %v1363
        %v1365 = vpop.f32.mrb[0].mxu0
        %v1366 = vadd.f32 0.0, %v1365
        %1367 = vmatprep.mubr.bf16.mxu0 0
        %1368 = vmatmul.mubr.bf16.gmra.mrb[0].mxu0 %v623
        %v1369 = vpop.f32.mrb[0].mxu0
        %v1370 = vadd.f32 0.0, %v1369
        %v1371 = vpop.f32.mrb[0].mxu0
        %v1372 = vadd.f32 0.0, %v1371
        %v1373 = vpop.f32.mrb[0].mxu0
        %v1374 = vadd.f32 0.0, %v1373
        %v1375 = vpop.f32.mrb[0].mxu0
        %v1376 = vadd.f32 0.0, %v1375
        %1377 = vmatprep.mubr.bf16.mxu0 0
        %1378 = vmatmul.mubr.bf16.gmra.mrb[0].mxu0 %v624
        %v1379 = vpop.f32.mrb[0].mxu0
        %v1380 = vadd.f32 0.0, %v1379
        %v1381 = vpop.f32.mrb[0].mxu0
        %v1382 = vadd.f32 0.0, %v1381
        %v1383 = vpop.f32.mrb[0].mxu0
        %v1384 = vadd.f32 0.0, %v1383
        %v1385 = vpop.f32.mrb[0].mxu0
        %v1386 = vadd.f32 0.0, %v1385
        %1387 = vmatprep.mubr.bf16.mxu0 0
        %1388 = vmatmul.mubr.bf16.gmra.mrb[0].mxu0 %v625
        %v1389 = vpop.f32.mrb[0].mxu0
        %v1390 = vadd.f32 0.0, %v1389
        %v1391 = vpop.f32.mrb[0].mxu0
        %v1392 = vadd.f32 0.0, %v1391
        %v1393 = vpop.f32.mrb[0].mxu0
        %v1394 = vadd.f32 0.0, %v1393
        %v1395 = vpop.f32.mrb[0].mxu0
        %v1396 = vadd.f32 0.0, %v1395
        %1397 = vmatprep.mubr.bf16.mxu0 0
        %1398 = vmatmul.mubr.bf16.gmra.mrb[0].mxu0 %v626
        %v1399 = vpop.f32.mrb[0].mxu0
        %v1400 = vadd.f32 0.0, %v1399
        %v1401 = vpop.f32.mrb[0].mxu0
        %v1402 = vadd.f32 0.0, %v1401
        %v1403 = vpop.f32.mrb[0].mxu0
        %v1404 = vadd.f32 0.0, %v1403
        %v1405 = vpop.f32.mrb[0].mxu0
        %v1406 = vadd.f32 0.0, %v1405
        %1407 = vmatprep.mubr.bf16.mxu0 0
        %1408 = vmatmul.mubr.bf16.gmra.mrb[0].mxu0 %v627
        %v1409 = vpop.f32.mrb[0].mxu0
        %v1410 = vadd.f32 0.0, %v1409
        %v1411 = vpop.f32.mrb[0].mxu0
        %v1412 = vadd.f32 0.0, %v1411
        %v1413 = vpop.f32.mrb[0].mxu0
        %v1414 = vadd.f32 0.0, %v1413
        %v1415 = vpop.f32.mrb[0].mxu0
        %v1416 = vadd.f32 0.0, %v1415
        %1417 = vmatprep.mubr.bf16.mxu0 0
        %1418 = vmatmul.mubr.bf16.gmra.mrb[0].mxu0 %v628
        %v1419 = vpop.f32.mrb[0].mxu0
        %v1420 = vadd.f32 0.0, %v1419
        %v1421 = vpop.f32.mrb[0].mxu0
        %v1422 = vadd.f32 0.0, %v1421
        %v1423 = vpop.f32.mrb[0].mxu0
        %v1424 = vadd.f32 0.0, %v1423
        %v1425 = vpop.f32.mrb[0].mxu0
        %v1426 = vadd.f32 0.0, %v1425
        %1427 = vmatprep.mubr.bf16.mxu0 0
        %1428 = vmatmul.mubr.bf16.gmra.mrb[0].mxu0 %v629
        %v1429 = vpop.f32.mrb[0].mxu0
        %v1430 = vadd.f32 0.0, %v1429
        %v1431 = vpop.f32.mrb[0].mxu0
        %v1432 = vadd.f32 0.0, %v1431
        %v1433 = vpop.f32.mrb[0].mxu0
        %v1434 = vadd.f32 0.0, %v1433
        %v1435 = vpop.f32.mrb[0].mxu0
        %v1436 = vadd.f32 0.0, %v1435
        %1437 = vmatprep.mubr.bf16.mxu0 0
        %1438 = vmatmul.mubr.bf16.gmra.mrb[0].mxu0 %v630
        %v1439 = vpop.f32.mrb[0].mxu0
        %v1440 = vadd.f32 0.0, %v1439
        %v1441 = vpop.f32.mrb[0].mxu0
        %v1442 = vadd.f32 0.0, %v1441
        %v1443 = vpop.f32.mrb[0].mxu0
        %v1444 = vadd.f32 0.0, %v1443
        %v1445 = vpop.f32.mrb[0].mxu0
        %v1446 = vadd.f32 0.0, %v1445
        %1447 = vmatprep.mubr.bf16.mxu0 0
        %1448 = vmatmul.mubr.bf16.gmra.mrb[0].mxu0 %v631
        %v1449 = vpop.f32.mrb[0].mxu0
        %v1450 = vadd.f32 0.0, %v1449
        %v1451 = vpop.f32.mrb[0].mxu0
        %v1452 = vadd.f32 0.0, %v1451
        %v1453 = vpop.f32.mrb[0].mxu0
        %v1454 = vadd.f32 0.0, %v1453
        %v1455 = vpop.f32.mrb[0].mxu0
        %v1456 = vadd.f32 0.0, %v1455
        %1457 = vmatprep.mubr.bf16.mxu0 0
        %1458 = vmatmul.mubr.bf16.gmra.mrb[0].mxu0 %v632
        %v1459 = vpop.f32.mrb[0].mxu0
        %v1460 = vadd.f32 0.0, %v1459
        %v1461 = vpop.f32.mrb[0].mxu0
        %v1462 = vadd.f32 0.0, %v1461
        %v1463 = vpop.f32.mrb[0].mxu0
        %v1464 = vadd.f32 0.0, %v1463
        %v1465 = vpop.f32.mrb[0].mxu0
        %v1466 = vadd.f32 0.0, %v1465
        %1467 = vmatprep.mubr.bf16.mxu0 0
        %1468 = vmatmul.mubr.bf16.gmra.mrb[0].mxu0 %v633
        %v1469 = vpop.f32.mrb[0].mxu0
        %v1470 = vadd.f32 0.0, %v1469
        %v1471 = vpop.f32.mrb[0].mxu0
        %v1472 = vadd.f32 0.0, %v1471
        %v1473 = vpop.f32.mrb[0].mxu0
        %v1474 = vadd.f32 0.0, %v1473
        %v1475 = vpop.f32.mrb[0].mxu0
        %v1476 = vadd.f32 0.0, %v1475
        %1477 = vmatprep.mubr.bf16.mxu0 0
        %1478 = vmatmul.mubr.bf16.gmra.mrb[0].mxu0 %v634
        %v1479 = vpop.f32.mrb[0].mxu0
        %v1480 = vadd.f32 0.0, %v1479
        %v1481 = vpop.f32.mrb[0].mxu0
        %v1482 = vadd.f32 0.0, %v1481
        %v1483 = vpop.f32.mrb[0].mxu0
        %v1484 = vadd.f32 0.0, %v1483
        %v1485 = vpop.f32.mrb[0].mxu0
        %v1486 = vadd.f32 0.0, %v1485
        %1487 = vmatprep.mubr.bf16.mxu0 0
        %1488 = vmatmul.mubr.bf16.gmra.mrb[0].mxu0 %v635
        %v1489 = vpop.f32.mrb[0].mxu0
        %v1490 = vadd.f32 0.0, %v1489
        %v1491 = vpop.f32.mrb[0].mxu0
        %v1492 = vadd.f32 0.0, %v1491
        %v1493 = vpop.f32.mrb[0].mxu0
        %v1494 = vadd.f32 0.0, %v1493
        %v1495 = vpop.f32.mrb[0].mxu0
        %v1496 = vadd.f32 0.0, %v1495
        %1497 = vmatprep.mubr.bf16.mxu0 0
        %1498 = vmatmul.mubr.bf16.gmra.mrb[0].mxu0 %v636
        %v1499 = vpop.f32.mrb[0].mxu0
        %v1500 = vadd.f32 0.0, %v1499
        %v1501 = vpop.f32.mrb[0].mxu0
        %v1502 = vadd.f32 0.0, %v1501
        %v1503 = vpop.f32.mrb[0].mxu0
        %v1504 = vadd.f32 0.0, %v1503
        %v1505 = vpop.f32.mrb[0].mxu0
        %v1506 = vadd.f32 0.0, %v1505
        %1507 = vmatprep.mubr.bf16.mxu0 0
        %1508 = vmatmul.mubr.bf16.gmra.mrb[0].mxu0 %v637
        %v1509 = vpop.f32.mrb[0].mxu0
        %v1510 = vadd.f32 0.0, %v1509
        %v1511 = vpop.f32.mrb[0].mxu0
        %v1512 = vadd.f32 0.0, %v1511
        %v1513 = vpop.f32.mrb[0].mxu0
        %v1514 = vadd.f32 0.0, %v1513
        %v1515 = vpop.f32.mrb[0].mxu0
        %v1516 = vadd.f32 0.0, %v1515
        %1517 = vmatprep.mubr.bf16.mxu0 0
        %1518 = vmatmul.mubr.bf16.gmra.mrb[0].mxu0 %v638
        %v1519 = vpop.f32.mrb[0].mxu0
        %v1520 = vadd.f32 0.0, %v1519
        %v1521 = vpop.f32.mrb[0].mxu0
        %v1522 = vadd.f32 0.0, %v1521
        %v1523 = vpop.f32.mrb[0].mxu0
        %v1524 = vadd.f32 0.0, %v1523
        %v1525 = vpop.f32.mrb[0].mxu0
        %v1526 = vadd.f32 0.0, %v1525
        %1527 = vmatprep.mubr.bf16.mxu0 0
        %1528 = vmatmul.mubr.bf16.gmra.mrb[0].mxu0 %v639
        %v1529 = vpop.f32.mrb[0].mxu0
        %v1530 = vadd.f32 0.0, %v1529
        %v1531 = vpop.f32.mrb[0].mxu0
        %v1532 = vadd.f32 0.0, %v1531
        %v1533 = vpop.f32.mrb[0].mxu0
        %v1534 = vadd.f32 0.0, %v1533
        %v1535 = vpop.f32.mrb[0].mxu0
        %v1536 = vadd.f32 0.0, %v1535
        %1537 = vdwg.mxu0
        %v1538 = vpack.c.bf16 %v871, %v867
        %v1539 = vpack.c.bf16 %v873, %v869
        %v1540 = vpack.c.bf16 %v1224, %v1220
        %v1541 = vpack.c.bf16 %v1226, %v1222
        %v1542 = vpack.c.bf16 %v881, %v877
        %v1543 = vpack.c.bf16 %v883, %v879
        %v1544 = vpack.c.bf16 %v1234, %v1230
        %v1545 = vpack.c.bf16 %v1236, %v1232
        %v1546 = vpack.c.bf16 %v891, %v887
        %v1547 = vpack.c.bf16 %v893, %v889
        %v1548 = vpack.c.bf16 %v1244, %v1240
        %v1549 = vpack.c.bf16 %v1246, %v1242
        %v1550 = vpack.c.bf16 %v901, %v897
        %v1551 = vpack.c.bf16 %v903, %v899
        %v1552 = vpack.c.bf16 %v1254, %v1250
        %v1553 = vpack.c.bf16 %v1256, %v1252
        %v1554 = vpack.c.bf16 %v911, %v907
        %v1555 = vpack.c.bf16 %v913, %v909
        %v1556 = vpack.c.bf16 %v1264, %v1260
        %v1557 = vpack.c.bf16 %v1266, %v1262
        %v1558 = vpack.c.bf16 %v921, %v917
        %v1559 = vpack.c.bf16 %v923, %v919
        %v1560 = vpack.c.bf16 %v1274, %v1270
        %v1561 = vpack.c.bf16 %v1276, %v1272
        %v1562 = vpack.c.bf16 %v931, %v927
        %v1563 = vpack.c.bf16 %v933, %v929
        %v1564 = vpack.c.bf16 %v1284, %v1280
        %v1565 = vpack.c.bf16 %v1286, %v1282
        %v1566 = vpack.c.bf16 %v941, %v937
        %v1567 = vpack.c.bf16 %v943, %v939
        %v1568 = vpack.c.bf16 %v1294, %v1290
        %v1569 = vpack.c.bf16 %v1296, %v1292
        %v1570 = vpack.c.bf16 %v951, %v947
        %v1571 = vpack.c.bf16 %v953, %v949
        %v1572 = vpack.c.bf16 %v1304, %v1300
        %v1573 = vpack.c.bf16 %v1306, %v1302
        %v1574 = vpack.c.bf16 %v961, %v957
        %v1575 = vpack.c.bf16 %v963, %v959
        %v1576 = vpack.c.bf16 %v1314, %v1310
        %v1577 = vpack.c.bf16 %v1316, %v1312
        %v1578 = vpack.c.bf16 %v971, %v967
        %v1579 = vpack.c.bf16 %v973, %v969
        %v1580 = vpack.c.bf16 %v1324, %v1320
        %v1581 = vpack.c.bf16 %v1326, %v1322
        %v1582 = vpack.c.bf16 %v981, %v977
        %v1583 = vpack.c.bf16 %v983, %v979
        %v1584 = vpack.c.bf16 %v1334, %v1330
        %v1585 = vpack.c.bf16 %v1336, %v1332
        %v1586 = vpack.c.bf16 %v991, %v987
        %v1587 = vpack.c.bf16 %v993, %v989
        %v1588 = vpack.c.bf16 %v1344, %v1340
        %v1589 = vpack.c.bf16 %v1346, %v1342
        %v1590 = vpack.c.bf16 %v1001, %v997
        %v1591 = vpack.c.bf16 %v1003, %v999
        %v1592 = vpack.c.bf16 %v1354, %v1350
        %v1593 = vpack.c.bf16 %v1356, %v1352
        %v1594 = vpack.c.bf16 %v1011, %v1007
        %v1595 = vpack.c.bf16 %v1013, %v1009
        %v1596 = vpack.c.bf16 %v1364, %v1360
        %v1597 = vpack.c.bf16 %v1366, %v1362
        %v1598 = vpack.c.bf16 %v1021, %v1017
        %v1599 = vpack.c.bf16 %v1023, %v1019
        %v1600 = vpack.c.bf16 %v1374, %v1370
        %v1601 = vpack.c.bf16 %v1376, %v1372
        %v1602 = vpack.c.bf16 %v1031, %v1027
        %v1603 = vpack.c.bf16 %v1033, %v1029
        %v1604 = vpack.c.bf16 %v1384, %v1380
        %v1605 = vpack.c.bf16 %v1386, %v1382
        %v1606 = vpack.c.bf16 %v1041, %v1037
        %v1607 = vpack.c.bf16 %v1043, %v1039
        %v1608 = vpack.c.bf16 %v1394, %v1390
        %v1609 = vpack.c.bf16 %v1396, %v1392
        %v1610 = vpack.c.bf16 %v1051, %v1047
        %v1611 = vpack.c.bf16 %v1053, %v1049
        %v1612 = vpack.c.bf16 %v1404, %v1400
        %v1613 = vpack.c.bf16 %v1406, %v1402
        %v1614 = vpack.c.bf16 %v1061, %v1057
        %v1615 = vpack.c.bf16 %v1063, %v1059
        %v1616 = vpack.c.bf16 %v1414, %v1410
        %v1617 = vpack.c.bf16 %v1416, %v1412
        %v1618 = vpack.c.bf16 %v1071, %v1067
        %v1619 = vpack.c.bf16 %v1073, %v1069
        %v1620 = vpack.c.bf16 %v1424, %v1420
        %v1621 = vpack.c.bf16 %v1426, %v1422
        %v1622 = vpack.c.bf16 %v1081, %v1077
        %v1623 = vpack.c.bf16 %v1083, %v1079
        %v1624 = vpack.c.bf16 %v1434, %v1430
        %v1625 = vpack.c.bf16 %v1436, %v1432
        %v1626 = vpack.c.bf16 %v1091, %v1087
        %v1627 = vpack.c.bf16 %v1093, %v1089
        %v1628 = vpack.c.bf16 %v1444, %v1440
        %v1629 = vpack.c.bf16 %v1446, %v1442
        %v1630 = vpack.c.bf16 %v1101, %v1097
        %v1631 = vpack.c.bf16 %v1103, %v1099
        %v1632 = vpack.c.bf16 %v1454, %v1450
        %v1633 = vpack.c.bf16 %v1456, %v1452
        %v1634 = vpack.c.bf16 %v1111, %v1107
        %v1635 = vpack.c.bf16 %v1113, %v1109
        %v1636 = vpack.c.bf16 %v1464, %v1460
        %v1637 = vpack.c.bf16 %v1466, %v1462
        %v1638 = vpack.c.bf16 %v1121, %v1117
        %v1639 = vpack.c.bf16 %v1123, %v1119
        %v1640 = vpack.c.bf16 %v1474, %v1470
        %v1641 = vpack.c.bf16 %v1476, %v1472
        %v1642 = vpack.c.bf16 %v1131, %v1127
        %v1643 = vpack.c.bf16 %v1133, %v1129
        %v1644 = vpack.c.bf16 %v1484, %v1480
        %v1645 = vpack.c.bf16 %v1486, %v1482
        %v1646 = vpack.c.bf16 %v1141, %v1137
        %v1647 = vpack.c.bf16 %v1143, %v1139
        %v1648 = vpack.c.bf16 %v1494, %v1490
        %v1649 = vpack.c.bf16 %v1496, %v1492
        %v1650 = vpack.c.bf16 %v1151, %v1147
        %v1651 = vpack.c.bf16 %v1153, %v1149
        %v1652 = vpack.c.bf16 %v1504, %v1500
        %v1653 = vpack.c.bf16 %v1506, %v1502
        %v1654 = vpack.c.bf16 %v1161, %v1157
        %v1655 = vpack.c.bf16 %v1163, %v1159
        %v1656 = vpack.c.bf16 %v1514, %v1510
        %v1657 = vpack.c.bf16 %v1516, %v1512
        %v1658 = vpack.c.bf16 %v1171, %v1167
        %v1659 = vpack.c.bf16 %v1173, %v1169
        %v1660 = vpack.c.bf16 %v1524, %v1520
        %v1661 = vpack.c.bf16 %v1526, %v1522
        %v1662 = vpack.c.bf16 %v1181, %v1177
        %v1663 = vpack.c.bf16 %v1183, %v1179
        %v1664 = vpack.c.bf16 %v1534, %v1530
        %v1665 = vpack.c.bf16 %v1536, %v1532
        %v1666 = vxor.u32 %v1538, 2147516416
        %v1667 = vxor.u32 %v1539, 2147516416
        %v1668 = vxor.u32 %v1540, 2147516416
        %v1669 = vxor.u32 %v1541, 2147516416
        %v1670 = vxor.u32 %v1542, 2147516416
        %v1671 = vxor.u32 %v1543, 2147516416
        %v1672 = vxor.u32 %v1544, 2147516416
        %v1673 = vxor.u32 %v1545, 2147516416
        %v1674 = vxor.u32 %v1546, 2147516416
        %v1675 = vxor.u32 %v1547, 2147516416
        %v1676 = vxor.u32 %v1548, 2147516416
        %v1677 = vxor.u32 %v1549, 2147516416
        %v1678 = vxor.u32 %v1550, 2147516416
        %v1679 = vxor.u32 %v1551, 2147516416
        %v1680 = vxor.u32 %v1552, 2147516416
        %v1681 = vxor.u32 %v1553, 2147516416
        %v1682 = vxor.u32 %v1554, 2147516416
        %v1683 = vxor.u32 %v1555, 2147516416
        %v1684 = vxor.u32 %v1556, 2147516416
        %v1685 = vxor.u32 %v1557, 2147516416
        %v1686 = vxor.u32 %v1558, 2147516416
        %v1687 = vxor.u32 %v1559, 2147516416
        %v1688 = vxor.u32 %v1560, 2147516416
        %v1689 = vxor.u32 %v1561, 2147516416
        %v1690 = vxor.u32 %v1562, 2147516416
        %v1691 = vxor.u32 %v1563, 2147516416
        %v1692 = vxor.u32 %v1564, 2147516416
        %v1693 = vxor.u32 %v1565, 2147516416
        %v1694 = vxor.u32 %v1566, 2147516416
        %v1695 = vxor.u32 %v1567, 2147516416
        %v1696 = vxor.u32 %v1568, 2147516416
        %v1697 = vxor.u32 %v1569, 2147516416
        %v1698 = vxor.u32 %v1570, 2147516416
        %v1699 = vxor.u32 %v1571, 2147516416
        %v1700 = vxor.u32 %v1572, 2147516416
        %v1701 = vxor.u32 %v1573, 2147516416
        %v1702 = vxor.u32 %v1574, 2147516416
        %v1703 = vxor.u32 %v1575, 2147516416
        %v1704 = vxor.u32 %v1576, 2147516416
        %v1705 = vxor.u32 %v1577, 2147516416
        %v1706 = vxor.u32 %v1578, 2147516416
        %v1707 = vxor.u32 %v1579, 2147516416
        %v1708 = vxor.u32 %v1580, 2147516416
        %v1709 = vxor.u32 %v1581, 2147516416
        %v1710 = vxor.u32 %v1582, 2147516416
        %v1711 = vxor.u32 %v1583, 2147516416
        %v1712 = vxor.u32 %v1584, 2147516416
        %v1713 = vxor.u32 %v1585, 2147516416
        %v1714 = vxor.u32 %v1586, 2147516416
        %v1715 = vxor.u32 %v1587, 2147516416
        %v1716 = vxor.u32 %v1588, 2147516416
        %v1717 = vxor.u32 %v1589, 2147516416
        %v1718 = vxor.u32 %v1590, 2147516416
        %v1719 = vxor.u32 %v1591, 2147516416
        %v1720 = vxor.u32 %v1592, 2147516416
        %v1721 = vxor.u32 %v1593, 2147516416
        %v1722 = vxor.u32 %v1594, 2147516416
        %v1723 = vxor.u32 %v1595, 2147516416
        %v1724 = vxor.u32 %v1596, 2147516416
        %v1725 = vxor.u32 %v1597, 2147516416
        %v1726 = vxor.u32 %v1598, 2147516416
        %v1727 = vxor.u32 %v1599, 2147516416
        %v1728 = vxor.u32 %v1600, 2147516416
        %v1729 = vxor.u32 %v1601, 2147516416
        %v1730 = vxor.u32 %v1602, 2147516416
        %v1731 = vxor.u32 %v1603, 2147516416
        %v1732 = vxor.u32 %v1604, 2147516416
        %v1733 = vxor.u32 %v1605, 2147516416
        %v1734 = vxor.u32 %v1606, 2147516416
        %v1735 = vxor.u32 %v1607, 2147516416
        %v1736 = vxor.u32 %v1608, 2147516416
        %v1737 = vxor.u32 %v1609, 2147516416
        %v1738 = vxor.u32 %v1610, 2147516416
        %v1739 = vxor.u32 %v1611, 2147516416
        %v1740 = vxor.u32 %v1612, 2147516416
        %v1741 = vxor.u32 %v1613, 2147516416
        %v1742 = vxor.u32 %v1614, 2147516416
        %v1743 = vxor.u32 %v1615, 2147516416
        %v1744 = vxor.u32 %v1616, 2147516416
        %v1745 = vxor.u32 %v1617, 2147516416
        %v1746 = vxor.u32 %v1618, 2147516416
        %v1747 = vxor.u32 %v1619, 2147516416
        %v1748 = vxor.u32 %v1620, 2147516416
        %v1749 = vxor.u32 %v1621, 2147516416
        %v1750 = vxor.u32 %v1622, 2147516416
        %v1751 = vxor.u32 %v1623, 2147516416
        %v1752 = vxor.u32 %v1624, 2147516416
        %v1753 = vxor.u32 %v1625, 2147516416
        %v1754 = vxor.u32 %v1626, 2147516416
        %v1755 = vxor.u32 %v1627, 2147516416
        %v1756 = vxor.u32 %v1628, 2147516416
        %v1757 = vxor.u32 %v1629, 2147516416
        %v1758 = vxor.u32 %v1630, 2147516416
        %v1759 = vxor.u32 %v1631, 2147516416
        %v1760 = vxor.u32 %v1632, 2147516416
        %v1761 = vxor.u32 %v1633, 2147516416
        %v1762 = vxor.u32 %v1634, 2147516416
        %v1763 = vxor.u32 %v1635, 2147516416
        %v1764 = vxor.u32 %v1636, 2147516416
        %v1765 = vxor.u32 %v1637, 2147516416
        %v1766 = vxor.u32 %v1638, 2147516416
        %v1767 = vxor.u32 %v1639, 2147516416
        %v1768 = vxor.u32 %v1640, 2147516416
        %v1769 = vxor.u32 %v1641, 2147516416
        %v1770 = vxor.u32 %v1642, 2147516416
        %v1771 = vxor.u32 %v1643, 2147516416
        %v1772 = vxor.u32 %v1644, 2147516416
        %v1773 = vxor.u32 %v1645, 2147516416
        %v1774 = vxor.u32 %v1646, 2147516416
        %v1775 = vxor.u32 %v1647, 2147516416
        %v1776 = vxor.u32 %v1648, 2147516416
        %v1777 = vxor.u32 %v1649, 2147516416
        %v1778 = vxor.u32 %v1650, 2147516416
        %v1779 = vxor.u32 %v1651, 2147516416
        %v1780 = vxor.u32 %v1652, 2147516416
        %v1781 = vxor.u32 %v1653, 2147516416
        %v1782 = vxor.u32 %v1654, 2147516416
        %v1783 = vxor.u32 %v1655, 2147516416
        %v1784 = vxor.u32 %v1656, 2147516416
        %v1785 = vxor.u32 %v1657, 2147516416
        %v1786 = vxor.u32 %v1658, 2147516416
        %v1787 = vxor.u32 %v1659, 2147516416
        %v1788 = vxor.u32 %v1660, 2147516416
        %v1789 = vxor.u32 %v1661, 2147516416
        %v1790 = vxor.u32 %v1662, 2147516416
        %v1791 = vxor.u32 %v1663, 2147516416
        %v1792 = vxor.u32 %v1664, 2147516416
        %v1793 = vxor.u32 %v1665, 2147516416
        %v1795 = vmul.bf16 %v1666, 1069105081
        %v1796 = vpow.bf16.pop %v1795
        %v1798 = vmul.bf16 %v1667, 1069105081
        %v1799 = vpow.bf16.pop %v1798
        %v1801 = vmul.bf16 %v1668, 1069105081
        %v1802 = vpow.bf16.pop %v1801
        %v1804 = vmul.bf16 %v1669, 1069105081
        %v1805 = vpow.bf16.pop %v1804
        %v1807 = vmul.bf16 %v1670, 1069105081
        %v1808 = vpow.bf16.pop %v1807
        %v1810 = vmul.bf16 %v1671, 1069105081
        %v1811 = vpow.bf16.pop %v1810
        %v1813 = vmul.bf16 %v1672, 1069105081
        %v1814 = vpow.bf16.pop %v1813
        %v1816 = vmul.bf16 %v1673, 1069105081
        %v1817 = vpow.bf16.pop %v1816
        %v1819 = vmul.bf16 %v1674, 1069105081
        %v1820 = vpow.bf16.pop %v1819
        %v1822 = vmul.bf16 %v1675, 1069105081
        %v1823 = vpow.bf16.pop %v1822
        %v1825 = vmul.bf16 %v1676, 1069105081
        %v1826 = vpow.bf16.pop %v1825
        %v1828 = vmul.bf16 %v1677, 1069105081
        %v1829 = vpow.bf16.pop %v1828
        %v1831 = vmul.bf16 %v1678, 1069105081
        %v1832 = vpow.bf16.pop %v1831
        %v1834 = vmul.bf16 %v1679, 1069105081
        %v1835 = vpow.bf16.pop %v1834
        %v1837 = vmul.bf16 %v1680, 1069105081
        %v1838 = vpow.bf16.pop %v1837
        %v1840 = vmul.bf16 %v1681, 1069105081
        %v1841 = vpow.bf16.pop %v1840
        %v1843 = vmul.bf16 %v1682, 1069105081
        %v1844 = vpow.bf16.pop %v1843
        %v1846 = vmul.bf16 %v1683, 1069105081
        %v1847 = vpow.bf16.pop %v1846
        %v1849 = vmul.bf16 %v1684, 1069105081
        %v1850 = vpow.bf16.pop %v1849
        %v1852 = vmul.bf16 %v1685, 1069105081
        %v1853 = vpow.bf16.pop %v1852
        %v1855 = vmul.bf16 %v1686, 1069105081
        %v1856 = vpow.bf16.pop %v1855
        %v1858 = vmul.bf16 %v1687, 1069105081
        %v1859 = vpow.bf16.pop %v1858
        %v1861 = vmul.bf16 %v1688, 1069105081
        %v1862 = vpow.bf16.pop %v1861
        %v1864 = vmul.bf16 %v1689, 1069105081
        %v1865 = vpow.bf16.pop %v1864
        %v1867 = vmul.bf16 %v1690, 1069105081
        %v1868 = vpow.bf16.pop %v1867
        %v1870 = vmul.bf16 %v1691, 1069105081
        %v1871 = vpow.bf16.pop %v1870
        %v1873 = vmul.bf16 %v1692, 1069105081
        %v1874 = vpow.bf16.pop %v1873
        %v1876 = vmul.bf16 %v1693, 1069105081
        %v1877 = vpow.bf16.pop %v1876
        %v1879 = vmul.bf16 %v1694, 1069105081
        %v1880 = vpow.bf16.pop %v1879
        %v1882 = vmul.bf16 %v1695, 1069105081
        %v1883 = vpow.bf16.pop %v1882
        %v1885 = vmul.bf16 %v1696, 1069105081
        %v1886 = vpow.bf16.pop %v1885
        %v1888 = vmul.bf16 %v1697, 1069105081
        %v1889 = vpow.bf16.pop %v1888
        %v1891 = vmul.bf16 %v1698, 1069105081
        %v1892 = vpow.bf16.pop %v1891
        %v1894 = vmul.bf16 %v1699, 1069105081
        %v1895 = vpow.bf16.pop %v1894
        %v1897 = vmul.bf16 %v1700, 1069105081
        %v1898 = vpow.bf16.pop %v1897
        %v1900 = vmul.bf16 %v1701, 1069105081
        %v1901 = vpow.bf16.pop %v1900
        %v1903 = vmul.bf16 %v1702, 1069105081
        %v1904 = vpow.bf16.pop %v1903
        %v1906 = vmul.bf16 %v1703, 1069105081
        %v1907 = vpow.bf16.pop %v1906
        %v1909 = vmul.bf16 %v1704, 1069105081
        %v1910 = vpow.bf16.pop %v1909
        %v1912 = vmul.bf16 %v1705, 1069105081
        %v1913 = vpow.bf16.pop %v1912
        %v1915 = vmul.bf16 %v1706, 1069105081
        %v1916 = vpow.bf16.pop %v1915
        %v1918 = vmul.bf16 %v1707, 1069105081
        %v1919 = vpow.bf16.pop %v1918
        %v1921 = vmul.bf16 %v1708, 1069105081
        %v1922 = vpow.bf16.pop %v1921
        %v1924 = vmul.bf16 %v1709, 1069105081
        %v1925 = vpow.bf16.pop %v1924
        %v1927 = vmul.bf16 %v1710, 1069105081
        %v1928 = vpow.bf16.pop %v1927
        %v1930 = vmul.bf16 %v1711, 1069105081
        %v1931 = vpow.bf16.pop %v1930
        %v1933 = vmul.bf16 %v1712, 1069105081
        %v1934 = vpow.bf16.pop %v1933
        %v1936 = vmul.bf16 %v1713, 1069105081
        %v1937 = vpow.bf16.pop %v1936
        %v1939 = vmul.bf16 %v1714, 1069105081
        %v1940 = vpow.bf16.pop %v1939
        %v1942 = vmul.bf16 %v1715, 1069105081
        %v1943 = vpow.bf16.pop %v1942
        %v1945 = vmul.bf16 %v1716, 1069105081
        %v1946 = vpow.bf16.pop %v1945
        %v1948 = vmul.bf16 %v1717, 1069105081
        %v1949 = vpow.bf16.pop %v1948
        %v1951 = vmul.bf16 %v1718, 1069105081
        %v1952 = vpow.bf16.pop %v1951
        %v1954 = vmul.bf16 %v1719, 1069105081
        %v1955 = vpow.bf16.pop %v1954
        %v1957 = vmul.bf16 %v1720, 1069105081
        %v1958 = vpow.bf16.pop %v1957
        %v1960 = vmul.bf16 %v1721, 1069105081
        %v1961 = vpow.bf16.pop %v1960
        %v1963 = vmul.bf16 %v1722, 1069105081
        %v1964 = vpow.bf16.pop %v1963
        %v1966 = vmul.bf16 %v1723, 1069105081
        %v1967 = vpow.bf16.pop %v1966
        %v1969 = vmul.bf16 %v1724, 1069105081
        %v1970 = vpow.bf16.pop %v1969
        %v1972 = vmul.bf16 %v1725, 1069105081
        %v1973 = vpow.bf16.pop %v1972
        %v1975 = vmul.bf16 %v1726, 1069105081
        %v1976 = vpow.bf16.pop %v1975
        %v1978 = vmul.bf16 %v1727, 1069105081
        %v1979 = vpow.bf16.pop %v1978
        %v1981 = vmul.bf16 %v1728, 1069105081
        %v1982 = vpow.bf16.pop %v1981
        %v1984 = vmul.bf16 %v1729, 1069105081
        %v1985 = vpow.bf16.pop %v1984
        %v1987 = vmul.bf16 %v1730, 1069105081
        %v1988 = vpow.bf16.pop %v1987
        %v1990 = vmul.bf16 %v1731, 1069105081
        %v1991 = vpow.bf16.pop %v1990
        %v1993 = vmul.bf16 %v1732, 1069105081
        %v1994 = vpow.bf16.pop %v1993
        %v1996 = vmul.bf16 %v1733, 1069105081
        %v1997 = vpow.bf16.pop %v1996
        %v1999 = vmul.bf16 %v1734, 1069105081
        %v2000 = vpow.bf16.pop %v1999
        %v2002 = vmul.bf16 %v1735, 1069105081
        %v2003 = vpow.bf16.pop %v2002
        %v2005 = vmul.bf16 %v1736, 1069105081
        %v2006 = vpow.bf16.pop %v2005
        %v2008 = vmul.bf16 %v1737, 1069105081
        %v2009 = vpow.bf16.pop %v2008
        %v2011 = vmul.bf16 %v1738, 1069105081
        %v2012 = vpow.bf16.pop %v2011
        %v2014 = vmul.bf16 %v1739, 1069105081
        %v2015 = vpow.bf16.pop %v2014
        %v2017 = vmul.bf16 %v1740, 1069105081
        %v2018 = vpow.bf16.pop %v2017
        %v2020 = vmul.bf16 %v1741, 1069105081
        %v2021 = vpow.bf16.pop %v2020
        %v2023 = vmul.bf16 %v1742, 1069105081
        %v2024 = vpow.bf16.pop %v2023
        %v2026 = vmul.bf16 %v1743, 1069105081
        %v2027 = vpow.bf16.pop %v2026
        %v2029 = vmul.bf16 %v1744, 1069105081
        %v2030 = vpow.bf16.pop %v2029
        %v2032 = vmul.bf16 %v1745, 1069105081
        %v2033 = vpow.bf16.pop %v2032
        %v2035 = vmul.bf16 %v1746, 1069105081
        %v2036 = vpow.bf16.pop %v2035
        %v2038 = vmul.bf16 %v1747, 1069105081
        %v2039 = vpow.bf16.pop %v2038
        %v2041 = vmul.bf16 %v1748, 1069105081
        %v2042 = vpow.bf16.pop %v2041
        %v2044 = vmul.bf16 %v1749, 1069105081
        %v2045 = vpow.bf16.pop %v2044
        %v2047 = vmul.bf16 %v1750, 1069105081
        %v2048 = vpow.bf16.pop %v2047
        %v2050 = vmul.bf16 %v1751, 1069105081
        %v2051 = vpow.bf16.pop %v2050
        %v2053 = vmul.bf16 %v1752, 1069105081
        %v2054 = vpow.bf16.pop %v2053
        %v2056 = vmul.bf16 %v1753, 1069105081
        %v2057 = vpow.bf16.pop %v2056
        %v2059 = vmul.bf16 %v1754, 1069105081
        %v2060 = vpow.bf16.pop %v2059
        %v2062 = vmul.bf16 %v1755, 1069105081
        %v2063 = vpow.bf16.pop %v2062
        %v2065 = vmul.bf16 %v1756, 1069105081
        %v2066 = vpow.bf16.pop %v2065
        %v2068 = vmul.bf16 %v1757, 1069105081
        %v2069 = vpow.bf16.pop %v2068
        %v2071 = vmul.bf16 %v1758, 1069105081
        %v2072 = vpow.bf16.pop %v2071
        %v2074 = vmul.bf16 %v1759, 1069105081
        %v2075 = vpow.bf16.pop %v2074
        %v2077 = vmul.bf16 %v1760, 1069105081
        %v2078 = vpow.bf16.pop %v2077
        %v2080 = vmul.bf16 %v1761, 1069105081
        %v2081 = vpow.bf16.pop %v2080
        %v2083 = vmul.bf16 %v1762, 1069105081
        %v2084 = vpow.bf16.pop %v2083
        %v2086 = vmul.bf16 %v1763, 1069105081
        %v2087 = vpow.bf16.pop %v2086
        %v2089 = vmul.bf16 %v1764, 1069105081
        %v2090 = vpow.bf16.pop %v2089
        %v2092 = vmul.bf16 %v1765, 1069105081
        %v2093 = vpow.bf16.pop %v2092
        %v2095 = vmul.bf16 %v1766, 1069105081
        %v2096 = vpow.bf16.pop %v2095
        %v2098 = vmul.bf16 %v1767, 1069105081
        %v2099 = vpow.bf16.pop %v2098
        %v2101 = vmul.bf16 %v1768, 1069105081
        %v2102 = vpow.bf16.pop %v2101
        %v2104 = vmul.bf16 %v1769, 1069105081
        %v2105 = vpow.bf16.pop %v2104
        %v2107 = vmul.bf16 %v1770, 1069105081
        %v2108 = vpow.bf16.pop %v2107
        %v2110 = vmul.bf16 %v1771, 1069105081
        %v2111 = vpow.bf16.pop %v2110
        %v2113 = vmul.bf16 %v1772, 1069105081
        %v2114 = vpow.bf16.pop %v2113
        %v2116 = vmul.bf16 %v1773, 1069105081
        %v2117 = vpow.bf16.pop %v2116
        %v2119 = vmul.bf16 %v1774, 1069105081
        %v2120 = vpow.bf16.pop %v2119
        %v2122 = vmul.bf16 %v1775, 1069105081
        %v2123 = vpow.bf16.pop %v2122
        %v2125 = vmul.bf16 %v1776, 1069105081
        %v2126 = vpow.bf16.pop %v2125
        %v2128 = vmul.bf16 %v1777, 1069105081
        %v2129 = vpow.bf16.pop %v2128
        %v2131 = vmul.bf16 %v1778, 1069105081
        %v2132 = vpow.bf16.pop %v2131
        %v2134 = vmul.bf16 %v1779, 1069105081
        %v2135 = vpow.bf16.pop %v2134
        %v2137 = vmul.bf16 %v1780, 1069105081
        %v2138 = vpow.bf16.pop %v2137
        %v2140 = vmul.bf16 %v1781, 1069105081
        %v2141 = vpow.bf16.pop %v2140
        %v2143 = vmul.bf16 %v1782, 1069105081
        %v2144 = vpow.bf16.pop %v2143
        %v2146 = vmul.bf16 %v1783, 1069105081
        %v2147 = vpow.bf16.pop %v2146
        %v2149 = vmul.bf16 %v1784, 1069105081
        %v2150 = vpow.bf16.pop %v2149
        %v2152 = vmul.bf16 %v1785, 1069105081
        %v2153 = vpow.bf16.pop %v2152
        %v2155 = vmul.bf16 %v1786, 1069105081
        %v2156 = vpow.bf16.pop %v2155
        %v2158 = vmul.bf16 %v1787, 1069105081
        %v2159 = vpow.bf16.pop %v2158
        %v2161 = vmul.bf16 %v1788, 1069105081
        %v2162 = vpow.bf16.pop %v2161
        %v2164 = vmul.bf16 %v1789, 1069105081
        %v2165 = vpow.bf16.pop %v2164
        %v2167 = vmul.bf16 %v1790, 1069105081
        %v2168 = vpow.bf16.pop %v2167
        %v2170 = vmul.bf16 %v1791, 1069105081
        %v2171 = vpow.bf16.pop %v2170
        %v2173 = vmul.bf16 %v1792, 1069105081
        %v2174 = vpow.bf16.pop %v2173
        %v2176 = vmul.bf16 %v1793, 1069105081
        %v2177 = vpow.bf16.pop %v2176
        %v2178 = vadd.bf16 %v1796, 1065369472
        %v2179 = vadd.bf16 %v1799, 1065369472
        %v2180 = vadd.bf16 %v1802, 1065369472
        %v2181 = vadd.bf16 %v1805, 1065369472
        %v2182 = vadd.bf16 %v1808, 1065369472
        %v2183 = vadd.bf16 %v1811, 1065369472
        %v2184 = vadd.bf16 %v1814, 1065369472
        %v2185 = vadd.bf16 %v1817, 1065369472
        %v2186 = vadd.bf16 %v1820, 1065369472
        %v2187 = vadd.bf16 %v1823, 1065369472
        %v2188 = vadd.bf16 %v1826, 1065369472
        %v2189 = vadd.bf16 %v1829, 1065369472
        %v2190 = vadd.bf16 %v1832, 1065369472
        %v2191 = vadd.bf16 %v1835, 1065369472
        %v2192 = vadd.bf16 %v1838, 1065369472
        %v2193 = vadd.bf16 %v1841, 1065369472
        %v2194 = vadd.bf16 %v1844, 1065369472
        %v2195 = vadd.bf16 %v1847, 1065369472
        %v2196 = vadd.bf16 %v1850, 1065369472
        %v2197 = vadd.bf16 %v1853, 1065369472
        %v2198 = vadd.bf16 %v1856, 1065369472
        %v2199 = vadd.bf16 %v1859, 1065369472
        %v2200 = vadd.bf16 %v1862, 1065369472
        %v2201 = vadd.bf16 %v1865, 1065369472
        %v2202 = vadd.bf16 %v1868, 1065369472
        %v2203 = vadd.bf16 %v1871, 1065369472
        %v2204 = vadd.bf16 %v1874, 1065369472
        %v2205 = vadd.bf16 %v1877, 1065369472
        %v2206 = vadd.bf16 %v1880, 1065369472
        %v2207 = vadd.bf16 %v1883, 1065369472
        %v2208 = vadd.bf16 %v1886, 1065369472
        %v2209 = vadd.bf16 %v1889, 1065369472
        %v2210 = vadd.bf16 %v1892, 1065369472
        %v2211 = vadd.bf16 %v1895, 1065369472
        %v2212 = vadd.bf16 %v1898, 1065369472
        %v2213 = vadd.bf16 %v1901, 1065369472
        %v2214 = vadd.bf16 %v1904, 1065369472
        %v2215 = vadd.bf16 %v1907, 1065369472
        %v2216 = vadd.bf16 %v1910, 1065369472
        %v2217 = vadd.bf16 %v1913, 1065369472
        %v2218 = vadd.bf16 %v1916, 1065369472
        %v2219 = vadd.bf16 %v1919, 1065369472
        %v2220 = vadd.bf16 %v1922, 1065369472
        %v2221 = vadd.bf16 %v1925, 1065369472
        %v2222 = vadd.bf16 %v1928, 1065369472
        %v2223 = vadd.bf16 %v1931, 1065369472
        %v2224 = vadd.bf16 %v1934, 1065369472
        %v2225 = vadd.bf16 %v1937, 1065369472
        %v2226 = vadd.bf16 %v1940, 1065369472
        %v2227 = vadd.bf16 %v1943, 1065369472
        %v2228 = vadd.bf16 %v1946, 1065369472
        %v2229 = vadd.bf16 %v1949, 1065369472
        %v2230 = vadd.bf16 %v1952, 1065369472
        %v2231 = vadd.bf16 %v1955, 1065369472
        %v2232 = vadd.bf16 %v1958, 1065369472
        %v2233 = vadd.bf16 %v1961, 1065369472
        %v2234 = vadd.bf16 %v1964, 1065369472
        %v2235 = vadd.bf16 %v1967, 1065369472
        %v2236 = vadd.bf16 %v1970, 1065369472
        %v2237 = vadd.bf16 %v1973, 1065369472
        %v2238 = vadd.bf16 %v1976, 1065369472
        %v2239 = vadd.bf16 %v1979, 1065369472
        %v2240 = vadd.bf16 %v1982, 1065369472
        %v2241 = vadd.bf16 %v1985, 1065369472
        %v2242 = vadd.bf16 %v1988, 1065369472
        %v2243 = vadd.bf16 %v1991, 1065369472
        %v2244 = vadd.bf16 %v1994, 1065369472
        %v2245 = vadd.bf16 %v1997, 1065369472
        %v2246 = vadd.bf16 %v2000, 1065369472
        %v2247 = vadd.bf16 %v2003, 1065369472
        %v2248 = vadd.bf16 %v2006, 1065369472
        %v2249 = vadd.bf16 %v2009, 1065369472
        %v2250 = vadd.bf16 %v2012, 1065369472
        %v2251 = vadd.bf16 %v2015, 1065369472
        %v2252 = vadd.bf16 %v2018, 1065369472
        %v2253 = vadd.bf16 %v2021, 1065369472
        %v2254 = vadd.bf16 %v2024, 1065369472
        %v2255 = vadd.bf16 %v2027, 1065369472
        %v2256 = vadd.bf16 %v2030, 1065369472
        %v2257 = vadd.bf16 %v2033, 1065369472
        %v2258 = vadd.bf16 %v2036, 1065369472
        %v2259 = vadd.bf16 %v2039, 1065369472
        %v2260 = vadd.bf16 %v2042, 1065369472
        %v2261 = vadd.bf16 %v2045, 1065369472
        %v2262 = vadd.bf16 %v2048, 1065369472
        %v2263 = vadd.bf16 %v2051, 1065369472
        %v2264 = vadd.bf16 %v2054, 1065369472
        %v2265 = vadd.bf16 %v2057, 1065369472
        %v2266 = vadd.bf16 %v2060, 1065369472
        %v2267 = vadd.bf16 %v2063, 1065369472
        %v2268 = vadd.bf16 %v2066, 1065369472
        %v2269 = vadd.bf16 %v2069, 1065369472
        %v2270 = vadd.bf16 %v2072, 1065369472
        %v2271 = vadd.bf16 %v2075, 1065369472
        %v2272 = vadd.bf16 %v2078, 1065369472
        %v2273 = vadd.bf16 %v2081, 1065369472
        %v2274 = vadd.bf16 %v2084, 1065369472
        %v2275 = vadd.bf16 %v2087, 1065369472
        %v2276 = vadd.bf16 %v2090, 1065369472
        %v2277 = vadd.bf16 %v2093, 1065369472
        %v2278 = vadd.bf16 %v2096, 1065369472
        %v2279 = vadd.bf16 %v2099, 1065369472
        %v2280 = vadd.bf16 %v2102, 1065369472
        %v2281 = vadd.bf16 %v2105, 1065369472
        %v2282 = vadd.bf16 %v2108, 1065369472
        %v2283 = vadd.bf16 %v2111, 1065369472
        %v2284 = vadd.bf16 %v2114, 1065369472
        %v2285 = vadd.bf16 %v2117, 1065369472
        %v2286 = vadd.bf16 %v2120, 1065369472
        %v2287 = vadd.bf16 %v2123, 1065369472
        %v2288 = vadd.bf16 %v2126, 1065369472
        %v2289 = vadd.bf16 %v2129, 1065369472
        %v2290 = vadd.bf16 %v2132, 1065369472
        %v2291 = vadd.bf16 %v2135, 1065369472
        %v2292 = vadd.bf16 %v2138, 1065369472
        %v2293 = vadd.bf16 %v2141, 1065369472
        %v2294 = vadd.bf16 %v2144, 1065369472
        %v2295 = vadd.bf16 %v2147, 1065369472
        %v2296 = vadd.bf16 %v2150, 1065369472
        %v2297 = vadd.bf16 %v2153, 1065369472
        %v2298 = vadd.bf16 %v2156, 1065369472
        %v2299 = vadd.bf16 %v2159, 1065369472
        %v2300 = vadd.bf16 %v2162, 1065369472
        %v2301 = vadd.bf16 %v2165, 1065369472
        %v2302 = vadd.bf16 %v2168, 1065369472
        %v2303 = vadd.bf16 %v2171, 1065369472
        %v2304 = vadd.bf16 %v2174, 1065369472
        %v2305 = vadd.bf16 %v2177, 1065369472
        %v2306 = vrcp.bf16.pop %v2178
        %v2307 = vmul.bf16 1065369472, %v2306
        %v2308 = vrcp.bf16.pop %v2179
        %v2309 = vmul.bf16 1065369472, %v2308
        %v2310 = vrcp.bf16.pop %v2180
        %v2311 = vmul.bf16 1065369472, %v2310
        %v2312 = vrcp.bf16.pop %v2181
        %v2313 = vmul.bf16 1065369472, %v2312
        %v2314 = vrcp.bf16.pop %v2182
        %v2315 = vmul.bf16 1065369472, %v2314
        %v2316 = vrcp.bf16.pop %v2183
        %v2317 = vmul.bf16 1065369472, %v2316
        %v2318 = vrcp.bf16.pop %v2184
        %v2319 = vmul.bf16 1065369472, %v2318
        %v2320 = vrcp.bf16.pop %v2185
        %v2321 = vmul.bf16 1065369472, %v2320
        %v2322 = vrcp.bf16.pop %v2186
        %v2323 = vmul.bf16 1065369472, %v2322
        %v2324 = vrcp.bf16.pop %v2187
        %v2325 = vmul.bf16 1065369472, %v2324
        %v2326 = vrcp.bf16.pop %v2188
        %v2327 = vmul.bf16 1065369472, %v2326
        %v2328 = vrcp.bf16.pop %v2189
        %v2329 = vmul.bf16 1065369472, %v2328
        %v2330 = vrcp.bf16.pop %v2190
        %v2331 = vmul.bf16 1065369472, %v2330
        %v2332 = vrcp.bf16.pop %v2191
        %v2333 = vmul.bf16 1065369472, %v2332
        %v2334 = vrcp.bf16.pop %v2192
        %v2335 = vmul.bf16 1065369472, %v2334
        %v2336 = vrcp.bf16.pop %v2193
        %v2337 = vmul.bf16 1065369472, %v2336
        %v2338 = vrcp.bf16.pop %v2194
        %v2339 = vmul.bf16 1065369472, %v2338
        %v2340 = vrcp.bf16.pop %v2195
        %v2341 = vmul.bf16 1065369472, %v2340
        %v2342 = vrcp.bf16.pop %v2196
        %v2343 = vmul.bf16 1065369472, %v2342
        %v2344 = vrcp.bf16.pop %v2197
        %v2345 = vmul.bf16 1065369472, %v2344
        %v2346 = vrcp.bf16.pop %v2198
        %v2347 = vmul.bf16 1065369472, %v2346
        %v2348 = vrcp.bf16.pop %v2199
        %v2349 = vmul.bf16 1065369472, %v2348
        %v2350 = vrcp.bf16.pop %v2200
        %v2351 = vmul.bf16 1065369472, %v2350
        %v2352 = vrcp.bf16.pop %v2201
        %v2353 = vmul.bf16 1065369472, %v2352
        %v2354 = vrcp.bf16.pop %v2202
        %v2355 = vmul.bf16 1065369472, %v2354
        %v2356 = vrcp.bf16.pop %v2203
        %v2357 = vmul.bf16 1065369472, %v2356
        %v2358 = vrcp.bf16.pop %v2204
        %v2359 = vmul.bf16 1065369472, %v2358
        %v2360 = vrcp.bf16.pop %v2205
        %v2361 = vmul.bf16 1065369472, %v2360
        %v2362 = vrcp.bf16.pop %v2206
        %v2363 = vmul.bf16 1065369472, %v2362
        %v2364 = vrcp.bf16.pop %v2207
        %v2365 = vmul.bf16 1065369472, %v2364
        %v2366 = vrcp.bf16.pop %v2208
        %v2367 = vmul.bf16 1065369472, %v2366
        %v2368 = vrcp.bf16.pop %v2209
        %v2369 = vmul.bf16 1065369472, %v2368
        %v2370 = vrcp.bf16.pop %v2210
        %v2371 = vmul.bf16 1065369472, %v2370
        %v2372 = vrcp.bf16.pop %v2211
        %v2373 = vmul.bf16 1065369472, %v2372
        %v2374 = vrcp.bf16.pop %v2212
        %v2375 = vmul.bf16 1065369472, %v2374
        %v2376 = vrcp.bf16.pop %v2213
        %v2377 = vmul.bf16 1065369472, %v2376
        %v2378 = vrcp.bf16.pop %v2214
        %v2379 = vmul.bf16 1065369472, %v2378
        %v2380 = vrcp.bf16.pop %v2215
        %v2381 = vmul.bf16 1065369472, %v2380
        %v2382 = vrcp.bf16.pop %v2216
        %v2383 = vmul.bf16 1065369472, %v2382
        %v2384 = vrcp.bf16.pop %v2217
        %v2385 = vmul.bf16 1065369472, %v2384
        %v2386 = vrcp.bf16.pop %v2218
        %v2387 = vmul.bf16 1065369472, %v2386
        %v2388 = vrcp.bf16.pop %v2219
        %v2389 = vmul.bf16 1065369472, %v2388
        %v2390 = vrcp.bf16.pop %v2220
        %v2391 = vmul.bf16 1065369472, %v2390
        %v2392 = vrcp.bf16.pop %v2221
        %v2393 = vmul.bf16 1065369472, %v2392
        %v2394 = vrcp.bf16.pop %v2222
        %v2395 = vmul.bf16 1065369472, %v2394
        %v2396 = vrcp.bf16.pop %v2223
        %v2397 = vmul.bf16 1065369472, %v2396
        %v2398 = vrcp.bf16.pop %v2224
        %v2399 = vmul.bf16 1065369472, %v2398
        %v2400 = vrcp.bf16.pop %v2225
        %v2401 = vmul.bf16 1065369472, %v2400
        %v2402 = vrcp.bf16.pop %v2226
        %v2403 = vmul.bf16 1065369472, %v2402
        %v2404 = vrcp.bf16.pop %v2227
        %v2405 = vmul.bf16 1065369472, %v2404
        %v2406 = vrcp.bf16.pop %v2228
        %v2407 = vmul.bf16 1065369472, %v2406
        %v2408 = vrcp.bf16.pop %v2229
        %v2409 = vmul.bf16 1065369472, %v2408
        %v2410 = vrcp.bf16.pop %v2230
        %v2411 = vmul.bf16 1065369472, %v2410
        %v2412 = vrcp.bf16.pop %v2231
        %v2413 = vmul.bf16 1065369472, %v2412
        %v2414 = vrcp.bf16.pop %v2232
        %v2415 = vmul.bf16 1065369472, %v2414
        %v2416 = vrcp.bf16.pop %v2233
        %v2417 = vmul.bf16 1065369472, %v2416
        %v2418 = vrcp.bf16.pop %v2234
        %v2419 = vmul.bf16 1065369472, %v2418
        %v2420 = vrcp.bf16.pop %v2235
        %v2421 = vmul.bf16 1065369472, %v2420
        %v2422 = vrcp.bf16.pop %v2236
        %v2423 = vmul.bf16 1065369472, %v2422
        %v2424 = vrcp.bf16.pop %v2237
        %v2425 = vmul.bf16 1065369472, %v2424
        %v2426 = vrcp.bf16.pop %v2238
        %v2427 = vmul.bf16 1065369472, %v2426
        %v2428 = vrcp.bf16.pop %v2239
        %v2429 = vmul.bf16 1065369472, %v2428
        %v2430 = vrcp.bf16.pop %v2240
        %v2431 = vmul.bf16 1065369472, %v2430
        %v2432 = vrcp.bf16.pop %v2241
        %v2433 = vmul.bf16 1065369472, %v2432
        %v2434 = vrcp.bf16.pop %v2242
        %v2435 = vmul.bf16 1065369472, %v2434
        %v2436 = vrcp.bf16.pop %v2243
        %v2437 = vmul.bf16 1065369472, %v2436
        %v2438 = vrcp.bf16.pop %v2244
        %v2439 = vmul.bf16 1065369472, %v2438
        %v2440 = vrcp.bf16.pop %v2245
        %v2441 = vmul.bf16 1065369472, %v2440
        %v2442 = vrcp.bf16.pop %v2246
        %v2443 = vmul.bf16 1065369472, %v2442
        %v2444 = vrcp.bf16.pop %v2247
        %v2445 = vmul.bf16 1065369472, %v2444
        %v2446 = vrcp.bf16.pop %v2248
        %v2447 = vmul.bf16 1065369472, %v2446
        %v2448 = vrcp.bf16.pop %v2249
        %v2449 = vmul.bf16 1065369472, %v2448
        %v2450 = vrcp.bf16.pop %v2250
        %v2451 = vmul.bf16 1065369472, %v2450
        %v2452 = vrcp.bf16.pop %v2251
        %v2453 = vmul.bf16 1065369472, %v2452
        %v2454 = vrcp.bf16.pop %v2252
        %v2455 = vmul.bf16 1065369472, %v2454
        %v2456 = vrcp.bf16.pop %v2253
        %v2457 = vmul.bf16 1065369472, %v2456
        %v2458 = vrcp.bf16.pop %v2254
        %v2459 = vmul.bf16 1065369472, %v2458
        %v2460 = vrcp.bf16.pop %v2255
        %v2461 = vmul.bf16 1065369472, %v2460
        %v2462 = vrcp.bf16.pop %v2256
        %v2463 = vmul.bf16 1065369472, %v2462
        %v2464 = vrcp.bf16.pop %v2257
        %v2465 = vmul.bf16 1065369472, %v2464
        %v2466 = vrcp.bf16.pop %v2258
        %v2467 = vmul.bf16 1065369472, %v2466
        %v2468 = vrcp.bf16.pop %v2259
        %v2469 = vmul.bf16 1065369472, %v2468
        %v2470 = vrcp.bf16.pop %v2260
        %v2471 = vmul.bf16 1065369472, %v2470
        %v2472 = vrcp.bf16.pop %v2261
        %v2473 = vmul.bf16 1065369472, %v2472
        %v2474 = vrcp.bf16.pop %v2262
        %v2475 = vmul.bf16 1065369472, %v2474
        %v2476 = vrcp.bf16.pop %v2263
        %v2477 = vmul.bf16 1065369472, %v2476
        %v2478 = vrcp.bf16.pop %v2264
        %v2479 = vmul.bf16 1065369472, %v2478
        %v2480 = vrcp.bf16.pop %v2265
        %v2481 = vmul.bf16 1065369472, %v2480
        %v2482 = vrcp.bf16.pop %v2266
        %v2483 = vmul.bf16 1065369472, %v2482
        %v2484 = vrcp.bf16.pop %v2267
        %v2485 = vmul.bf16 1065369472, %v2484
        %v2486 = vrcp.bf16.pop %v2268
        %v2487 = vmul.bf16 1065369472, %v2486
        %v2488 = vrcp.bf16.pop %v2269
        %v2489 = vmul.bf16 1065369472, %v2488
        %v2490 = vrcp.bf16.pop %v2270
        %v2491 = vmul.bf16 1065369472, %v2490
        %v2492 = vrcp.bf16.pop %v2271
        %v2493 = vmul.bf16 1065369472, %v2492
        %v2494 = vrcp.bf16.pop %v2272
        %v2495 = vmul.bf16 1065369472, %v2494
        %v2496 = vrcp.bf16.pop %v2273
        %v2497 = vmul.bf16 1065369472, %v2496
        %v2498 = vrcp.bf16.pop %v2274
        %v2499 = vmul.bf16 1065369472, %v2498
        %v2500 = vrcp.bf16.pop %v2275
        %v2501 = vmul.bf16 1065369472, %v2500
        %v2502 = vrcp.bf16.pop %v2276
        %v2503 = vmul.bf16 1065369472, %v2502
        %v2504 = vrcp.bf16.pop %v2277
        %v2505 = vmul.bf16 1065369472, %v2504
        %v2506 = vrcp.bf16.pop %v2278
        %v2507 = vmul.bf16 1065369472, %v2506
        %v2508 = vrcp.bf16.pop %v2279
        %v2509 = vmul.bf16 1065369472, %v2508
        %v2510 = vrcp.bf16.pop %v2280
        %v2511 = vmul.bf16 1065369472, %v2510
        %v2512 = vrcp.bf16.pop %v2281
        %v2513 = vmul.bf16 1065369472, %v2512
        %v2514 = vrcp.bf16.pop %v2282
        %v2515 = vmul.bf16 1065369472, %v2514
        %v2516 = vrcp.bf16.pop %v2283
        %v2517 = vmul.bf16 1065369472, %v2516
        %v2518 = vrcp.bf16.pop %v2284
        %v2519 = vmul.bf16 1065369472, %v2518
        %v2520 = vrcp.bf16.pop %v2285
        %v2521 = vmul.bf16 1065369472, %v2520
        %v2522 = vrcp.bf16.pop %v2286
        %v2523 = vmul.bf16 1065369472, %v2522
        %v2524 = vrcp.bf16.pop %v2287
        %v2525 = vmul.bf16 1065369472, %v2524
        %v2526 = vrcp.bf16.pop %v2288
        %v2527 = vmul.bf16 1065369472, %v2526
        %v2528 = vrcp.bf16.pop %v2289
        %v2529 = vmul.bf16 1065369472, %v2528
        %v2530 = vrcp.bf16.pop %v2290
        %v2531 = vmul.bf16 1065369472, %v2530
        %v2532 = vrcp.bf16.pop %v2291
        %v2533 = vmul.bf16 1065369472, %v2532
        %v2534 = vrcp.bf16.pop %v2292
        %v2535 = vmul.bf16 1065369472, %v2534
        %v2536 = vrcp.bf16.pop %v2293
        %v2537 = vmul.bf16 1065369472, %v2536
        %v2538 = vrcp.bf16.pop %v2294
        %v2539 = vmul.bf16 1065369472, %v2538
        %v2540 = vrcp.bf16.pop %v2295
        %v2541 = vmul.bf16 1065369472, %v2540
        %v2542 = vrcp.bf16.pop %v2296
        %v2543 = vmul.bf16 1065369472, %v2542
        %v2544 = vrcp.bf16.pop %v2297
        %v2545 = vmul.bf16 1065369472, %v2544
        %v2546 = vrcp.bf16.pop %v2298
        %v2547 = vmul.bf16 1065369472, %v2546
        %v2548 = vrcp.bf16.pop %v2299
        %v2549 = vmul.bf16 1065369472, %v2548
        %v2550 = vrcp.bf16.pop %v2300
        %v2551 = vmul.bf16 1065369472, %v2550
        %v2552 = vrcp.bf16.pop %v2301
        %v2553 = vmul.bf16 1065369472, %v2552
        %v2554 = vrcp.bf16.pop %v2302
        %v2555 = vmul.bf16 1065369472, %v2554
        %v2556 = vrcp.bf16.pop %v2303
        %v2557 = vmul.bf16 1065369472, %v2556
        %v2558 = vrcp.bf16.pop %v2304
        %v2559 = vmul.bf16 1065369472, %v2558
        %v2560 = vrcp.bf16.pop %v2305
        %v2561 = vmul.bf16 1065369472, %v2560
        %v2562 = vmul.bf16 %v1538, %v2307
        %v2563 = vmul.bf16 %v1539, %v2309
        %v2564 = vmul.bf16 %v1540, %v2311
        %v2565 = vmul.bf16 %v1541, %v2313
        %v2566 = vmul.bf16 %v1542, %v2315
        %v2567 = vmul.bf16 %v1543, %v2317
        %v2568 = vmul.bf16 %v1544, %v2319
        %v2569 = vmul.bf16 %v1545, %v2321
        %v2570 = vmul.bf16 %v1546, %v2323
        %v2571 = vmul.bf16 %v1547, %v2325
        %v2572 = vmul.bf16 %v1548, %v2327
        %v2573 = vmul.bf16 %v1549, %v2329
        %v2574 = vmul.bf16 %v1550, %v2331
        %v2575 = vmul.bf16 %v1551, %v2333
        %v2576 = vmul.bf16 %v1552, %v2335
        %v2577 = vmul.bf16 %v1553, %v2337
        %v2578 = vmul.bf16 %v1554, %v2339
        %v2579 = vmul.bf16 %v1555, %v2341
        %v2580 = vmul.bf16 %v1556, %v2343
        %v2581 = vmul.bf16 %v1557, %v2345
        %v2582 = vmul.bf16 %v1558, %v2347
        %v2583 = vmul.bf16 %v1559, %v2349
        %v2584 = vmul.bf16 %v1560, %v2351
        %v2585 = vmul.bf16 %v1561, %v2353
        %v2586 = vmul.bf16 %v1562, %v2355
        %v2587 = vmul.bf16 %v1563, %v2357
        %v2588 = vmul.bf16 %v1564, %v2359
        %v2589 = vmul.bf16 %v1565, %v2361
        %v2590 = vmul.bf16 %v1566, %v2363
        %v2591 = vmul.bf16 %v1567, %v2365
        %v2592 = vmul.bf16 %v1568, %v2367
        %v2593 = vmul.bf16 %v1569, %v2369
        %v2594 = vmul.bf16 %v1570, %v2371
        %v2595 = vmul.bf16 %v1571, %v2373
        %v2596 = vmul.bf16 %v1572, %v2375
        %v2597 = vmul.bf16 %v1573, %v2377
        %v2598 = vmul.bf16 %v1574, %v2379
        %v2599 = vmul.bf16 %v1575, %v2381
        %v2600 = vmul.bf16 %v1576, %v2383
        %v2601 = vmul.bf16 %v1577, %v2385
        %v2602 = vmul.bf16 %v1578, %v2387
        %v2603 = vmul.bf16 %v1579, %v2389
        %v2604 = vmul.bf16 %v1580, %v2391
        %v2605 = vmul.bf16 %v1581, %v2393
        %v2606 = vmul.bf16 %v1582, %v2395
        %v2607 = vmul.bf16 %v1583, %v2397
        %v2608 = vmul.bf16 %v1584, %v2399
        %v2609 = vmul.bf16 %v1585, %v2401
        %v2610 = vmul.bf16 %v1586, %v2403
        %v2611 = vmul.bf16 %v1587, %v2405
        %v2612 = vmul.bf16 %v1588, %v2407
        %v2613 = vmul.bf16 %v1589, %v2409
        %v2614 = vmul.bf16 %v1590, %v2411
        %v2615 = vmul.bf16 %v1591, %v2413
        %v2616 = vmul.bf16 %v1592, %v2415
        %v2617 = vmul.bf16 %v1593, %v2417
        %v2618 = vmul.bf16 %v1594, %v2419
        %v2619 = vmul.bf16 %v1595, %v2421
        %v2620 = vmul.bf16 %v1596, %v2423
        %v2621 = vmul.bf16 %v1597, %v2425
        %v2622 = vmul.bf16 %v1598, %v2427
        %v2623 = vmul.bf16 %v1599, %v2429
        %v2624 = vmul.bf16 %v1600, %v2431
        %v2625 = vmul.bf16 %v1601, %v2433
        %v2626 = vmul.bf16 %v1602, %v2435
        %v2627 = vmul.bf16 %v1603, %v2437
        %v2628 = vmul.bf16 %v1604, %v2439
        %v2629 = vmul.bf16 %v1605, %v2441
        %v2630 = vmul.bf16 %v1606, %v2443
        %v2631 = vmul.bf16 %v1607, %v2445
        %v2632 = vmul.bf16 %v1608, %v2447
        %v2633 = vmul.bf16 %v1609, %v2449
        %v2634 = vmul.bf16 %v1610, %v2451
        %v2635 = vmul.bf16 %v1611, %v2453
        %v2636 = vmul.bf16 %v1612, %v2455
        %v2637 = vmul.bf16 %v1613, %v2457
        %v2638 = vmul.bf16 %v1614, %v2459
        %v2639 = vmul.bf16 %v1615, %v2461
        %v2640 = vmul.bf16 %v1616, %v2463
        %v2641 = vmul.bf16 %v1617, %v2465
        %v2642 = vmul.bf16 %v1618, %v2467
        %v2643 = vmul.bf16 %v1619, %v2469
        %v2644 = vmul.bf16 %v1620, %v2471
        %v2645 = vmul.bf16 %v1621, %v2473
        %v2646 = vmul.bf16 %v1622, %v2475
        %v2647 = vmul.bf16 %v1623, %v2477
        %v2648 = vmul.bf16 %v1624, %v2479
        %v2649 = vmul.bf16 %v1625, %v2481
        %v2650 = vmul.bf16 %v1626, %v2483
        %v2651 = vmul.bf16 %v1627, %v2485
        %v2652 = vmul.bf16 %v1628, %v2487
        %v2653 = vmul.bf16 %v1629, %v2489
        %v2654 = vmul.bf16 %v1630, %v2491
        %v2655 = vmul.bf16 %v1631, %v2493
        %v2656 = vmul.bf16 %v1632, %v2495
        %v2657 = vmul.bf16 %v1633, %v2497
        %v2658 = vmul.bf16 %v1634, %v2499
        %v2659 = vmul.bf16 %v1635, %v2501
        %v2660 = vmul.bf16 %v1636, %v2503
        %v2661 = vmul.bf16 %v1637, %v2505
        %v2662 = vmul.bf16 %v1638, %v2507
        %v2663 = vmul.bf16 %v1639, %v2509
        %v2664 = vmul.bf16 %v1640, %v2511
        %v2665 = vmul.bf16 %v1641, %v2513
        %v2666 = vmul.bf16 %v1642, %v2515
        %v2667 = vmul.bf16 %v1643, %v2517
        %v2668 = vmul.bf16 %v1644, %v2519
        %v2669 = vmul.bf16 %v1645, %v2521
        %v2670 = vmul.bf16 %v1646, %v2523
        %v2671 = vmul.bf16 %v1647, %v2525
        %v2672 = vmul.bf16 %v1648, %v2527
        %v2673 = vmul.bf16 %v1649, %v2529
        %v2674 = vmul.bf16 %v1650, %v2531
        %v2675 = vmul.bf16 %v1651, %v2533
        %v2676 = vmul.bf16 %v1652, %v2535
        %v2677 = vmul.bf16 %v1653, %v2537
        %v2678 = vmul.bf16 %v1654, %v2539
        %v2679 = vmul.bf16 %v1655, %v2541
        %v2680 = vmul.bf16 %v1656, %v2543
        %v2681 = vmul.bf16 %v1657, %v2545
        %v2682 = vmul.bf16 %v1658, %v2547
        %v2683 = vmul.bf16 %v1659, %v2549
        %v2684 = vmul.bf16 %v1660, %v2551
        %v2685 = vmul.bf16 %v1661, %v2553
        %v2686 = vmul.bf16 %v1662, %v2555
        %v2687 = vmul.bf16 %v1663, %v2557
        %v2688 = vmul.bf16 %v1664, %v2559
        %v2689 = vmul.bf16 %v1665, %v2561
        %v2690 = vld [vmem:[#allocation6] sm:$0xf]
        %v2693 = vunpack.c.l.s4 1966171168
        %v2694 = vunpack.c.0.s8 %v2693
        %v2695 = vlaneseq
        %v2696 = vshrl.u32 %v2695, 7
        %v2697 = vsub.s32 %v2694, %v2696
        %v2698 = vrot.slane %v2690, %v2697
        %v2699 = vcombine.high %v2698, %v2698
        %v2701 = vunpack.c.l.s4 1966171168
        %v2702 = vunpack.c.0.s8 %v2701
        %v2703 = vlaneseq
        %v2704 = vshrl.u32 %v2703, 7
        %v2705 = vsub.s32 %v2702, %v2704
        %v2706 = vrot.slane %v2698, %v2705
        %v2708 = vunpack.c.l.s4 1966171168
        %v2709 = vunpack.c.0.s8 %v2708
        %v2710 = vlaneseq
        %v2711 = vshrl.u32 %v2710, 7
        %v2712 = vsub.s32 %v2709, %v2711
        %v2713 = vrot.slane %v2699, %v2712
        %v2714 = vcombine.high %v2706, %v2706
        %v2715 = vcombine.high %v2713, %v2713
        %2720 = vmatprep.subr.bf16.mxu0 %v2563
        %2721 = vmatpush1.bf16.msra.mxu0 %v2562
        %2722 = vmatprep.subr.bf16.mxu0 %v2567
        %2723 = vmatpush1.bf16.msra.mxu0 %v2566
        %2724 = vmatprep.subr.bf16.mxu0 %v2571
        %2725 = vmatpush1.bf16.msra.mxu0 %v2570
        %2726 = vmatprep.subr.bf16.mxu0 %v2575
        %2727 = vmatpush1.bf16.msra.mxu0 %v2574
        %2728 = vmatprep.subr.bf16.mxu0 %v2579
        %2729 = vmatpush1.bf16.msra.mxu0 %v2578
        %2730 = vmatprep.subr.bf16.mxu0 %v2583
        %2731 = vmatpush1.bf16.msra.mxu0 %v2582
        %2732 = vmatprep.subr.bf16.mxu0 %v2587
        %2733 = vmatpush1.bf16.msra.mxu0 %v2586
        %2734 = vmatprep.subr.bf16.mxu0 %v2591
        %2735 = vmatpush1.bf16.msra.mxu0 %v2590
        %2736 = vmatprep.subr.bf16.mxu0 %v2595
        %2737 = vmatpush1.bf16.msra.mxu0 %v2594
        %2738 = vmatprep.subr.bf16.mxu0 %v2599
        %2739 = vmatpush1.bf16.msra.mxu0 %v2598
        %2740 = vmatprep.subr.bf16.mxu0 %v2603
        %2741 = vmatpush1.bf16.msra.mxu0 %v2602
        %2742 = vmatprep.subr.bf16.mxu0 %v2607
        %2743 = vmatpush1.bf16.msra.mxu0 %v2606
        %2744 = vmatprep.subr.bf16.mxu0 %v2611
        %2745 = vmatpush1.bf16.msra.mxu0 %v2610
        %2746 = vmatprep.subr.bf16.mxu0 %v2615
        %2747 = vmatpush1.bf16.msra.mxu0 %v2614
        %2748 = vmatprep.subr.bf16.mxu0 %v2619
        %2749 = vmatpush1.bf16.msra.mxu0 %v2618
        %2750 = vmatprep.subr.bf16.mxu0 %v2623
        %2751 = vmatpush1.bf16.msra.mxu0 %v2622
        %2752 = vmatprep.mubr.bf16.mxu0 %v2713
        %2753 = vmatmul.mubr.bf16.gmra.mrb[0].mxu0 %v2706
        %v2754 = vpop.f32.mrb[0].mxu0
        %v2755 = vadd.f32 0.0, %v2754
        %v2756 = vpop.f32.mrb[0].mxu0
        %v2757 = vadd.f32 0.0, %v2756
        %v2758 = vpop.f32.mrb[0].mxu0
        %v2759 = vpop.f32.mrb[0].mxu0
        %2760 = vdwg.mxu0
        %2761 = vmatprep.subr.bf16.mxu0 %v2627
        %2762 = vmatpush1.bf16.msra.mxu0 %v2626
        %2763 = vmatprep.subr.bf16.mxu0 %v2631
        %2764 = vmatpush1.bf16.msra.mxu0 %v2630
        %2765 = vmatprep.subr.bf16.mxu0 %v2635
        %2766 = vmatpush1.bf16.msra.mxu0 %v2634
        %2767 = vmatprep.subr.bf16.mxu0 %v2639
        %2768 = vmatpush1.bf16.msra.mxu0 %v2638
        %2769 = vmatprep.subr.bf16.mxu0 %v2643
        %2770 = vmatpush1.bf16.msra.mxu0 %v2642
        %2771 = vmatprep.subr.bf16.mxu0 %v2647
        %2772 = vmatpush1.bf16.msra.mxu0 %v2646
        %2773 = vmatprep.subr.bf16.mxu0 %v2651
        %2774 = vmatpush1.bf16.msra.mxu0 %v2650
        %2775 = vmatprep.subr.bf16.mxu0 %v2655
        %2776 = vmatpush1.bf16.msra.mxu0 %v2654
        %2777 = vmatprep.subr.bf16.mxu0 %v2659
        %2778 = vmatpush1.bf16.msra.mxu0 %v2658
        %2779 = vmatprep.subr.bf16.mxu0 %v2663
        %2780 = vmatpush1.bf16.msra.mxu0 %v2662
        %2781 = vmatprep.subr.bf16.mxu0 %v2667
        %2782 = vmatpush1.bf16.msra.mxu0 %v2666
        %2783 = vmatprep.subr.bf16.mxu0 %v2671
        %2784 = vmatpush1.bf16.msra.mxu0 %v2670
        %2785 = vmatprep.subr.bf16.mxu0 %v2675
        %2786 = vmatpush1.bf16.msra.mxu0 %v2674
        %2787 = vmatprep.subr.bf16.mxu0 %v2679
        %2788 = vmatpush1.bf16.msra.mxu0 %v2678
        %2789 = vmatprep.subr.bf16.mxu0 %v2683
        %2790 = vmatpush1.bf16.msra.mxu0 %v2682
        %2791 = vmatprep.subr.bf16.mxu0 %v2687
        %2792 = vmatpush1.bf16.msra.mxu0 %v2686
        %2793 = vmatprep.mubr.bf16.mxu0 %v2715
        %2794 = vmatmul.mubr.bf16.gmra.mrb[0].mxu0 %v2714
        %v2795 = vpop.f32.mrb[0].mxu0
        %v2796 = vadd.f32 %v2755, %v2795
        %v2797 = vpop.f32.mrb[0].mxu0
        %v2798 = vadd.f32 %v2757, %v2797
        %v2799 = vpop.f32.mrb[0].mxu0
        %v2800 = vpop.f32.mrb[0].mxu0
        %2801 = vdwg.mxu0
        %2802 = vmatprep.subr.bf16.mxu0 %v2565
        %2803 = vmatpush1.bf16.msra.mxu0 %v2564
        %2804 = vmatprep.subr.bf16.mxu0 %v2569
        %2805 = vmatpush1.bf16.msra.mxu0 %v2568
        %2806 = vmatprep.subr.bf16.mxu0 %v2573
        %2807 = vmatpush1.bf16.msra.mxu0 %v2572
        %2808 = vmatprep.subr.bf16.mxu0 %v2577
        %2809 = vmatpush1.bf16.msra.mxu0 %v2576
        %2810 = vmatprep.subr.bf16.mxu0 %v2581
        %2811 = vmatpush1.bf16.msra.mxu0 %v2580
        %2812 = vmatprep.subr.bf16.mxu0 %v2585
        %2813 = vmatpush1.bf16.msra.mxu0 %v2584
        %2814 = vmatprep.subr.bf16.mxu0 %v2589
        %2815 = vmatpush1.bf16.msra.mxu0 %v2588
        %2816 = vmatprep.subr.bf16.mxu0 %v2593
        %2817 = vmatpush1.bf16.msra.mxu0 %v2592
        %2818 = vmatprep.subr.bf16.mxu0 %v2597
        %2819 = vmatpush1.bf16.msra.mxu0 %v2596
        %2820 = vmatprep.subr.bf16.mxu0 %v2601
        %2821 = vmatpush1.bf16.msra.mxu0 %v2600
        %2822 = vmatprep.subr.bf16.mxu0 %v2605
        %2823 = vmatpush1.bf16.msra.mxu0 %v2604
        %2824 = vmatprep.subr.bf16.mxu0 %v2609
        %2825 = vmatpush1.bf16.msra.mxu0 %v2608
        %2826 = vmatprep.subr.bf16.mxu0 %v2613
        %2827 = vmatpush1.bf16.msra.mxu0 %v2612
        %2828 = vmatprep.subr.bf16.mxu0 %v2617
        %2829 = vmatpush1.bf16.msra.mxu0 %v2616
        %2830 = vmatprep.subr.bf16.mxu0 %v2621
        %2831 = vmatpush1.bf16.msra.mxu0 %v2620
        %2832 = vmatprep.subr.bf16.mxu0 %v2625
        %2833 = vmatpush1.bf16.msra.mxu0 %v2624
        %2834 = vmatprep.mubr.bf16.mxu0 %v2713
        %2835 = vmatmul.mubr.bf16.gmra.mrb[0].mxu0 %v2706
        %v2836 = vpop.f32.mrb[0].mxu0
        %v2837 = vadd.f32 0.0, %v2836
        %v2838 = vpop.f32.mrb[0].mxu0
        %v2839 = vadd.f32 0.0, %v2838
        %v2840 = vpop.f32.mrb[0].mxu0
        %v2841 = vpop.f32.mrb[0].mxu0
        %2842 = vdwg.mxu0
        %2843 = vmatprep.subr.bf16.mxu0 %v2629
        %2844 = vmatpush1.bf16.msra.mxu0 %v2628
        %2845 = vmatprep.subr.bf16.mxu0 %v2633
        %2846 = vmatpush1.bf16.msra.mxu0 %v2632
        %2847 = vmatprep.subr.bf16.mxu0 %v2637
        %2848 = vmatpush1.bf16.msra.mxu0 %v2636
        %2849 = vmatprep.subr.bf16.mxu0 %v2641
        %2850 = vmatpush1.bf16.msra.mxu0 %v2640
        %2851 = vmatprep.subr.bf16.mxu0 %v2645
        %2852 = vmatpush1.bf16.msra.mxu0 %v2644
        %2853 = vmatprep.subr.bf16.mxu0 %v2649
        %2854 = vmatpush1.bf16.msra.mxu0 %v2648
        %2855 = vmatprep.subr.bf16.mxu0 %v2653
        %2856 = vmatpush1.bf16.msra.mxu0 %v2652
        %2857 = vmatprep.subr.bf16.mxu0 %v2657
        %2858 = vmatpush1.bf16.msra.mxu0 %v2656
        %2859 = vmatprep.subr.bf16.mxu0 %v2661
        %2860 = vmatpush1.bf16.msra.mxu0 %v2660
        %2861 = vmatprep.subr.bf16.mxu0 %v2665
        %2862 = vmatpush1.bf16.msra.mxu0 %v2664
        %2863 = vmatprep.subr.bf16.mxu0 %v2669
        %2864 = vmatpush1.bf16.msra.mxu0 %v2668
        %2865 = vmatprep.subr.bf16.mxu0 %v2673
        %2866 = vmatpush1.bf16.msra.mxu0 %v2672
        %2867 = vmatprep.subr.bf16.mxu0 %v2677
        %2868 = vmatpush1.bf16.msra.mxu0 %v2676
        %2869 = vmatprep.subr.bf16.mxu0 %v2681
        %2870 = vmatpush1.bf16.msra.mxu0 %v2680
        %2871 = vmatprep.subr.bf16.mxu0 %v2685
        %2872 = vmatpush1.bf16.msra.mxu0 %v2684
        %2873 = vmatprep.subr.bf16.mxu0 %v2689
        %2874 = vmatpush1.bf16.msra.mxu0 %v2688
        %2875 = vmatprep.mubr.bf16.mxu0 %v2715
        %2876 = vmatmul.mubr.bf16.gmra.mrb[0].mxu0 %v2714
        %v2877 = vpop.f32.mrb[0].mxu0
        %v2878 = vadd.f32 %v2837, %v2877
        %v2879 = vpop.f32.mrb[0].mxu0
        %v2880 = vadd.f32 %v2839, %v2879
        %v2881 = vpop.f32.mrb[0].mxu0
        %v2882 = vpop.f32.mrb[0].mxu0
        %2883 = vdwg.mxu0
        %v2884 = vld [vmem:[#allocation2] sm:$0xff]
        %v2885 = vpack.c.bf16 %v2796, %v2796
        %v2886 = vpack.c.bf16 %v2798, %v2798
        %v2887 = vpack.c.bf16 %v2878, %v2878
        %v2888 = vpack.c.bf16 %v2880, %v2880
        %v2889 = vld [vmem:[%s332] sm:$0xff]
        %v2890 = vld [vmem:[%s332 + $0x8] sm:$0xff]
        %v2891 = vld [vmem:[%s332 + $0x10] sm:$0xff]
        %v2892 = vld [vmem:[%s332 + $0x18] sm:$0xff]
        %v2893 = vld [vmem:[%s332 + $0x20] sm:$0xff]
        %v2894 = vld [vmem:[%s332 + $0x28] sm:$0xff]
        %v2895 = vld [vmem:[%s332 + $0x30] sm:$0xff]
        %v2896 = vld [vmem:[%s332 + $0x38] sm:$0xff]
        %v2897 = vld [vmem:[%s332 + $0x40] sm:$0xff]
        %v2898 = vld [vmem:[%s332 + $0x48] sm:$0xff]
        %v2899 = vld [vmem:[%s332 + $0x50] sm:$0xff]
        %v2900 = vld [vmem:[%s332 + $0x58] sm:$0xff]
        %v2901 = vld [vmem:[%s332 + $0x60] sm:$0xff]
        %v2902 = vld [vmem:[%s332 + $0x68] sm:$0xff]
        %v2903 = vld [vmem:[%s332 + $0x70] sm:$0xff]
        %v2904 = vld [vmem:[%s332 + $0x78] sm:$0xff]
        %v2905 = vld [vmem:[%s332 + $0x80] sm:$0xff]
        %v2906 = vld [vmem:[%s332 + $0x88] sm:$0xff]
        %v2907 = vld [vmem:[%s332 + $0x90] sm:$0xff]
        %v2908 = vld [vmem:[%s332 + $0x98] sm:$0xff]
        %v2909 = vld [vmem:[%s332 + $0xa0] sm:$0xff]
        %v2910 = vld [vmem:[%s332 + $0xa8] sm:$0xff]
        %v2911 = vld [vmem:[%s332 + $0xb0] sm:$0xff]
        %v2912 = vld [vmem:[%s332 + $0xb8] sm:$0xff]
        %v2913 = vld [vmem:[%s332 + $0xc0] sm:$0xff]
        %v2914 = vld [vmem:[%s332 + $0xc8] sm:$0xff]
        %v2915 = vld [vmem:[%s332 + $0xd0] sm:$0xff]
        %v2916 = vld [vmem:[%s332 + $0xd8] sm:$0xff]
        %v2917 = vld [vmem:[%s332 + $0xe0] sm:$0xff]
        %v2918 = vld [vmem:[%s332 + $0xe8] sm:$0xff]
        %v2919 = vld [vmem:[%s332 + $0xf0] sm:$0xff]
        %v2920 = vld [vmem:[%s332 + $0xf8] sm:$0xff]
        %v2921 = vld [vmem:[%s332 + $0x100] sm:$0xff]
        %v2922 = vld [vmem:[%s332 + $0x108] sm:$0xff]
        %v2923 = vld [vmem:[%s332 + $0x110] sm:$0xff]
        %v2924 = vld [vmem:[%s332 + $0x118] sm:$0xff]
        %v2925 = vld [vmem:[%s332 + $0x120] sm:$0xff]
        %v2926 = vld [vmem:[%s332 + $0x128] sm:$0xff]
        %v2927 = vld [vmem:[%s332 + $0x130] sm:$0xff]
        %v2928 = vld [vmem:[%s332 + $0x138] sm:$0xff]
        %v2929 = vld [vmem:[%s332 + $0x140] sm:$0xff]
        %v2930 = vld [vmem:[%s332 + $0x148] sm:$0xff]
        %v2931 = vld [vmem:[%s332 + $0x150] sm:$0xff]
        %v2932 = vld [vmem:[%s332 + $0x158] sm:$0xff]
        %v2933 = vld [vmem:[%s332 + $0x160] sm:$0xff]
        %v2934 = vld [vmem:[%s332 + $0x168] sm:$0xff]
        %v2935 = vld [vmem:[%s332 + $0x170] sm:$0xff]
        %v2936 = vld [vmem:[%s332 + $0x178] sm:$0xff]
        %v2937 = vld [vmem:[%s332 + $0x180] sm:$0xff]
        %v2938 = vld [vmem:[%s332 + $0x188] sm:$0xff]
        %v2939 = vld [vmem:[%s332 + $0x190] sm:$0xff]
        %v2940 = vld [vmem:[%s332 + $0x198] sm:$0xff]
        %v2941 = vld [vmem:[%s332 + $0x1a0] sm:$0xff]
        %v2942 = vld [vmem:[%s332 + $0x1a8] sm:$0xff]
        %v2943 = vld [vmem:[%s332 + $0x1b0] sm:$0xff]
        %v2944 = vld [vmem:[%s332 + $0x1b8] sm:$0xff]
        %v2945 = vld [vmem:[%s332 + $0x1c0] sm:$0xff]
        %v2946 = vld [vmem:[%s332 + $0x1c8] sm:$0xff]
        %v2947 = vld [vmem:[%s332 + $0x1d0] sm:$0xff]
        %v2948 = vld [vmem:[%s332 + $0x1d8] sm:$0xff]
        %v2949 = vld [vmem:[%s332 + $0x1e0] sm:$0xff]
        %v2950 = vld [vmem:[%s332 + $0x1e8] sm:$0xff]
        %v2951 = vld [vmem:[%s332 + $0x1f0] sm:$0xff]
        %v2952 = vld [vmem:[%s332 + $0x1f8] sm:$0xff]
        %v2953 = vld [vmem:[%s332 + $0x200] sm:$0xff]
        %v2954 = vld [vmem:[%s332 + $0x208] sm:$0xff]
        %v2955 = vld [vmem:[%s332 + $0x210] sm:$0xff]
        %v2956 = vld [vmem:[%s332 + $0x218] sm:$0xff]
        %v2957 = vld [vmem:[%s332 + $0x220] sm:$0xff]
        %v2958 = vld [vmem:[%s332 + $0x228] sm:$0xff]
        %v2959 = vld [vmem:[%s332 + $0x230] sm:$0xff]
        %v2960 = vld [vmem:[%s332 + $0x238] sm:$0xff]
        %v2961 = vld [vmem:[%s332 + $0x240] sm:$0xff]
        %v2962 = vld [vmem:[%s332 + $0x248] sm:$0xff]
        %v2963 = vld [vmem:[%s332 + $0x250] sm:$0xff]
        %v2964 = vld [vmem:[%s332 + $0x258] sm:$0xff]
        %v2965 = vld [vmem:[%s332 + $0x260] sm:$0xff]
        %v2966 = vld [vmem:[%s332 + $0x268] sm:$0xff]
        %v2967 = vld [vmem:[%s332 + $0x270] sm:$0xff]
        %v2968 = vld [vmem:[%s332 + $0x278] sm:$0xff]
        %v2969 = vld [vmem:[%s332 + $0x280] sm:$0xff]
        %v2970 = vld [vmem:[%s332 + $0x288] sm:$0xff]
        %v2971 = vld [vmem:[%s332 + $0x290] sm:$0xff]
        %v2972 = vld [vmem:[%s332 + $0x298] sm:$0xff]
        %v2973 = vld [vmem:[%s332 + $0x2a0] sm:$0xff]
        %v2974 = vld [vmem:[%s332 + $0x2a8] sm:$0xff]
        %v2975 = vld [vmem:[%s332 + $0x2b0] sm:$0xff]
        %v2976 = vld [vmem:[%s332 + $0x2b8] sm:$0xff]
        %v2977 = vld [vmem:[%s332 + $0x2c0] sm:$0xff]
        %v2978 = vld [vmem:[%s332 + $0x2c8] sm:$0xff]
        %v2979 = vld [vmem:[%s332 + $0x2d0] sm:$0xff]
        %v2980 = vld [vmem:[%s332 + $0x2d8] sm:$0xff]
        %v2981 = vld [vmem:[%s332 + $0x2e0] sm:$0xff]
        %v2982 = vld [vmem:[%s332 + $0x2e8] sm:$0xff]
        %v2983 = vld [vmem:[%s332 + $0x2f0] sm:$0xff]
        %v2984 = vld [vmem:[%s332 + $0x2f8] sm:$0xff]
        %v2985 = vld [vmem:[%s332 + $0x300] sm:$0xff]
        %v2986 = vld [vmem:[%s332 + $0x308] sm:$0xff]
        %v2987 = vld [vmem:[%s332 + $0x310] sm:$0xff]
        %v2988 = vld [vmem:[%s332 + $0x318] sm:$0xff]
        %v2989 = vld [vmem:[%s332 + $0x320] sm:$0xff]
        %v2990 = vld [vmem:[%s332 + $0x328] sm:$0xff]
        %v2991 = vld [vmem:[%s332 + $0x330] sm:$0xff]
        %v2992 = vld [vmem:[%s332 + $0x338] sm:$0xff]
        %v2993 = vld [vmem:[%s332 + $0x340] sm:$0xff]
        %v2994 = vld [vmem:[%s332 + $0x348] sm:$0xff]
        %v2995 = vld [vmem:[%s332 + $0x350] sm:$0xff]
        %v2996 = vld [vmem:[%s332 + $0x358] sm:$0xff]
        %v2997 = vld [vmem:[%s332 + $0x360] sm:$0xff]
        %v2998 = vld [vmem:[%s332 + $0x368] sm:$0xff]
        %v2999 = vld [vmem:[%s332 + $0x370] sm:$0xff]
        %v3000 = vld [vmem:[%s332 + $0x378] sm:$0xff]
        %v3001 = vld [vmem:[%s332 + $0x380] sm:$0xff]
        %v3002 = vld [vmem:[%s332 + $0x388] sm:$0xff]
        %v3003 = vld [vmem:[%s332 + $0x390] sm:$0xff]
        %v3004 = vld [vmem:[%s332 + $0x398] sm:$0xff]
        %v3005 = vld [vmem:[%s332 + $0x3a0] sm:$0xff]
        %v3006 = vld [vmem:[%s332 + $0x3a8] sm:$0xff]
        %v3007 = vld [vmem:[%s332 + $0x3b0] sm:$0xff]
        %v3008 = vld [vmem:[%s332 + $0x3b8] sm:$0xff]
        %v3009 = vld [vmem:[%s332 + $0x3c0] sm:$0xff]
        %v3010 = vld [vmem:[%s332 + $0x3c8] sm:$0xff]
        %v3011 = vld [vmem:[%s332 + $0x3d0] sm:$0xff]
        %v3012 = vld [vmem:[%s332 + $0x3d8] sm:$0xff]
        %v3013 = vld [vmem:[%s332 + $0x3e0] sm:$0xff]
        %v3014 = vld [vmem:[%s332 + $0x3e8] sm:$0xff]
        %v3015 = vld [vmem:[%s332 + $0x3f0] sm:$0xff]
        %v3016 = vld [vmem:[%s332 + $0x3f8] sm:$0xff]
        %v3145 = vunpack.c.l.b16 %v2889
        %v3146 = vunpack.c.h.b16 %v2889
        %v3147 = vunpack.c.l.b16 %v2890
        %v3148 = vunpack.c.h.b16 %v2890
        %v3149 = vunpack.c.l.b16 %v2891
        %v3150 = vunpack.c.h.b16 %v2891
        %v3151 = vunpack.c.l.b16 %v2892
        %v3152 = vunpack.c.h.b16 %v2892
        %v3153 = vunpack.c.l.b16 %v2893
        %v3154 = vunpack.c.h.b16 %v2893
        %v3155 = vunpack.c.l.b16 %v2894
        %v3156 = vunpack.c.h.b16 %v2894
        %v3157 = vunpack.c.l.b16 %v2895
        %v3158 = vunpack.c.h.b16 %v2895
        %v3159 = vunpack.c.l.b16 %v2896
        %v3160 = vunpack.c.h.b16 %v2896
        %v3161 = vunpack.c.l.b16 %v2897
        %v3162 = vunpack.c.h.b16 %v2897
        %v3163 = vunpack.c.l.b16 %v2898
        %v3164 = vunpack.c.h.b16 %v2898
        %v3165 = vunpack.c.l.b16 %v2899
        %v3166 = vunpack.c.h.b16 %v2899
        %v3167 = vunpack.c.l.b16 %v2900
        %v3168 = vunpack.c.h.b16 %v2900
        %v3169 = vunpack.c.l.b16 %v2901
        %v3170 = vunpack.c.h.b16 %v2901
        %v3171 = vunpack.c.l.b16 %v2902
        %v3172 = vunpack.c.h.b16 %v2902
        %v3173 = vunpack.c.l.b16 %v2903
        %v3174 = vunpack.c.h.b16 %v2903
        %v3175 = vunpack.c.l.b16 %v2904
        %v3176 = vunpack.c.h.b16 %v2904
        %v3177 = vunpack.c.l.b16 %v2905
        %v3178 = vunpack.c.h.b16 %v2905
        %v3179 = vunpack.c.l.b16 %v2906
        %v3180 = vunpack.c.h.b16 %v2906
        %v3181 = vunpack.c.l.b16 %v2907
        %v3182 = vunpack.c.h.b16 %v2907
        %v3183 = vunpack.c.l.b16 %v2908
        %v3184 = vunpack.c.h.b16 %v2908
        %v3185 = vunpack.c.l.b16 %v2909
        %v3186 = vunpack.c.h.b16 %v2909
        %v3187 = vunpack.c.l.b16 %v2910
        %v3188 = vunpack.c.h.b16 %v2910
        %v3189 = vunpack.c.l.b16 %v2911
        %v3190 = vunpack.c.h.b16 %v2911
        %v3191 = vunpack.c.l.b16 %v2912
        %v3192 = vunpack.c.h.b16 %v2912
        %v3193 = vunpack.c.l.b16 %v2913
        %v3194 = vunpack.c.h.b16 %v2913
        %v3195 = vunpack.c.l.b16 %v2914
        %v3196 = vunpack.c.h.b16 %v2914
        %v3197 = vunpack.c.l.b16 %v2915
        %v3198 = vunpack.c.h.b16 %v2915
        %v3199 = vunpack.c.l.b16 %v2916
        %v3200 = vunpack.c.h.b16 %v2916
        %v3201 = vunpack.c.l.b16 %v2917
        %v3202 = vunpack.c.h.b16 %v2917
        %v3203 = vunpack.c.l.b16 %v2918
        %v3204 = vunpack.c.h.b16 %v2918
        %v3205 = vunpack.c.l.b16 %v2919
        %v3206 = vunpack.c.h.b16 %v2919
        %v3207 = vunpack.c.l.b16 %v2920
        %v3208 = vunpack.c.h.b16 %v2920
        %v3209 = vunpack.c.l.b16 %v2921
        %v3210 = vunpack.c.h.b16 %v2921
        %v3211 = vunpack.c.l.b16 %v2922
        %v3212 = vunpack.c.h.b16 %v2922
        %v3213 = vunpack.c.l.b16 %v2923
        %v3214 = vunpack.c.h.b16 %v2923
        %v3215 = vunpack.c.l.b16 %v2924
        %v3216 = vunpack.c.h.b16 %v2924
        %v3217 = vunpack.c.l.b16 %v2925
        %v3218 = vunpack.c.h.b16 %v2925
        %v3219 = vunpack.c.l.b16 %v2926
        %v3220 = vunpack.c.h.b16 %v2926
        %v3221 = vunpack.c.l.b16 %v2927
        %v3222 = vunpack.c.h.b16 %v2927
        %v3223 = vunpack.c.l.b16 %v2928
        %v3224 = vunpack.c.h.b16 %v2928
        %v3225 = vunpack.c.l.b16 %v2929
        %v3226 = vunpack.c.h.b16 %v2929
        %v3227 = vunpack.c.l.b16 %v2930
        %v3228 = vunpack.c.h.b16 %v2930
        %v3229 = vunpack.c.l.b16 %v2931
        %v3230 = vunpack.c.h.b16 %v2931
        %v3231 = vunpack.c.l.b16 %v2932
        %v3232 = vunpack.c.h.b16 %v2932
        %v3233 = vunpack.c.l.b16 %v2933
        %v3234 = vunpack.c.h.b16 %v2933
        %v3235 = vunpack.c.l.b16 %v2934
        %v3236 = vunpack.c.h.b16 %v2934
        %v3237 = vunpack.c.l.b16 %v2935
        %v3238 = vunpack.c.h.b16 %v2935
        %v3239 = vunpack.c.l.b16 %v2936
        %v3240 = vunpack.c.h.b16 %v2936
        %v3241 = vunpack.c.l.b16 %v2937
        %v3242 = vunpack.c.h.b16 %v2937
        %v3243 = vunpack.c.l.b16 %v2938
        %v3244 = vunpack.c.h.b16 %v2938
        %v3245 = vunpack.c.l.b16 %v2939
        %v3246 = vunpack.c.h.b16 %v2939
        %v3247 = vunpack.c.l.b16 %v2940
        %v3248 = vunpack.c.h.b16 %v2940
        %v3249 = vunpack.c.l.b16 %v2941
        %v3250 = vunpack.c.h.b16 %v2941
        %v3251 = vunpack.c.l.b16 %v2942
        %v3252 = vunpack.c.h.b16 %v2942
        %v3253 = vunpack.c.l.b16 %v2943
        %v3254 = vunpack.c.h.b16 %v2943
        %v3255 = vunpack.c.l.b16 %v2944
        %v3256 = vunpack.c.h.b16 %v2944
        %v3257 = vunpack.c.l.b16 %v2945
        %v3258 = vunpack.c.h.b16 %v2945
        %v3259 = vunpack.c.l.b16 %v2946
        %v3260 = vunpack.c.h.b16 %v2946
        %v3261 = vunpack.c.l.b16 %v2947
        %v3262 = vunpack.c.h.b16 %v2947
        %v3263 = vunpack.c.l.b16 %v2948
        %v3264 = vunpack.c.h.b16 %v2948
        %v3265 = vunpack.c.l.b16 %v2949
        %v3266 = vunpack.c.h.b16 %v2949
        %v3267 = vunpack.c.l.b16 %v2950
        %v3268 = vunpack.c.h.b16 %v2950
        %v3269 = vunpack.c.l.b16 %v2951
        %v3270 = vunpack.c.h.b16 %v2951
        %v3271 = vunpack.c.l.b16 %v2952
        %v3272 = vunpack.c.h.b16 %v2952
        %v3273 = vunpack.c.l.b16 %v2953
        %v3274 = vunpack.c.h.b16 %v2953
        %v3275 = vunpack.c.l.b16 %v2954
        %v3276 = vunpack.c.h.b16 %v2954
        %v3277 = vunpack.c.l.b16 %v2955
        %v3278 = vunpack.c.h.b16 %v2955
        %v3279 = vunpack.c.l.b16 %v2956
        %v3280 = vunpack.c.h.b16 %v2956
        %v3281 = vunpack.c.l.b16 %v2957
        %v3282 = vunpack.c.h.b16 %v2957
        %v3283 = vunpack.c.l.b16 %v2958
        %v3284 = vunpack.c.h.b16 %v2958
        %v3285 = vunpack.c.l.b16 %v2959
        %v3286 = vunpack.c.h.b16 %v2959
        %v3287 = vunpack.c.l.b16 %v2960
        %v3288 = vunpack.c.h.b16 %v2960
        %v3289 = vunpack.c.l.b16 %v2961
        %v3290 = vunpack.c.h.b16 %v2961
        %v3291 = vunpack.c.l.b16 %v2962
        %v3292 = vunpack.c.h.b16 %v2962
        %v3293 = vunpack.c.l.b16 %v2963
        %v3294 = vunpack.c.h.b16 %v2963
        %v3295 = vunpack.c.l.b16 %v2964
        %v3296 = vunpack.c.h.b16 %v2964
        %v3297 = vunpack.c.l.b16 %v2965
        %v3298 = vunpack.c.h.b16 %v2965
        %v3299 = vunpack.c.l.b16 %v2966
        %v3300 = vunpack.c.h.b16 %v2966
        %v3301 = vunpack.c.l.b16 %v2967
        %v3302 = vunpack.c.h.b16 %v2967
        %v3303 = vunpack.c.l.b16 %v2968
        %v3304 = vunpack.c.h.b16 %v2968
        %v3305 = vunpack.c.l.b16 %v2969
        %v3306 = vunpack.c.h.b16 %v2969
        %v3307 = vunpack.c.l.b16 %v2970
        %v3308 = vunpack.c.h.b16 %v2970
        %v3309 = vunpack.c.l.b16 %v2971
        %v3310 = vunpack.c.h.b16 %v2971
        %v3311 = vunpack.c.l.b16 %v2972
        %v3312 = vunpack.c.h.b16 %v2972
        %v3313 = vunpack.c.l.b16 %v2973
        %v3314 = vunpack.c.h.b16 %v2973
        %v3315 = vunpack.c.l.b16 %v2974
        %v3316 = vunpack.c.h.b16 %v2974
        %v3317 = vunpack.c.l.b16 %v2975
        %v3318 = vunpack.c.h.b16 %v2975
        %v3319 = vunpack.c.l.b16 %v2976
        %v3320 = vunpack.c.h.b16 %v2976
        %v3321 = vunpack.c.l.b16 %v2977
        %v3322 = vunpack.c.h.b16 %v2977
        %v3323 = vunpack.c.l.b16 %v2978
        %v3324 = vunpack.c.h.b16 %v2978
        %v3325 = vunpack.c.l.b16 %v2979
        %v3326 = vunpack.c.h.b16 %v2979
        %v3327 = vunpack.c.l.b16 %v2980
        %v3328 = vunpack.c.h.b16 %v2980
        %v3329 = vunpack.c.l.b16 %v2981
        %v3330 = vunpack.c.h.b16 %v2981
        %v3331 = vunpack.c.l.b16 %v2982
        %v3332 = vunpack.c.h.b16 %v2982
        %v3333 = vunpack.c.l.b16 %v2983
        %v3334 = vunpack.c.h.b16 %v2983
        %v3335 = vunpack.c.l.b16 %v2984
        %v3336 = vunpack.c.h.b16 %v2984
        %v3337 = vunpack.c.l.b16 %v2985
        %v3338 = vunpack.c.h.b16 %v2985
        %v3339 = vunpack.c.l.b16 %v2986
        %v3340 = vunpack.c.h.b16 %v2986
        %v3341 = vunpack.c.l.b16 %v2987
        %v3342 = vunpack.c.h.b16 %v2987
        %v3343 = vunpack.c.l.b16 %v2988
        %v3344 = vunpack.c.h.b16 %v2988
        %v3345 = vunpack.c.l.b16 %v2989
        %v3346 = vunpack.c.h.b16 %v2989
        %v3347 = vunpack.c.l.b16 %v2990
        %v3348 = vunpack.c.h.b16 %v2990
        %v3349 = vunpack.c.l.b16 %v2991
        %v3350 = vunpack.c.h.b16 %v2991
        %v3351 = vunpack.c.l.b16 %v2992
        %v3352 = vunpack.c.h.b16 %v2992
        %v3353 = vunpack.c.l.b16 %v2993
        %v3354 = vunpack.c.h.b16 %v2993
        %v3355 = vunpack.c.l.b16 %v2994
        %v3356 = vunpack.c.h.b16 %v2994
        %v3357 = vunpack.c.l.b16 %v2995
        %v3358 = vunpack.c.h.b16 %v2995
        %v3359 = vunpack.c.l.b16 %v2996
        %v3360 = vunpack.c.h.b16 %v2996
        %v3361 = vunpack.c.l.b16 %v2997
        %v3362 = vunpack.c.h.b16 %v2997
        %v3363 = vunpack.c.l.b16 %v2998
        %v3364 = vunpack.c.h.b16 %v2998
        %v3365 = vunpack.c.l.b16 %v2999
        %v3366 = vunpack.c.h.b16 %v2999
        %v3367 = vunpack.c.l.b16 %v3000
        %v3368 = vunpack.c.h.b16 %v3000
        %v3369 = vunpack.c.l.b16 %v3001
        %v3370 = vunpack.c.h.b16 %v3001
        %v3371 = vunpack.c.l.b16 %v3002
        %v3372 = vunpack.c.h.b16 %v3002
        %v3373 = vunpack.c.l.b16 %v3003
        %v3374 = vunpack.c.h.b16 %v3003
        %v3375 = vunpack.c.l.b16 %v3004
        %v3376 = vunpack.c.h.b16 %v3004
        %v3377 = vunpack.c.l.b16 %v3005
        %v3378 = vunpack.c.h.b16 %v3005
        %v3379 = vunpack.c.l.b16 %v3006
        %v3380 = vunpack.c.h.b16 %v3006
        %v3381 = vunpack.c.l.b16 %v3007
        %v3382 = vunpack.c.h.b16 %v3007
        %v3383 = vunpack.c.l.b16 %v3008
        %v3384 = vunpack.c.h.b16 %v3008
        %v3385 = vunpack.c.l.b16 %v3009
        %v3386 = vunpack.c.h.b16 %v3009
        %v3387 = vunpack.c.l.b16 %v3010
        %v3388 = vunpack.c.h.b16 %v3010
        %v3389 = vunpack.c.l.b16 %v3011
        %v3390 = vunpack.c.h.b16 %v3011
        %v3391 = vunpack.c.l.b16 %v3012
        %v3392 = vunpack.c.h.b16 %v3012
        %v3393 = vunpack.c.l.b16 %v3013
        %v3394 = vunpack.c.h.b16 %v3013
        %v3395 = vunpack.c.l.b16 %v3014
        %v3396 = vunpack.c.h.b16 %v3014
        %v3397 = vunpack.c.l.b16 %v3015
        %v3398 = vunpack.c.h.b16 %v3015
        %v3399 = vunpack.c.l.b16 %v3016
        %v3400 = vunpack.c.h.b16 %v3016
        %v3401 = vpack.c.b16 %v3149, %v3145
        %v3402 = vpack.c.b16 %v3150, %v3146
        %v3403 = vpack.c.b16 %v3151, %v3147
        %v3404 = vpack.c.b16 %v3152, %v3148
        %v3405 = vpack.c.b16 %v3157, %v3153
        %v3406 = vpack.c.b16 %v3158, %v3154
        %v3407 = vpack.c.b16 %v3159, %v3155
        %v3408 = vpack.c.b16 %v3160, %v3156
        %v3409 = vpack.c.b16 %v3165, %v3161
        %v3410 = vpack.c.b16 %v3166, %v3162
        %v3411 = vpack.c.b16 %v3167, %v3163
        %v3412 = vpack.c.b16 %v3168, %v3164
        %v3413 = vpack.c.b16 %v3173, %v3169
        %v3414 = vpack.c.b16 %v3174, %v3170
        %v3415 = vpack.c.b16 %v3175, %v3171
        %v3416 = vpack.c.b16 %v3176, %v3172
        %v3417 = vpack.c.b16 %v3181, %v3177
        %v3418 = vpack.c.b16 %v3182, %v3178
        %v3419 = vpack.c.b16 %v3183, %v3179
        %v3420 = vpack.c.b16 %v3184, %v3180
        %v3421 = vpack.c.b16 %v3189, %v3185
        %v3422 = vpack.c.b16 %v3190, %v3186
        %v3423 = vpack.c.b16 %v3191, %v3187
        %v3424 = vpack.c.b16 %v3192, %v3188
        %v3425 = vpack.c.b16 %v3197, %v3193
        %v3426 = vpack.c.b16 %v3198, %v3194
        %v3427 = vpack.c.b16 %v3199, %v3195
        %v3428 = vpack.c.b16 %v3200, %v3196
        %v3429 = vpack.c.b16 %v3205, %v3201
        %v3430 = vpack.c.b16 %v3206, %v3202
        %v3431 = vpack.c.b16 %v3207, %v3203
        %v3432 = vpack.c.b16 %v3208, %v3204
        %v3433 = vpack.c.b16 %v3213, %v3209
        %v3434 = vpack.c.b16 %v3214, %v3210
        %v3435 = vpack.c.b16 %v3215, %v3211
        %v3436 = vpack.c.b16 %v3216, %v3212
        %v3437 = vpack.c.b16 %v3221, %v3217
        %v3438 = vpack.c.b16 %v3222, %v3218
        %v3439 = vpack.c.b16 %v3223, %v3219
        %v3440 = vpack.c.b16 %v3224, %v3220
        %v3441 = vpack.c.b16 %v3229, %v3225
        %v3442 = vpack.c.b16 %v3230, %v3226
        %v3443 = vpack.c.b16 %v3231, %v3227
        %v3444 = vpack.c.b16 %v3232, %v3228
        %v3445 = vpack.c.b16 %v3237, %v3233
        %v3446 = vpack.c.b16 %v3238, %v3234
        %v3447 = vpack.c.b16 %v3239, %v3235
        %v3448 = vpack.c.b16 %v3240, %v3236
        %v3449 = vpack.c.b16 %v3245, %v3241
        %v3450 = vpack.c.b16 %v3246, %v3242
        %v3451 = vpack.c.b16 %v3247, %v3243
        %v3452 = vpack.c.b16 %v3248, %v3244
        %v3453 = vpack.c.b16 %v3253, %v3249
        %v3454 = vpack.c.b16 %v3254, %v3250
        %v3455 = vpack.c.b16 %v3255, %v3251
        %v3456 = vpack.c.b16 %v3256, %v3252
        %v3457 = vpack.c.b16 %v3261, %v3257
        %v3458 = vpack.c.b16 %v3262, %v3258
        %v3459 = vpack.c.b16 %v3263, %v3259
        %v3460 = vpack.c.b16 %v3264, %v3260
        %v3461 = vpack.c.b16 %v3269, %v3265
        %v3462 = vpack.c.b16 %v3270, %v3266
        %v3463 = vpack.c.b16 %v3271, %v3267
        %v3464 = vpack.c.b16 %v3272, %v3268
        %v3465 = vpack.c.b16 %v3277, %v3273
        %v3466 = vpack.c.b16 %v3278, %v3274
        %v3467 = vpack.c.b16 %v3279, %v3275
        %v3468 = vpack.c.b16 %v3280, %v3276
        %v3469 = vpack.c.b16 %v3285, %v3281
        %v3470 = vpack.c.b16 %v3286, %v3282
        %v3471 = vpack.c.b16 %v3287, %v3283
        %v3472 = vpack.c.b16 %v3288, %v3284
        %v3473 = vpack.c.b16 %v3293, %v3289
        %v3474 = vpack.c.b16 %v3294, %v3290
        %v3475 = vpack.c.b16 %v3295, %v3291
        %v3476 = vpack.c.b16 %v3296, %v3292
        %v3477 = vpack.c.b16 %v3301, %v3297
        %v3478 = vpack.c.b16 %v3302, %v3298
        %v3479 = vpack.c.b16 %v3303, %v3299
        %v3480 = vpack.c.b16 %v3304, %v3300
        %v3481 = vpack.c.b16 %v3309, %v3305
        %v3482 = vpack.c.b16 %v3310, %v3306
        %v3483 = vpack.c.b16 %v3311, %v3307
        %v3484 = vpack.c.b16 %v3312, %v3308
        %v3485 = vpack.c.b16 %v3317, %v3313
        %v3486 = vpack.c.b16 %v3318, %v3314
        %v3487 = vpack.c.b16 %v3319, %v3315
        %v3488 = vpack.c.b16 %v3320, %v3316
        %v3489 = vpack.c.b16 %v3325, %v3321
        %v3490 = vpack.c.b16 %v3326, %v3322
        %v3491 = vpack.c.b16 %v3327, %v3323
        %v3492 = vpack.c.b16 %v3328, %v3324
        %v3493 = vpack.c.b16 %v3333, %v3329
        %v3494 = vpack.c.b16 %v3334, %v3330
        %v3495 = vpack.c.b16 %v3335, %v3331
        %v3496 = vpack.c.b16 %v3336, %v3332
        %v3497 = vpack.c.b16 %v3341, %v3337
        %v3498 = vpack.c.b16 %v3342, %v3338
        %v3499 = vpack.c.b16 %v3343, %v3339
        %v3500 = vpack.c.b16 %v3344, %v3340
        %v3501 = vpack.c.b16 %v3349, %v3345
        %v3502 = vpack.c.b16 %v3350, %v3346
        %v3503 = vpack.c.b16 %v3351, %v3347
        %v3504 = vpack.c.b16 %v3352, %v3348
        %v3505 = vpack.c.b16 %v3357, %v3353
        %v3506 = vpack.c.b16 %v3358, %v3354
        %v3507 = vpack.c.b16 %v3359, %v3355
        %v3508 = vpack.c.b16 %v3360, %v3356
        %v3509 = vpack.c.b16 %v3365, %v3361
        %v3510 = vpack.c.b16 %v3366, %v3362
        %v3511 = vpack.c.b16 %v3367, %v3363
        %v3512 = vpack.c.b16 %v3368, %v3364
        %v3513 = vpack.c.b16 %v3373, %v3369
        %v3514 = vpack.c.b16 %v3374, %v3370
        %v3515 = vpack.c.b16 %v3375, %v3371
        %v3516 = vpack.c.b16 %v3376, %v3372
        %v3517 = vpack.c.b16 %v3381, %v3377
        %v3518 = vpack.c.b16 %v3382, %v3378
        %v3519 = vpack.c.b16 %v3383, %v3379
        %v3520 = vpack.c.b16 %v3384, %v3380
        %v3521 = vpack.c.b16 %v3389, %v3385
        %v3522 = vpack.c.b16 %v3390, %v3386
        %v3523 = vpack.c.b16 %v3391, %v3387
        %v3524 = vpack.c.b16 %v3392, %v3388
        %v3525 = vpack.c.b16 %v3397, %v3393
        %v3526 = vpack.c.b16 %v3398, %v3394
        %v3527 = vpack.c.b16 %v3399, %v3395
        %v3528 = vpack.c.b16 %v3400, %v3396
        %3657 = vmatprep.subr.bf16.mxu0 %v3402
        %3658 = vmatpush1.bf16.msra.mxu0 %v3401
        %3659 = vmatprep.subr.bf16.mxu0 %v3406
        %3660 = vmatpush1.bf16.msra.mxu0 %v3405
        %3661 = vmatprep.subr.bf16.mxu0 %v3410
        %3662 = vmatpush1.bf16.msra.mxu0 %v3409
        %3663 = vmatprep.subr.bf16.mxu0 %v3414
        %3664 = vmatpush1.bf16.msra.mxu0 %v3413
        %3665 = vmatprep.subr.bf16.mxu0 %v3418
        %3666 = vmatpush1.bf16.msra.mxu0 %v3417
        %3667 = vmatprep.subr.bf16.mxu0 %v3422
        %3668 = vmatpush1.bf16.msra.mxu0 %v3421
        %3669 = vmatprep.subr.bf16.mxu0 %v3426
        %3670 = vmatpush1.bf16.msra.mxu0 %v3425
        %3671 = vmatprep.subr.bf16.mxu0 %v3430
        %3672 = vmatpush1.bf16.msra.mxu0 %v3429
        %3673 = vmatprep.subr.bf16.mxu0 %v3434
        %3674 = vmatpush1.bf16.msra.mxu0 %v3433
        %3675 = vmatprep.subr.bf16.mxu0 %v3438
        %3676 = vmatpush1.bf16.msra.mxu0 %v3437
        %3677 = vmatprep.subr.bf16.mxu0 %v3442
        %3678 = vmatpush1.bf16.msra.mxu0 %v3441
        %3679 = vmatprep.subr.bf16.mxu0 %v3446
        %3680 = vmatpush1.bf16.msra.mxu0 %v3445
        %3681 = vmatprep.subr.bf16.mxu0 %v3450
        %3682 = vmatpush1.bf16.msra.mxu0 %v3449
        %3683 = vmatprep.subr.bf16.mxu0 %v3454
        %3684 = vmatpush1.bf16.msra.mxu0 %v3453
        %3685 = vmatprep.subr.bf16.mxu0 %v3458
        %3686 = vmatpush1.bf16.msra.mxu0 %v3457
        %3687 = vmatprep.subr.bf16.mxu0 %v3462
        %3688 = vmatpush1.bf16.msra.mxu0 %v3461
        %3689 = vmatprep.mubr.bf16.mxu0 %v2886
        %3690 = vmatmul.mubr.bf16.gmra.mrb[0].mxu0 %v2885
        %v3691 = vpop.f32.mrb[0].mxu0
        %v3692 = vadd.f32 0.0, %v3691
        %v3693 = vpop.f32.mrb[0].mxu0
        %v3694 = vadd.f32 0.0, %v3693
        %v3695 = vpop.f32.mrb[0].mxu0
        %v3696 = vpop.f32.mrb[0].mxu0
        %3697 = vdwg.mxu0
        %3698 = vmatprep.subr.bf16.mxu0 %v3466
        %3699 = vmatpush1.bf16.msra.mxu0 %v3465
        %3700 = vmatprep.subr.bf16.mxu0 %v3470
        %3701 = vmatpush1.bf16.msra.mxu0 %v3469
        %3702 = vmatprep.subr.bf16.mxu0 %v3474
        %3703 = vmatpush1.bf16.msra.mxu0 %v3473
        %3704 = vmatprep.subr.bf16.mxu0 %v3478
        %3705 = vmatpush1.bf16.msra.mxu0 %v3477
        %3706 = vmatprep.subr.bf16.mxu0 %v3482
        %3707 = vmatpush1.bf16.msra.mxu0 %v3481
        %3708 = vmatprep.subr.bf16.mxu0 %v3486
        %3709 = vmatpush1.bf16.msra.mxu0 %v3485
        %3710 = vmatprep.subr.bf16.mxu0 %v3490
        %3711 = vmatpush1.bf16.msra.mxu0 %v3489
        %3712 = vmatprep.subr.bf16.mxu0 %v3494
        %3713 = vmatpush1.bf16.msra.mxu0 %v3493
        %3714 = vmatprep.subr.bf16.mxu0 %v3498
        %3715 = vmatpush1.bf16.msra.mxu0 %v3497
        %3716 = vmatprep.subr.bf16.mxu0 %v3502
        %3717 = vmatpush1.bf16.msra.mxu0 %v3501
        %3718 = vmatprep.subr.bf16.mxu0 %v3506
        %3719 = vmatpush1.bf16.msra.mxu0 %v3505
        %3720 = vmatprep.subr.bf16.mxu0 %v3510
        %3721 = vmatpush1.bf16.msra.mxu0 %v3509
        %3722 = vmatprep.subr.bf16.mxu0 %v3514
        %3723 = vmatpush1.bf16.msra.mxu0 %v3513
        %3724 = vmatprep.subr.bf16.mxu0 %v3518
        %3725 = vmatpush1.bf16.msra.mxu0 %v3517
        %3726 = vmatprep.subr.bf16.mxu0 %v3522
        %3727 = vmatpush1.bf16.msra.mxu0 %v3521
        %3728 = vmatprep.subr.bf16.mxu0 %v3526
        %3729 = vmatpush1.bf16.msra.mxu0 %v3525
        %3730 = vmatprep.mubr.bf16.mxu0 %v2888
        %3731 = vmatmul.mubr.bf16.gmra.mrb[0].mxu0 %v2887
        %v3732 = vpop.f32.mrb[0].mxu0
        %v3733 = vadd.f32 %v3692, %v3732
        %v3734 = vpop.f32.mrb[0].mxu0
        %v3735 = vadd.f32 %v3694, %v3734
        %v3736 = vpop.f32.mrb[0].mxu0
        %v3737 = vpop.f32.mrb[0].mxu0
        %3738 = vdwg.mxu0
        %3739 = vmatprep.subr.bf16.mxu0 %v3404
        %3740 = vmatpush1.bf16.msra.mxu0 %v3403
        %3741 = vmatprep.subr.bf16.mxu0 %v3408
        %3742 = vmatpush1.bf16.msra.mxu0 %v3407
        %3743 = vmatprep.subr.bf16.mxu0 %v3412
        %3744 = vmatpush1.bf16.msra.mxu0 %v3411
        %3745 = vmatprep.subr.bf16.mxu0 %v3416
        %3746 = vmatpush1.bf16.msra.mxu0 %v3415
        %3747 = vmatprep.subr.bf16.mxu0 %v3420
        %3748 = vmatpush1.bf16.msra.mxu0 %v3419
        %3749 = vmatprep.subr.bf16.mxu0 %v3424
        %3750 = vmatpush1.bf16.msra.mxu0 %v3423
        %3751 = vmatprep.subr.bf16.mxu0 %v3428
        %3752 = vmatpush1.bf16.msra.mxu0 %v3427
        %3753 = vmatprep.subr.bf16.mxu0 %v3432
        %3754 = vmatpush1.bf16.msra.mxu0 %v3431
        %3755 = vmatprep.subr.bf16.mxu0 %v3436
        %3756 = vmatpush1.bf16.msra.mxu0 %v3435
        %3757 = vmatprep.subr.bf16.mxu0 %v3440
        %3758 = vmatpush1.bf16.msra.mxu0 %v3439
        %3759 = vmatprep.subr.bf16.mxu0 %v3444
        %3760 = vmatpush1.bf16.msra.mxu0 %v3443
        %3761 = vmatprep.subr.bf16.mxu0 %v3448
        %3762 = vmatpush1.bf16.msra.mxu0 %v3447
        %3763 = vmatprep.subr.bf16.mxu0 %v3452
        %3764 = vmatpush1.bf16.msra.mxu0 %v3451
        %3765 = vmatprep.subr.bf16.mxu0 %v3456
        %3766 = vmatpush1.bf16.msra.mxu0 %v3455
        %3767 = vmatprep.subr.bf16.mxu0 %v3460
        %3768 = vmatpush1.bf16.msra.mxu0 %v3459
        %3769 = vmatprep.subr.bf16.mxu0 %v3464
        %3770 = vmatpush1.bf16.msra.mxu0 %v3463
        %3771 = vmatprep.mubr.bf16.mxu0 %v2886
        %3772 = vmatmul.mubr.bf16.gmra.mrb[0].mxu0 %v2885
        %v3773 = vpop.f32.mrb[0].mxu0
        %v3774 = vadd.f32 0.0, %v3773
        %v3775 = vpop.f32.mrb[0].mxu0
        %v3776 = vadd.f32 0.0, %v3775
        %v3777 = vpop.f32.mrb[0].mxu0
        %v3778 = vpop.f32.mrb[0].mxu0
        %3779 = vdwg.mxu0
        %3780 = vmatprep.subr.bf16.mxu0 %v3468
        %3781 = vmatpush1.bf16.msra.mxu0 %v3467
        %3782 = vmatprep.subr.bf16.mxu0 %v3472
        %3783 = vmatpush1.bf16.msra.mxu0 %v3471
        %3784 = vmatprep.subr.bf16.mxu0 %v3476
        %3785 = vmatpush1.bf16.msra.mxu0 %v3475
        %3786 = vmatprep.subr.bf16.mxu0 %v3480
        %3787 = vmatpush1.bf16.msra.mxu0 %v3479
        %3788 = vmatprep.subr.bf16.mxu0 %v3484
        %3789 = vmatpush1.bf16.msra.mxu0 %v3483
        %3790 = vmatprep.subr.bf16.mxu0 %v3488
        %3791 = vmatpush1.bf16.msra.mxu0 %v3487
        %3792 = vmatprep.subr.bf16.mxu0 %v3492
        %3793 = vmatpush1.bf16.msra.mxu0 %v3491
        %3794 = vmatprep.subr.bf16.mxu0 %v3496
        %3795 = vmatpush1.bf16.msra.mxu0 %v3495
        %3796 = vmatprep.subr.bf16.mxu0 %v3500
        %3797 = vmatpush1.bf16.msra.mxu0 %v3499
        %3798 = vmatprep.subr.bf16.mxu0 %v3504
        %3799 = vmatpush1.bf16.msra.mxu0 %v3503
        %3800 = vmatprep.subr.bf16.mxu0 %v3508
        %3801 = vmatpush1.bf16.msra.mxu0 %v3507
        %3802 = vmatprep.subr.bf16.mxu0 %v3512
        %3803 = vmatpush1.bf16.msra.mxu0 %v3511
        %3804 = vmatprep.subr.bf16.mxu0 %v3516
        %3805 = vmatpush1.bf16.msra.mxu0 %v3515
        %3806 = vmatprep.subr.bf16.mxu0 %v3520
        %3807 = vmatpush1.bf16.msra.mxu0 %v3519
        %3808 = vmatprep.subr.bf16.mxu0 %v3524
        %3809 = vmatpush1.bf16.msra.mxu0 %v3523
        %3810 = vmatprep.subr.bf16.mxu0 %v3528
        %3811 = vmatpush1.bf16.msra.mxu0 %v3527
        %3812 = vmatprep.mubr.bf16.mxu0 %v2888
        %3813 = vmatmul.mubr.bf16.gmra.mrb[0].mxu0 %v2887
        %v3814 = vpop.f32.mrb[0].mxu0
        %v3815 = vadd.f32 %v3774, %v3814
        %v3816 = vpop.f32.mrb[0].mxu0
        %v3817 = vadd.f32 %v3776, %v3816
        %v3818 = vpop.f32.mrb[0].mxu0
        %v3819 = vpop.f32.mrb[0].mxu0
        %3820 = vdwg.mxu0
        %v3825 = vcombine.low %v3733, %v3735
        %v3826 = vcombine.low %v3815, %v3817
        %v3828 = vunpack.c.l.s4 1983009808
        %v3829 = vunpack.c.0.s8 %v3828
        %v3830 = vlaneseq
        %v3831 = vshrl.u32 %v3830, 7
        %v3832 = vsub.s32 %v3829, %v3831
        %v3833 = vrot.slane %v3825, %v3832
        %v3835 = vunpack.c.l.s4 1983009808
        %v3836 = vunpack.c.0.s8 %v3835
        %v3837 = vlaneseq
        %v3838 = vshrl.u32 %v3837, 7
        %v3839 = vsub.s32 %v3836, %v3838
        %v3840 = vrot.slane %v3826, %v3839
        %v3841 = vcombine.low %v3833, %v3840
        %v3843 = vadd.f32 %v2884, %v3841
        %3844 = vst [vmem:[#allocation2] sm:$0xff] %v3843
        %p3845 = scmp.eq.s32.totalorder %s24, 2
        // Predicated region
        $region77: #{knot_classifier_forward.1} parent=47 // pred_check
          %p3846 = pneg %p3845
        $region78: #{knot_classifier_forward.1} parent=47 // pred_check_branch
          %3848 = sbr.rel (%p3846) target = $region80
        $region79: #{knot_classifier_forward.1} parent=47 // pred_region
          %v3849 = vld [vmem:[#allocation2] sm:$0xff]
          %v3850 = vld [vmem:[#allocation9] sm:$0xf]
          %v3852 = vlaneseq
          %v3853 = vshrl.u32 %v3852, 7
          %v3854 = vsub.s32 0, %v3853
          %v3855 = vrot.slane %v3850, %v3854
          %v3856 = vlaneseq
          %v3857 = vshrl.u32 %v3856, 7
          %v3858 = vsub.s32 1, %v3857
          %v3859 = vrot.slane %v3850, %v3858
          %v3860 = vlaneseq
          %v3861 = vshrl.u32 %v3860, 7
          %v3862 = vsub.s32 2, %v3861
          %v3863 = vrot.slane %v3850, %v3862
          %v3864 = vlaneseq
          %v3865 = vshrl.u32 %v3864, 7
          %v3866 = vsub.s32 3, %v3865
          %v3867 = vrot.slane %v3850, %v3866
          %v3868 = vcombine.low %v3855, %v3859
          %v3869 = vcombine.low %v3863, %v3867
          %v3871 = vunpack.c.l.s4 1983009808
          %v3872 = vunpack.c.0.s8 %v3871
          %v3873 = vlaneseq
          %v3874 = vshrl.u32 %v3873, 7
          %v3875 = vsub.s32 %v3872, %v3874
          %v3876 = vrot.slane %v3868, %v3875
          %v3878 = vunpack.c.l.s4 1983009808
          %v3879 = vunpack.c.0.s8 %v3878
          %v3880 = vlaneseq
          %v3881 = vshrl.u32 %v3880, 7
          %v3882 = vsub.s32 %v3879, %v3881
          %v3883 = vrot.slane %v3869, %v3882
          %v3884 = vcombine.low %v3876, %v3883
          %v3886 = vadd.f32 %v3849, %v3884
          %v3887 = vmax.f32 %v3886, 0.0
          %v3889 = vcombine.high %v3887, %v3887
          %v3891 = vunpack.c.l.s4 1983009808
          %v3892 = vunpack.c.0.s8 %v3891
          %v3893 = vlaneseq
          %v3894 = vshrl.u32 %v3893, 7
          %v3895 = vsub.s32 %v3892, %v3894
          %v3896 = vrot.slane %v3887, %v3895
          %v3898 = vunpack.c.l.s4 1983009808
          %v3899 = vunpack.c.0.s8 %v3898
          %v3900 = vlaneseq
          %v3901 = vshrl.u32 %v3900, 7
          %v3902 = vsub.s32 %v3899, %v3901
          %v3903 = vrot.slane %v3889, %v3902
          %v3904 = vcombine.high %v3896, %v3896
          %v3905 = vcombine.high %v3903, %v3903
          %v3910 = vpack.c.bf16 %v3896, %v3896
          %v3911 = vpack.c.bf16 %v3904, %v3904
          %v3912 = vpack.c.bf16 %v3903, %v3903
          %v3913 = vpack.c.bf16 %v3905, %v3905
          %v3914 = vld [vmem:[#allocation10] sm:$0xf]
          %v3915 = vld [vmem:[#allocation10 + $0x4] sm:$0xf]
          %v3916 = vld [vmem:[#allocation10 + $0x8] sm:$0xf]
          %v3917 = vld [vmem:[#allocation10 + $0xc] sm:$0xf]
          %v3918 = vld [vmem:[#allocation10 + $0x10] sm:$0xf]
          %v3919 = vld [vmem:[#allocation10 + $0x14] sm:$0xf]
          %v3920 = vld [vmem:[#allocation10 + $0x18] sm:$0xf]
          %v3921 = vld [vmem:[#allocation10 + $0x1c] sm:$0xf]
          %v3922 = vld [vmem:[#allocation10 + $0x20] sm:$0xf]
          %v3923 = vld [vmem:[#allocation10 + $0x24] sm:$0xf]
          %v3924 = vld [vmem:[#allocation10 + $0x28] sm:$0xf]
          %v3925 = vld [vmem:[#allocation10 + $0x2c] sm:$0xf]
          %v3926 = vld [vmem:[#allocation10 + $0x30] sm:$0xf]
          %v3927 = vld [vmem:[#allocation10 + $0x34] sm:$0xf]
          %v3928 = vld [vmem:[#allocation10 + $0x38] sm:$0xf]
          %v3929 = vld [vmem:[#allocation10 + $0x3c] sm:$0xf]
          %v3930 = vld [vmem:[#allocation10 + $0x40] sm:$0xf]
          %v3931 = vld [vmem:[#allocation10 + $0x44] sm:$0xf]
          %v3932 = vld [vmem:[#allocation10 + $0x48] sm:$0xf]
          %v3933 = vld [vmem:[#allocation10 + $0x4c] sm:$0xf]
          %v3934 = vld [vmem:[#allocation10 + $0x50] sm:$0xf]
          %v3935 = vld [vmem:[#allocation10 + $0x54] sm:$0xf]
          %v3936 = vld [vmem:[#allocation10 + $0x58] sm:$0xf]
          %v3937 = vld [vmem:[#allocation10 + $0x5c] sm:$0xf]
          %v3938 = vld [vmem:[#allocation10 + $0x60] sm:$0xf]
          %v3939 = vld [vmem:[#allocation10 + $0x64] sm:$0xf]
          %v3940 = vld [vmem:[#allocation10 + $0x68] sm:$0xf]
          %v3941 = vld [vmem:[#allocation10 + $0x6c] sm:$0xf]
          %v3942 = vld [vmem:[#allocation10 + $0x70] sm:$0xf]
          %v3943 = vld [vmem:[#allocation10 + $0x74] sm:$0xf]
          %v3944 = vld [vmem:[#allocation10 + $0x78] sm:$0xf]
          %v3945 = vld [vmem:[#allocation10 + $0x7c] sm:$0xf]
          %v3946 = vld [vmem:[#allocation10 + $0x80] sm:$0xf]
          %v3947 = vld [vmem:[#allocation10 + $0x84] sm:$0xf]
          %v3948 = vld [vmem:[#allocation10 + $0x88] sm:$0xf]
          %v3949 = vld [vmem:[#allocation10 + $0x8c] sm:$0xf]
          %v3950 = vld [vmem:[#allocation10 + $0x90] sm:$0xf]
          %v3951 = vld [vmem:[#allocation10 + $0x94] sm:$0xf]
          %v3952 = vld [vmem:[#allocation10 + $0x98] sm:$0xf]
          %v3953 = vld [vmem:[#allocation10 + $0x9c] sm:$0xf]
          %v3954 = vld [vmem:[#allocation10 + $0xa0] sm:$0xf]
          %v3955 = vld [vmem:[#allocation10 + $0xa4] sm:$0xf]
          %v3956 = vld [vmem:[#allocation10 + $0xa8] sm:$0xf]
          %v3957 = vld [vmem:[#allocation10 + $0xac] sm:$0xf]
          %v3958 = vld [vmem:[#allocation10 + $0xb0] sm:$0xf]
          %v3959 = vld [vmem:[#allocation10 + $0xb4] sm:$0xf]
          %v3960 = vld [vmem:[#allocation10 + $0xb8] sm:$0xf]
          %v3961 = vld [vmem:[#allocation10 + $0xbc] sm:$0xf]
          %v3962 = vld [vmem:[#allocation10 + $0xc0] sm:$0xf]
          %v3963 = vld [vmem:[#allocation10 + $0xc4] sm:$0xf]
          %v3964 = vld [vmem:[#allocation10 + $0xc8] sm:$0xf]
          %v3965 = vld [vmem:[#allocation10 + $0xcc] sm:$0xf]
          %v3966 = vld [vmem:[#allocation10 + $0xd0] sm:$0xf]
          %v3967 = vld [vmem:[#allocation10 + $0xd4] sm:$0xf]
          %v3968 = vld [vmem:[#allocation10 + $0xd8] sm:$0xf]
          %v3969 = vld [vmem:[#allocation10 + $0xdc] sm:$0xf]
          %v3970 = vld [vmem:[#allocation10 + $0xe0] sm:$0xf]
          %v3971 = vld [vmem:[#allocation10 + $0xe4] sm:$0xf]
          %v3972 = vld [vmem:[#allocation10 + $0xe8] sm:$0xf]
          %v3973 = vld [vmem:[#allocation10 + $0xec] sm:$0xf]
          %v3974 = vld [vmem:[#allocation10 + $0xf0] sm:$0xf]
          %v3975 = vld [vmem:[#allocation10 + $0xf4] sm:$0xf]
          %v3976 = vld [vmem:[#allocation10 + $0xf8] sm:$0xf]
          %v3977 = vld [vmem:[#allocation10 + $0xfc] sm:$0xf]
          %v3978 = vld [vmem:[#allocation12] sm:$0x1]
          %v3980 = vlaneseq
          %v3981 = vshrl.u32 %v3980, 7
          %v3982 = vsub.s32 0, %v3981
          %v3983 = vrot.slane %v3978, %v3982
          %v4049 = vunpack.c.l.b16 %v3914
          %v4050 = vunpack.c.l.b16 %v3915
          %v4051 = vunpack.c.l.b16 %v3916
          %v4052 = vunpack.c.l.b16 %v3917
          %v4053 = vunpack.c.l.b16 %v3918
          %v4054 = vunpack.c.l.b16 %v3919
          %v4055 = vunpack.c.l.b16 %v3920
          %v4056 = vunpack.c.l.b16 %v3921
          %v4057 = vunpack.c.l.b16 %v3922
          %v4058 = vunpack.c.l.b16 %v3923
          %v4059 = vunpack.c.l.b16 %v3924
          %v4060 = vunpack.c.l.b16 %v3925
          %v4061 = vunpack.c.l.b16 %v3926
          %v4062 = vunpack.c.l.b16 %v3927
          %v4063 = vunpack.c.l.b16 %v3928
          %v4064 = vunpack.c.l.b16 %v3929
          %v4065 = vunpack.c.l.b16 %v3930
          %v4066 = vunpack.c.l.b16 %v3931
          %v4067 = vunpack.c.l.b16 %v3932
          %v4068 = vunpack.c.l.b16 %v3933
          %v4069 = vunpack.c.l.b16 %v3934
          %v4070 = vunpack.c.l.b16 %v3935
          %v4071 = vunpack.c.l.b16 %v3936
          %v4072 = vunpack.c.l.b16 %v3937
          %v4073 = vunpack.c.l.b16 %v3938
          %v4074 = vunpack.c.l.b16 %v3939
          %v4075 = vunpack.c.l.b16 %v3940
          %v4076 = vunpack.c.l.b16 %v3941
          %v4077 = vunpack.c.l.b16 %v3942
          %v4078 = vunpack.c.l.b16 %v3943
          %v4079 = vunpack.c.l.b16 %v3944
          %v4080 = vunpack.c.l.b16 %v3945
          %v4081 = vunpack.c.l.b16 %v3946
          %v4082 = vunpack.c.l.b16 %v3947
          %v4083 = vunpack.c.l.b16 %v3948
          %v4084 = vunpack.c.l.b16 %v3949
          %v4085 = vunpack.c.l.b16 %v3950
          %v4086 = vunpack.c.l.b16 %v3951
          %v4087 = vunpack.c.l.b16 %v3952
          %v4088 = vunpack.c.l.b16 %v3953
          %v4089 = vunpack.c.l.b16 %v3954
          %v4090 = vunpack.c.l.b16 %v3955
          %v4091 = vunpack.c.l.b16 %v3956
          %v4092 = vunpack.c.l.b16 %v3957
          %v4093 = vunpack.c.l.b16 %v3958
          %v4094 = vunpack.c.l.b16 %v3959
          %v4095 = vunpack.c.l.b16 %v3960
          %v4096 = vunpack.c.l.b16 %v3961
          %v4097 = vunpack.c.l.b16 %v3962
          %v4098 = vunpack.c.l.b16 %v3963
          %v4099 = vunpack.c.l.b16 %v3964
          %v4100 = vunpack.c.l.b16 %v3965
          %v4101 = vunpack.c.l.b16 %v3966
          %v4102 = vunpack.c.l.b16 %v3967
          %v4103 = vunpack.c.l.b16 %v3968
          %v4104 = vunpack.c.l.b16 %v3969
          %v4105 = vunpack.c.l.b16 %v3970
          %v4106 = vunpack.c.l.b16 %v3971
          %v4107 = vunpack.c.l.b16 %v3972
          %v4108 = vunpack.c.l.b16 %v3973
          %v4109 = vunpack.c.l.b16 %v3974
          %v4110 = vunpack.c.l.b16 %v3975
          %v4111 = vunpack.c.l.b16 %v3976
          %v4112 = vunpack.c.l.b16 %v3977
          %v4113 = vpack.c.b16 %v4050, %v4049
          %v4114 = vpack.c.b16 %v4052, %v4051
          %v4115 = vpack.c.b16 %v4054, %v4053
          %v4116 = vpack.c.b16 %v4056, %v4055
          %v4117 = vpack.c.b16 %v4058, %v4057
          %v4118 = vpack.c.b16 %v4060, %v4059
          %v4119 = vpack.c.b16 %v4062, %v4061
          %v4120 = vpack.c.b16 %v4064, %v4063
          %v4121 = vpack.c.b16 %v4066, %v4065
          %v4122 = vpack.c.b16 %v4068, %v4067
          %v4123 = vpack.c.b16 %v4070, %v4069
          %v4124 = vpack.c.b16 %v4072, %v4071
          %v4125 = vpack.c.b16 %v4074, %v4073
          %v4126 = vpack.c.b16 %v4076, %v4075
          %v4127 = vpack.c.b16 %v4078, %v4077
          %v4128 = vpack.c.b16 %v4080, %v4079
          %v4129 = vpack.c.b16 %v4082, %v4081
          %v4130 = vpack.c.b16 %v4084, %v4083
          %v4131 = vpack.c.b16 %v4086, %v4085
          %v4132 = vpack.c.b16 %v4088, %v4087
          %v4133 = vpack.c.b16 %v4090, %v4089
          %v4134 = vpack.c.b16 %v4092, %v4091
          %v4135 = vpack.c.b16 %v4094, %v4093
          %v4136 = vpack.c.b16 %v4096, %v4095
          %v4137 = vpack.c.b16 %v4098, %v4097
          %v4138 = vpack.c.b16 %v4100, %v4099
          %v4139 = vpack.c.b16 %v4102, %v4101
          %v4140 = vpack.c.b16 %v4104, %v4103
          %v4141 = vpack.c.b16 %v4106, %v4105
          %v4142 = vpack.c.b16 %v4108, %v4107
          %v4143 = vpack.c.b16 %v4110, %v4109
          %v4144 = vpack.c.b16 %v4112, %v4111
          %4177 = vmatprep.subr.bf16.mxu0 0
          %4178 = vmatpush1.bf16.msra.mxu0 %v4113
          %4179 = vmatprep.subr.bf16.mxu0 0
          %4180 = vmatpush1.bf16.msra.mxu0 %v4114
          %4181 = vmatprep.subr.bf16.mxu0 0
          %4182 = vmatpush1.bf16.msra.mxu0 %v4115
          %4183 = vmatprep.subr.bf16.mxu0 0
          %4184 = vmatpush1.bf16.msra.mxu0 %v4116
          %4185 = vmatprep.subr.bf16.mxu0 0
          %4186 = vmatpush1.bf16.msra.mxu0 %v4117
          %4187 = vmatprep.subr.bf16.mxu0 0
          %4188 = vmatpush1.bf16.msra.mxu0 %v4118
          %4189 = vmatprep.subr.bf16.mxu0 0
          %4190 = vmatpush1.bf16.msra.mxu0 %v4119
          %4191 = vmatprep.subr.bf16.mxu0 0
          %4192 = vmatpush1.bf16.msra.mxu0 %v4120
          %4193 = vmatprep.subr.bf16.mxu0 0
          %4194 = vmatpush1.bf16.msra.mxu0 %v4121
          %4195 = vmatprep.subr.bf16.mxu0 0
          %4196 = vmatpush1.bf16.msra.mxu0 %v4122
          %4197 = vmatprep.subr.bf16.mxu0 0
          %4198 = vmatpush1.bf16.msra.mxu0 %v4123
          %4199 = vmatprep.subr.bf16.mxu0 0
          %4200 = vmatpush1.bf16.msra.mxu0 %v4124
          %4201 = vmatprep.subr.bf16.mxu0 0
          %4202 = vmatpush1.bf16.msra.mxu0 %v4125
          %4203 = vmatprep.subr.bf16.mxu0 0
          %4204 = vmatpush1.bf16.msra.mxu0 %v4126
          %4205 = vmatprep.subr.bf16.mxu0 0
          %4206 = vmatpush1.bf16.msra.mxu0 %v4127
          %4207 = vmatprep.subr.bf16.mxu0 0
          %4208 = vmatpush1.bf16.msra.mxu0 %v4128
          %4209 = vmatprep.mubr.bf16.mxu0 %v3911
          %4210 = vmatmul.mubr.bf16.gmra.mrb[0].mxu0 %v3910
          %v4211 = vpop.f32.mrb[0].mxu0
          %v4212 = vadd.f32 %v3983, %v4211
          %v4213 = vpop.f32.mrb[0].mxu0
          %v4214 = vpop.f32.mrb[0].mxu0
          %v4215 = vpop.f32.mrb[0].mxu0
          %4216 = vdwg.mxu0
          %4217 = vmatprep.subr.bf16.mxu0 0
          %4218 = vmatpush1.bf16.msra.mxu0 %v4129
          %4219 = vmatprep.subr.bf16.mxu0 0
          %4220 = vmatpush1.bf16.msra.mxu0 %v4130
          %4221 = vmatprep.subr.bf16.mxu0 0
          %4222 = vmatpush1.bf16.msra.mxu0 %v4131
          %4223 = vmatprep.subr.bf16.mxu0 0
          %4224 = vmatpush1.bf16.msra.mxu0 %v4132
          %4225 = vmatprep.subr.bf16.mxu0 0
          %4226 = vmatpush1.bf16.msra.mxu0 %v4133
          %4227 = vmatprep.subr.bf16.mxu0 0
          %4228 = vmatpush1.bf16.msra.mxu0 %v4134
          %4229 = vmatprep.subr.bf16.mxu0 0
          %4230 = vmatpush1.bf16.msra.mxu0 %v4135
          %4231 = vmatprep.subr.bf16.mxu0 0
          %4232 = vmatpush1.bf16.msra.mxu0 %v4136
          %4233 = vmatprep.subr.bf16.mxu0 0
          %4234 = vmatpush1.bf16.msra.mxu0 %v4137
          %4235 = vmatprep.subr.bf16.mxu0 0
          %4236 = vmatpush1.bf16.msra.mxu0 %v4138
          %4237 = vmatprep.subr.bf16.mxu0 0
          %4238 = vmatpush1.bf16.msra.mxu0 %v4139
          %4239 = vmatprep.subr.bf16.mxu0 0
          %4240 = vmatpush1.bf16.msra.mxu0 %v4140
          %4241 = vmatprep.subr.bf16.mxu0 0
          %4242 = vmatpush1.bf16.msra.mxu0 %v4141
          %4243 = vmatprep.subr.bf16.mxu0 0
          %4244 = vmatpush1.bf16.msra.mxu0 %v4142
          %4245 = vmatprep.subr.bf16.mxu0 0
          %4246 = vmatpush1.bf16.msra.mxu0 %v4143
          %4247 = vmatprep.subr.bf16.mxu0 0
          %4248 = vmatpush1.bf16.msra.mxu0 %v4144
          %4249 = vmatprep.mubr.bf16.mxu0 %v3913
          %4250 = vmatmul.mubr.bf16.gmra.mrb[0].mxu0 %v3912
          %v4251 = vpop.f32.mrb[0].mxu0
          %v4252 = vadd.f32 %v4212, %v4251
          %v4253 = vpop.f32.mrb[0].mxu0
          %v4254 = vpop.f32.mrb[0].mxu0
          %v4255 = vpop.f32.mrb[0].mxu0
          %4256 = vdwg.mxu0
          %4257 = vst [vmem:[#allocation13] sm:$0x3] %v4252
        $region80: #{knot_classifier_forward.1} parent=47 // pred_fallthru
          _
        // Predicated region
        $region81: #{knot_classifier_forward.1} parent=47 // pred_check
          %p4258 = pneg %p194
        $region82: #{knot_classifier_forward.1} parent=47 // pred_check_branch
          %4260 = sbr.rel (%p4258) target = $region84
        $region83: #{knot_classifier_forward.1} parent=47 // pred_region
          %s4262 = ssub.s32 32, 32
          %4263 = vsyncadd [#allocation5], %s4262
          %s4265 = sshll.u32 [#allocation13], 4
          %s4266 = int_to_ptr.vmem [resolvable:$true] %s4265
          %4268 = dma.vmem_to_hbm [thread:$0]  %s4266, 32, %s7, [#allocation5]
        $region84: #{knot_classifier_forward.1} parent=47 // pred_fallthru
          _
        // Predicated region
        $region85: #{knot_classifier_forward.1} parent=47 // pred_check
          %p4269 = pneg %p194
        $region86: #{knot_classifier_forward.1} parent=47 // pred_check_branch
          %4271 = sbr.rel (%p4269) target = $region88
        $region87: #{knot_classifier_forward.1} parent=47 // pred_region
          %4272 = dma.done [#allocation5], 32
        $region88: #{knot_classifier_forward.1} parent=47 // pred_fallthru
          _
      $region48: #{knot_classifier_forward.1} parent=5 // pred_fallthru
        _
      %p4273 = scmp.le.s32.totalorder 2, %s19
      // Predicated region
      $region89: #{knot_classifier_forward.1} parent=5 // pred_check
        %p4274 = pneg %p4273
      $region90: #{knot_classifier_forward.1} parent=5 // pred_check_branch
        %4276 = sbr.rel (%p4274) target = $region92
      $region91: #{knot_classifier_forward.1} parent=5 // pred_region
        %s4277 = ssub.s32 %s19, 2
      $region92: #{knot_classifier_forward.1} parent=5 // pred_fallthru
        _
    $region6: #{knot_classifier_forward.1} parent=1 // loop_footer
      %s23 = sadd.s32 1, %s19
    $region7: #{knot_classifier_forward.1} parent=1 // loop_footer_branch
      %18 = sbr.rel target = $region3
    $region8: #{knot_classifier_forward.1} parent=1 // loop_exit
      _
    %4278 = vsyncpa [#allocation4], 1
    %s4279 = scalar_lea.sflag [#allocation4], 1
    %4280 = vsyncpa %s4279, 1
    %4281 = vsyncpa [#allocation7], 1
    %4282 = vsyncpa [#allocation11], 1
    %4283 = vsyncpa [#allocation5], 1
    %s4284 = scalar_lea.sflag [#allocation5], 1
    %4285 = vsyncpa %s4284, 1

</llo_original>
